<compile_context>
chip_gen: v6e
topology: v6e:2x2x1
jax: 0.10.0
libtpu: 0.0.40
codegen_flags: <defaults>
</compile_context>

<pallas_src>
import jax
import jax.numpy as jnp
from jax import lax
from jax.experimental import pallas as pl
from jax.experimental.pallas import tpu as pltpu
import numpy as np


def _round_up(n, m):
    return ((n + m - 1) // m) * m


def _pad_gate_cols(w, H, Hp):
    """(in, G*H) -> (in, G*Hp): zero-pad each gate's columns to Hp lanes."""
    in_dim = w.shape[0]
    G = w.shape[1] // H
    w3 = w.reshape(in_dim, G, H)
    return jnp.pad(w3, ((0, 0), (0, 0), (0, Hp - H))).reshape(in_dim, G * Hp)


def _pad_rows(w, rows_p):
    return jnp.pad(w, ((0, rows_p - w.shape[0]), (0, 0)))


def _gru_kernel(x_ref, h0_ref, wih0_ref, whh0_ref, b0_ref, bhn0_ref,
                w1_ref, b1_ref, fcw_ref, fcb_ref,
                out_ref, hout_ref, gi0_s):
    """Whole GRUNet forward in one invocation (all operands resident in VMEM).

    Shapes (padded): x (T*Bp, D), h0 (2, Bp, Hp), whh0 (Hp, 3Hp),
    w1 (2Hp, 4Hp) packed as [r | z | i_n | h_n], gi0 scratch (T*Bp, 3Hp).
    """
    Bp = h0_ref.shape[1]
    Hp = h0_ref.shape[2]
    T = gi0_s.shape[0] // Bp

    # ---- Hoisted layer-0 input projection for ALL timesteps: one big matmul.
    gi0_s[...] = (jnp.dot(x_ref[...], wih0_ref[...],
                          preferred_element_type=jnp.float32) + b0_ref[...])

    # Loop-invariant operands / bias broadcasts hoisted out of the time loop.
    whh0 = whh0_ref[...]
    w1 = w1_ref[...]
    b1 = jnp.broadcast_to(b1_ref[...], (Bp, 4 * Hp))
    bhn0 = jnp.broadcast_to(bhn0_ref[...], (Bp, Hp))

    def step(t, carry):
        h0, h1 = carry

        row = pl.multiple_of(t * Bp, 8)
        gi = gi0_s[pl.ds(row, Bp), :]                       # (Bp, 3Hp)

        # ----- layer 0: only the recurrent matmul remains on the serial path.
        gh = jnp.dot(h0, whh0, preferred_element_type=jnp.float32)
        r0 = jax.nn.sigmoid(gi[:, :Hp] + gh[:, :Hp])
        z0 = jax.nn.sigmoid(gi[:, Hp:2 * Hp] + gh[:, Hp:2 * Hp])
        n0 = jnp.tanh(gi[:, 2 * Hp:] + r0 * (gh[:, 2 * Hp:] + bhn0))
        h0n = (1.0 - z0) * n0 + z0 * h0

        # ----- layer 1: single fused matmul over [h0_new, h1_prev].
        cat = jnp.concatenate([h0n, h1], axis=1)            # (Bp, 2Hp)
        g1 = jnp.dot(cat, w1, preferred_element_type=jnp.float32) + b1
        r1 = jax.nn.sigmoid(g1[:, :Hp])
        z1 = jax.nn.sigmoid(g1[:, Hp:2 * Hp])
        n1 = jnp.tanh(g1[:, 2 * Hp:3 * Hp] + r1 * g1[:, 3 * Hp:])
        h1n = (1.0 - z1) * n1 + z1 * h1
        return (h0n, h1n)

    # State carried in vregs; T is small & static so fully unroll the loop.
    h0f, h1f = lax.fori_loop(0, T, step, (h0_ref[0], h0_ref[1]), unroll=True)

    # Final hidden state stacked like PyTorch: (n_layers, B, H).
    hout_ref[0] = h0f
    hout_ref[1] = h1f

    # out = fc(relu(out_seq[:, -1])); out_seq[:, -1] == final h of top layer.
    last = jnp.maximum(h1f, 0.0)
    out_ref[...] = (jnp.dot(last, fcw_ref[...],
                            preferred_element_type=jnp.float32) + fcb_ref[...])


@jax.jit
def grunet_forward(x, h0, params):
    """x: (B, T, D) f32, h0: (2, B, H) f32 -> (out (B, O), h (2, B, H))."""
    B, T, D = x.shape
    H = params["whh0"].shape[0]
    O = params["fcw"].shape[1]
    Bp = _round_up(B, 8)      # full sublane tile
    Hp = _round_up(H, 128)    # one full 128-lane group per gate

    wih0, whh0 = params["wih0"], params["whh0"]
    bih0, bhh0 = params["bih0"], params["bhh0"]
    wih1, whh1 = params["wih1"], params["whh1"]
    bih1, bhh1 = params["bih1"], params["bhh1"]
    fcw, fcb = params["fcw"], params["fcb"]

    # ---- layer-0 packing: gate columns padded to 128 lanes each ------------
    wih0_p = _pad_gate_cols(wih0, H, Hp)                       # (D, 3Hp)
    whh0_p = _pad_gate_cols(_pad_rows(whh0, Hp), H, Hp)        # (Hp, 3Hp)
    # r/z biases can be pre-summed (input + hidden); n's hidden bias must stay
    # inside the reset-gate multiplication, so it is kept separate (bhn0).
    b0 = jnp.concatenate([bih0[:, :2 * H] + bhh0[:, :2 * H], bih0[:, 2 * H:]],
                         axis=1)
    b0_p = _pad_gate_cols(b0, H, Hp)                           # (1, 3Hp)
    bhn0_p = jnp.pad(bhh0[:, 2 * H:], ((0, 0), (0, Hp - H)))   # (1, Hp)

    # ---- layer-1 packing: one fused weight for [h0_new, h1_prev] -----------
    def split_pad(w):  # (H, 3H) -> three (Hp, Hp) gate blocks
        pad = lambda m: jnp.pad(m, ((0, Hp - H), (0, Hp - H)))
        return pad(w[:, :H]), pad(w[:, H:2 * H]), pad(w[:, 2 * H:])

    i_r, i_z, i_n = split_pad(wih1)
    h_r, h_z, h_n = split_pad(whh1)
    zblk = jnp.zeros((Hp, Hp), jnp.float32)
    w1_p = jnp.concatenate(
        [jnp.concatenate([i_r, i_z, i_n, zblk], axis=1),       # rows: h0_new
         jnp.concatenate([h_r, h_z, zblk, h_n], axis=1)],      # rows: h1_prev
        axis=0)                                                # (2Hp, 4Hp)
    padh = lambda b: jnp.pad(b, ((0, 0), (0, Hp - H)))
    b1_p = jnp.concatenate(
        [padh(bih1[:, :H] + bhh1[:, :H]),
         padh(bih1[:, H:2 * H] + bhh1[:, H:2 * H]),
         padh(bih1[:, 2 * H:]),
         padh(bhh1[:, 2 * H:])], axis=1)                       # (1, 4Hp)

    # ---- fc packing ---------------------------------------------------------
    fcw_p = _pad_rows(fcw, Hp)                                 # (Hp, O)

    # ---- input / state padding (time-major, batch padded to 8 sublanes) ----
    x_tm = jnp.transpose(x, (1, 0, 2))                         # (T, B, D)
    x_p = jnp.pad(x_tm, ((0, 0), (0, Bp - B), (0, 0))).reshape(T * Bp, D)
    h0_p = jnp.pad(h0, ((0, 0), (0, Bp - B), (0, Hp - H)))     # (2, Bp, Hp)

    vmem = pl.BlockSpec(memory_space=pltpu.MemorySpace.VMEM)
    out_p, hout_p = pl.pallas_call(
        _gru_kernel,
        out_shape=(jax.ShapeDtypeStruct((Bp, O), jnp.float32),
                   jax.ShapeDtypeStruct((2, Bp, Hp), jnp.float32)),
        in_specs=[vmem] * 10,
        out_specs=(vmem, vmem),
        scratch_shapes=[pltpu.VMEM((T * Bp, 3 * Hp), jnp.float32)],
    )(x_p, h0_p, wih0_p, whh0_p, b0_p, bhn0_p, w1_p, b1_p, fcw_p, fcb)

    return out_p[:B], hout_p[:, :B, :H]


def init_params(key, input_dim, hidden_dim, output_dim):
    """Deterministic init mimicking PyTorch's U(-1/sqrt(H), 1/sqrt(H)).

    Weights stored pre-transposed as (in_features, 3*hidden) / (hidden, out),
    gate order r, z, n like PyTorch.
    """
    k = 1.0 / np.sqrt(hidden_dim)
    keys = jax.random.split(key, 12)

    def u(kk, shape):
        return jax.random.uniform(kk, shape, jnp.float32, -k, k)

    H3 = 3 * hidden_dim
    return {
        "wih0": u(keys[0], (input_dim, H3)),
        "whh0": u(keys[1], (hidden_dim, H3)),
        "bih0": u(keys[2], (1, H3)),
        "bhh0": u(keys[3], (1, H3)),
        "wih1": u(keys[4], (hidden_dim, H3)),
        "whh1": u(keys[5], (hidden_dim, H3)),
        "bih1": u(keys[6], (1, H3)),
        "bhh1": u(keys[7], (1, H3)),
        "fcw": u(keys[8], (hidden_dim, output_dim)),
        "fcb": u(keys[9], (1, output_dim)),
    }


def _reference_forward(x, h0, params):
    """Pure-JAX reference for correctness checking (unpadded, unfused)."""
    H = params["whh0"].shape[0]

    def cell(x_t, h_prev, wih, whh, bih, bhh):
        gi = x_t @ wih + bih
        gh = h_prev @ whh + bhh
        r = jax.nn.sigmoid(gi[:, :H] + gh[:, :H])
        z = jax.nn.sigmoid(gi[:, H:2 * H] + gh[:, H:2 * H])
        n = jnp.tanh(gi[:, 2 * H:] + r * gh[:, 2 * H:])
        return (1.0 - z) * n + z * h_prev

    h0l, h1l = h0[0], h0[1]
    for t in range(x.shape[1]):
        h0l = cell(x[:, t], h0l, params["wih0"], params["whh0"],
                   params["bih0"], params["bhh0"])
        h1l = cell(h0l, h1l, params["wih1"], params["whh1"],
                   params["bih1"], params["bhh1"])
    out = jnp.maximum(h1l, 0.0) @ params["fcw"] + params["fcb"]
    return out, jnp.stack([h0l, h1l], axis=0)


if __name__ == "__main__":
    # Shapes consistent with GRUNet(input_dim=8, hidden_dim=32, output_dim=1,
    # n_layers=2), batch=2, seq=8.
    B, T, D, H, O = 2, 8, 8, 32, 1

    key = jax.random.PRNGKey(0)
    k_x, k_p = jax.random.split(key)

    params = init_params(k_p, input_dim=D, hidden_dim=H, output_dim=O)
    x = jax.random.normal(k_x, (B, T, D), jnp.float32)
    h0 = jnp.zeros((2, B, H), jnp.float32)  # GRUNet.init_hidden

    out, h = grunet_forward(x, h0, params)
    out = jax.block_until_ready(out)
    h = jax.block_until_ready(h)

    out_ref, h_ref = _reference_forward(x, h0, params)
    # TPU f32 matmuls use bf16 MXU passes by default; the kernel's fused/padded
    # matmuls round differently than the plain-JAX reference, so compare at a
    # bf16-level tolerance.
    np.testing.assert_allclose(np.asarray(out), np.asarray(out_ref),
                               rtol=1e-2, atol=1e-2)
    np.testing.assert_allclose(np.asarray(h), np.asarray(h_ref),
                               rtol=1e-2, atol=1e-2)

    assert out.shape == (B, O) and h.shape == (2, B, H)
    print("KERNEL_OK")
</pallas_src>

<mosaic_0001>
module attributes {stable_mosaic.version = 11 : i64} {
  func.func @_gru_kernel(%arg0: memref<64x8xf32, #tpu.memory_space<vmem>>, %arg1: memref<2x8x128xf32, #tpu.memory_space<vmem>>, %arg2: memref<8x384xf32, #tpu.memory_space<vmem>>, %arg3: memref<128x384xf32, #tpu.memory_space<vmem>>, %arg4: memref<1x384xf32, #tpu.memory_space<vmem>>, %arg5: memref<1x128xf32, #tpu.memory_space<vmem>>, %arg6: memref<256x512xf32, #tpu.memory_space<vmem>>, %arg7: memref<1x512xf32, #tpu.memory_space<vmem>>, %arg8: memref<128x1xf32, #tpu.memory_space<vmem>>, %arg9: memref<1x1xf32, #tpu.memory_space<vmem>>, %arg10: memref<8x1xf32, #tpu.memory_space<vmem>>, %arg11: memref<2x8x128xf32, #tpu.memory_space<vmem>>, %arg12: memref<64x384xf32, #tpu.memory_space<vmem>>) attributes {dimension_semantics = [], scalar_prefetch = 0 : i64, scratch_operands = 1 : i64, tpu.core_type = #tpu.core_type<tc>} {
    %c0 = arith.constant 0 : index
    %c0_0 = arith.constant 0 : index
    %0 = vector.load %arg0[%c0, %c0_0] : memref<64x8xf32, #tpu.memory_space<vmem>>, vector<64x8xf32>
    %c0_1 = arith.constant 0 : index
    %c0_2 = arith.constant 0 : index
    %1 = vector.load %arg2[%c0_1, %c0_2] : memref<8x384xf32, #tpu.memory_space<vmem>>, vector<8x384xf32>
    %cst = arith.constant dense<0.000000e+00> : vector<64x384xf32>
    %2 = tpu.matmul %0, %1, %cst {dimension_numbers = #tpu.dot_dimension_numbers<[1], [0], [0], [1], [0, 0, 1, 1], [], []>} : vector<64x8xf32>, vector<8x384xf32>, vector<64x384xf32> -> vector<64x384xf32>
    %c0_3 = arith.constant 0 : index
    %c0_4 = arith.constant 0 : index
    %3 = vector.load %arg4[%c0_3, %c0_4] : memref<1x384xf32, #tpu.memory_space<vmem>>, vector<1x384xf32>
    %4 = vector.broadcast %3 : vector<1x384xf32> to vector<64x384xf32>
    %5 = arith.addf %2, %4 : vector<64x384xf32>
    %c0_5 = arith.constant 0 : index
    %c0_6 = arith.constant 0 : index
    %6 = vector.load %arg12[%c0_5, %c0_6] : memref<64x384xf32, #tpu.memory_space<vmem>>, vector<64x384xf32>
    tpu.vector_store %arg12[%c0_5, %c0_6], %5 {strides = array<i32>} : memref<64x384xf32, #tpu.memory_space<vmem>>, vector<64x384xf32>,
    %c0_7 = arith.constant 0 : index
    %c0_8 = arith.constant 0 : index
    %7 = vector.load %arg3[%c0_7, %c0_8] : memref<128x384xf32, #tpu.memory_space<vmem>>, vector<128x384xf32>
    %c0_9 = arith.constant 0 : index
    %c0_10 = arith.constant 0 : index
    %8 = vector.load %arg6[%c0_9, %c0_10] : memref<256x512xf32, #tpu.memory_space<vmem>>, vector<256x512xf32>
    %c0_11 = arith.constant 0 : index
    %c0_12 = arith.constant 0 : index
    %9 = vector.load %arg7[%c0_11, %c0_12] : memref<1x512xf32, #tpu.memory_space<vmem>>, vector<1x512xf32>
    %10 = vector.shape_cast %9 : vector<1x512xf32> to vector<1x512xf32>
    %11 = vector.broadcast %10 : vector<1x512xf32> to vector<8x512xf32>
    %c0_13 = arith.constant 0 : index
    %c0_14 = arith.constant 0 : index
    %12 = vector.load %arg5[%c0_13, %c0_14] : memref<1x128xf32, #tpu.memory_space<vmem>>, vector<1x128xf32>
    %13 = vector.shape_cast %12 : vector<1x128xf32> to vector<1x128xf32>
    %14 = vector.broadcast %13 : vector<1x128xf32> to vector<8x128xf32>
    %c0_15 = arith.constant 0 : index
    %c0_16 = arith.constant 0 : index
    %c0_17 = arith.constant 0 : index
    %15 = vector.load %arg1[%c0_15, %c0_16, %c0_17] : memref<2x8x128xf32, #tpu.memory_space<vmem>>, vector<1x8x128xf32>
    %16 = vector.shape_cast %15 : vector<1x8x128xf32> to vector<8x128xf32>
    %c1 = arith.constant 1 : index
    %c0_18 = arith.constant 0 : index
    %c0_19 = arith.constant 0 : index
    %17 = vector.load %arg1[%c1, %c0_18, %c0_19] : memref<2x8x128xf32, #tpu.memory_space<vmem>>, vector<1x8x128xf32>
    %18 = vector.shape_cast %17 : vector<1x8x128xf32> to vector<8x128xf32>
    %c0_i32 = arith.constant 0 : i32
    %c8_i32 = arith.constant 8 : i32
    %19 = arith.muli %c0_i32, %c8_i32 : i32
    %20 = tpu.assume_multiple %19, 8 : i32
    %21 = arith.index_cast %20 : i32 to index
    %c0_20 = arith.constant 0 : index
    %22 = vector.load %arg12[%21, %c0_20] : memref<64x384xf32, #tpu.memory_space<vmem>>, vector<8x384xf32>
    %cst_21 = arith.constant dense<0.000000e+00> : vector<8x384xf32>
    %23 = tpu.matmul %16, %7, %cst_21 {dimension_numbers = #tpu.dot_dimension_numbers<[1], [0], [0], [1], [0, 0, 1, 1], [], []>} : vector<8x128xf32>, vector<128x384xf32>, vector<8x384xf32> -> vector<8x384xf32>
    %24 = vector.extract_strided_slice %22 {offsets = [0, 0], sizes = [8, 128], strides = [1, 1]} : vector<8x384xf32> to vector<8x128xf32>
    %25 = vector.extract_strided_slice %23 {offsets = [0, 0], sizes = [8, 128], strides = [1, 1]} : vector<8x384xf32> to vector<8x128xf32>
    %26 = arith.addf %24, %25 : vector<8x128xf32>
    %27 = arith.negf %26 : vector<8x128xf32>
    %28 = math.exp %27 : vector<8x128xf32>
    %cst_22 = arith.constant 1.000000e+00 : f32
    %29 = vector.broadcast %cst_22 : f32 to vector<8x128xf32>
    %30 = arith.addf %29, %28 : vector<8x128xf32>
    %31 = arith.divf %29, %30 : vector<8x128xf32>
    %32 = vector.extract_strided_slice %22 {offsets = [0, 128], sizes = [8, 128], strides = [1, 1]} : vector<8x384xf32> to vector<8x128xf32>
    %33 = vector.extract_strided_slice %23 {offsets = [0, 128], sizes = [8, 128], strides = [1, 1]} : vector<8x384xf32> to vector<8x128xf32>
    %34 = arith.addf %32, %33 : vector<8x128xf32>
    %35 = arith.negf %34 : vector<8x128xf32>
    %36 = math.exp %35 : vector<8x128xf32>
    %cst_23 = arith.constant 1.000000e+00 : f32
    %37 = vector.broadcast %cst_23 : f32 to vector<8x128xf32>
    %38 = arith.addf %37, %36 : vector<8x128xf32>
    %39 = arith.divf %37, %38 : vector<8x128xf32>
    %40 = vector.extract_strided_slice %22 {offsets = [0, 256], sizes = [8, 128], strides = [1, 1]} : vector<8x384xf32> to vector<8x128xf32>
    %41 = vector.extract_strided_slice %23 {offsets = [0, 256], sizes = [8, 128], strides = [1, 1]} : vector<8x384xf32> to vector<8x128xf32>
    %42 = arith.addf %41, %14 : vector<8x128xf32>
    %43 = arith.mulf %31, %42 : vector<8x128xf32>
    %44 = arith.addf %40, %43 : vector<8x128xf32>
    %45 = math.tanh %44 : vector<8x128xf32>
    %cst_24 = arith.constant 1.000000e+00 : f32
    %46 = vector.broadcast %cst_24 : f32 to vector<8x128xf32>
    %47 = arith.subf %46, %39 : vector<8x128xf32>
    %48 = arith.mulf %47, %45 : vector<8x128xf32>
    %49 = arith.mulf %39, %16 : vector<8x128xf32>
    %50 = arith.addf %48, %49 : vector<8x128xf32>
    %51 = tpu.concatenate %50, %18 in 1 : vector<8x128xf32>, vector<8x128xf32> -> vector<8x256xf32>
    %cst_25 = arith.constant dense<0.000000e+00> : vector<8x512xf32>
    %52 = tpu.matmul %51, %8, %cst_25 {dimension_numbers = #tpu.dot_dimension_numbers<[1], [0], [0], [1], [0, 0, 1, 1], [], []>} : vector<8x256xf32>, vector<256x512xf32>, vector<8x512xf32> -> vector<8x512xf32>
    %53 = arith.addf %52, %11 : vector<8x512xf32>
    %54 = vector.extract_strided_slice %53 {offsets = [0, 0], sizes = [8, 128], strides = [1, 1]} : vector<8x512xf32> to vector<8x128xf32>
    %55 = arith.negf %54 : vector<8x128xf32>
    %56 = math.exp %55 : vector<8x128xf32>
    %cst_26 = arith.constant 1.000000e+00 : f32
    %57 = vector.broadcast %cst_26 : f32 to vector<8x128xf32>
    %58 = arith.addf %57, %56 : vector<8x128xf32>
    %59 = arith.divf %57, %58 : vector<8x128xf32>
    %60 = vector.extract_strided_slice %53 {offsets = [0, 128], sizes = [8, 128], strides = [1, 1]} : vector<8x512xf32> to vector<8x128xf32>
    %61 = arith.negf %60 : vector<8x128xf32>
    %62 = math.exp %61 : vector<8x128xf32>
    %cst_27 = arith.constant 1.000000e+00 : f32
    %63 = vector.broadcast %cst_27 : f32 to vector<8x128xf32>
    %64 = arith.addf %63, %62 : vector<8x128xf32>
    %65 = arith.divf %63, %64 : vector<8x128xf32>
    %66 = vector.extract_strided_slice %53 {offsets = [0, 256], sizes = [8, 128], strides = [1, 1]} : vector<8x512xf32> to vector<8x128xf32>
    %67 = vector.extract_strided_slice %53 {offsets = [0, 384], sizes = [8, 128], strides = [1, 1]} : vector<8x512xf32> to vector<8x128xf32>
    %68 = arith.mulf %59, %67 : vector<8x128xf32>
    %69 = arith.addf %66, %68 : vector<8x128xf32>
    %70 = math.tanh %69 : vector<8x128xf32>
    %cst_28 = arith.constant 1.000000e+00 : f32
    %71 = vector.broadcast %cst_28 : f32 to vector<8x128xf32>
    %72 = arith.subf %71, %65 : vector<8x128xf32>
    %73 = arith.mulf %72, %70 : vector<8x128xf32>
    %74 = arith.mulf %65, %18 : vector<8x128xf32>
    %75 = arith.addf %73, %74 : vector<8x128xf32>
    %c1_i32 = arith.constant 1 : i32
    %c8_i32_29 = arith.constant 8 : i32
    %76 = arith.muli %c1_i32, %c8_i32_29 : i32
    %77 = tpu.assume_multiple %76, 8 : i32
    %78 = arith.index_cast %77 : i32 to index
    %c0_30 = arith.constant 0 : index
    %79 = vector.load %arg12[%78, %c0_30] : memref<64x384xf32, #tpu.memory_space<vmem>>, vector<8x384xf32>
    %cst_31 = arith.constant dense<0.000000e+00> : vector<8x384xf32>
    %80 = tpu.matmul %50, %7, %cst_31 {dimension_numbers = #tpu.dot_dimension_numbers<[1], [0], [0], [1], [0, 0, 1, 1], [], []>} : vector<8x128xf32>, vector<128x384xf32>, vector<8x384xf32> -> vector<8x384xf32>
    %81 = vector.extract_strided_slice %79 {offsets = [0, 0], sizes = [8, 128], strides = [1, 1]} : vector<8x384xf32> to vector<8x128xf32>
    %82 = vector.extract_strided_slice %80 {offsets = [0, 0], sizes = [8, 128], strides = [1, 1]} : vector<8x384xf32> to vector<8x128xf32>
    %83 = arith.addf %81, %82 : vector<8x128xf32>
    %84 = arith.negf %83 : vector<8x128xf32>
    %85 = math.exp %84 : vector<8x128xf32>
    %cst_32 = arith.constant 1.000000e+00 : f32
    %86 = vector.broadcast %cst_32 : f32 to vector<8x128xf32>
    %87 = arith.addf %86, %85 : vector<8x128xf32>
    %88 = arith.divf %86, %87 : vector<8x128xf32>
    %89 = vector.extract_strided_slice %79 {offsets = [0, 128], sizes = [8, 128], strides = [1, 1]} : vector<8x384xf32> to vector<8x128xf32>
    %90 = vector.extract_strided_slice %80 {offsets = [0, 128], sizes = [8, 128], strides = [1, 1]} : vector<8x384xf32> to vector<8x128xf32>
    %91 = arith.addf %89, %90 : vector<8x128xf32>
    %92 = arith.negf %91 : vector<8x128xf32>
    %93 = math.exp %92 : vector<8x128xf32>
    %cst_33 = arith.constant 1.000000e+00 : f32
    %94 = vector.broadcast %cst_33 : f32 to vector<8x128xf32>
    %95 = arith.addf %94, %93 : vector<8x128xf32>
    %96 = arith.divf %94, %95 : vector<8x128xf32>
    %97 = vector.extract_strided_slice %79 {offsets = [0, 256], sizes = [8, 128], strides = [1, 1]} : vector<8x384xf32> to vector<8x128xf32>
    %98 = vector.extract_strided_slice %80 {offsets = [0, 256], sizes = [8, 128], strides = [1, 1]} : vector<8x384xf32> to vector<8x128xf32>
    %99 = arith.addf %98, %14 : vector<8x128xf32>
    %100 = arith.mulf %88, %99 : vector<8x128xf32>
    %101 = arith.addf %97, %100 : vector<8x128xf32>
    %102 = math.tanh %101 : vector<8x128xf32>
    %cst_34 = arith.constant 1.000000e+00 : f32
    %103 = vector.broadcast %cst_34 : f32 to vector<8x128xf32>
    %104 = arith.subf %103, %96 : vector<8x128xf32>
    %105 = arith.mulf %104, %102 : vector<8x128xf32>
    %106 = arith.mulf %96, %50 : vector<8x128xf32>
    %107 = arith.addf %105, %106 : vector<8x128xf32>
    %108 = tpu.concatenate %107, %75 in 1 : vector<8x128xf32>, vector<8x128xf32> -> vector<8x256xf32>
    %cst_35 = arith.constant dense<0.000000e+00> : vector<8x512xf32>
    %109 = tpu.matmul %108, %8, %cst_35 {dimension_numbers = #tpu.dot_dimension_numbers<[1], [0], [0], [1], [0, 0, 1, 1], [], []>} : vector<8x256xf32>, vector<256x512xf32>, vector<8x512xf32> -> vector<8x512xf32>
    %110 = arith.addf %109, %11 : vector<8x512xf32>
    %111 = vector.extract_strided_slice %110 {offsets = [0, 0], sizes = [8, 128], strides = [1, 1]} : vector<8x512xf32> to vector<8x128xf32>
    %112 = arith.negf %111 : vector<8x128xf32>
    %113 = math.exp %112 : vector<8x128xf32>
    %cst_36 = arith.constant 1.000000e+00 : f32
    %114 = vector.broadcast %cst_36 : f32 to vector<8x128xf32>
    %115 = arith.addf %114, %113 : vector<8x128xf32>
    %116 = arith.divf %114, %115 : vector<8x128xf32>
    %117 = vector.extract_strided_slice %110 {offsets = [0, 128], sizes = [8, 128], strides = [1, 1]} : vector<8x512xf32> to vector<8x128xf32>
    %118 = arith.negf %117 : vector<8x128xf32>
    %119 = math.exp %118 : vector<8x128xf32>
    %cst_37 = arith.constant 1.000000e+00 : f32
    %120 = vector.broadcast %cst_37 : f32 to vector<8x128xf32>
    %121 = arith.addf %120, %119 : vector<8x128xf32>
    %122 = arith.divf %120, %121 : vector<8x128xf32>
    %123 = vector.extract_strided_slice %110 {offsets = [0, 256], sizes = [8, 128], strides = [1, 1]} : vector<8x512xf32> to vector<8x128xf32>
    %124 = vector.extract_strided_slice %110 {offsets = [0, 384], sizes = [8, 128], strides = [1, 1]} : vector<8x512xf32> to vector<8x128xf32>
    %125 = arith.mulf %116, %124 : vector<8x128xf32>
    %126 = arith.addf %123, %125 : vector<8x128xf32>
    %127 = math.tanh %126 : vector<8x128xf32>
    %cst_38 = arith.constant 1.000000e+00 : f32
    %128 = vector.broadcast %cst_38 : f32 to vector<8x128xf32>
    %129 = arith.subf %128, %122 : vector<8x128xf32>
    %130 = arith.mulf %129, %127 : vector<8x128xf32>
    %131 = arith.mulf %122, %75 : vector<8x128xf32>
    %132 = arith.addf %130, %131 : vector<8x128xf32>
    %c2_i32 = arith.constant 2 : i32
    %c8_i32_39 = arith.constant 8 : i32
    %133 = arith.muli %c2_i32, %c8_i32_39 : i32
    %134 = tpu.assume_multiple %133, 8 : i32
    %135 = arith.index_cast %134 : i32 to index
    %c0_40 = arith.constant 0 : index
    %136 = vector.load %arg12[%135, %c0_40] : memref<64x384xf32, #tpu.memory_space<vmem>>, vector<8x384xf32>
    %cst_41 = arith.constant dense<0.000000e+00> : vector<8x384xf32>
    %137 = tpu.matmul %107, %7, %cst_41 {dimension_numbers = #tpu.dot_dimension_numbers<[1], [0], [0], [1], [0, 0, 1, 1], [], []>} : vector<8x128xf32>, vector<128x384xf32>, vector<8x384xf32> -> vector<8x384xf32>
    %138 = vector.extract_strided_slice %136 {offsets = [0, 0], sizes = [8, 128], strides = [1, 1]} : vector<8x384xf32> to vector<8x128xf32>
    %139 = vector.extract_strided_slice %137 {offsets = [0, 0], sizes = [8, 128], strides = [1, 1]} : vector<8x384xf32> to vector<8x128xf32>
    %140 = arith.addf %138, %139 : vector<8x128xf32>
    %141 = arith.negf %140 : vector<8x128xf32>
    %142 = math.exp %141 : vector<8x128xf32>
    %cst_42 = arith.constant 1.000000e+00 : f32
    %143 = vector.broadcast %cst_42 : f32 to vector<8x128xf32>
    %144 = arith.addf %143, %142 : vector<8x128xf32>
    %145 = arith.divf %143, %144 : vector<8x128xf32>
    %146 = vector.extract_strided_slice %136 {offsets = [0, 128], sizes = [8, 128], strides = [1, 1]} : vector<8x384xf32> to vector<8x128xf32>
    %147 = vector.extract_strided_slice %137 {offsets = [0, 128], sizes = [8, 128], strides = [1, 1]} : vector<8x384xf32> to vector<8x128xf32>
    %148 = arith.addf %146, %147 : vector<8x128xf32>
    %149 = arith.negf %148 : vector<8x128xf32>
    %150 = math.exp %149 : vector<8x128xf32>
    %cst_43 = arith.constant 1.000000e+00 : f32
    %151 = vector.broadcast %cst_43 : f32 to vector<8x128xf32>
    %152 = arith.addf %151, %150 : vector<8x128xf32>
    %153 = arith.divf %151, %152 : vector<8x128xf32>
    %154 = vector.extract_strided_slice %136 {offsets = [0, 256], sizes = [8, 128], strides = [1, 1]} : vector<8x384xf32> to vector<8x128xf32>
    %155 = vector.extract_strided_slice %137 {offsets = [0, 256], sizes = [8, 128], strides = [1, 1]} : vector<8x384xf32> to vector<8x128xf32>
    %156 = arith.addf %155, %14 : vector<8x128xf32>
    %157 = arith.mulf %145, %156 : vector<8x128xf32>
    %158 = arith.addf %154, %157 : vector<8x128xf32>
    %159 = math.tanh %158 : vector<8x128xf32>
    %cst_44 = arith.constant 1.000000e+00 : f32
    %160 = vector.broadcast %cst_44 : f32 to vector<8x128xf32>
    %161 = arith.subf %160, %153 : vector<8x128xf32>
    %162 = arith.mulf %161, %159 : vector<8x128xf32>
    %163 = arith.mulf %153, %107 : vector<8x128xf32>
    %164 = arith.addf %162, %163 : vector<8x128xf32>
    %165 = tpu.concatenate %164, %132 in 1 : vector<8x128xf32>, vector<8x128xf32> -> vector<8x256xf32>
    %cst_45 = arith.constant dense<0.000000e+00> : vector<8x512xf32>
    %166 = tpu.matmul %165, %8, %cst_45 {dimension_numbers = #tpu.dot_dimension_numbers<[1], [0], [0], [1], [0, 0, 1, 1], [], []>} : vector<8x256xf32>, vector<256x512xf32>, vector<8x512xf32> -> vector<8x512xf32>
    %167 = arith.addf %166, %11 : vector<8x512xf32>
    %168 = vector.extract_strided_slice %167 {offsets = [0, 0], sizes = [8, 128], strides = [1, 1]} : vector<8x512xf32> to vector<8x128xf32>
    %169 = arith.negf %168 : vector<8x128xf32>
    %170 = math.exp %169 : vector<8x128xf32>
    %cst_46 = arith.constant 1.000000e+00 : f32
    %171 = vector.broadcast %cst_46 : f32 to vector<8x128xf32>
    %172 = arith.addf %171, %170 : vector<8x128xf32>
    %173 = arith.divf %171, %172 : vector<8x128xf32>
    %174 = vector.extract_strided_slice %167 {offsets = [0, 128], sizes = [8, 128], strides = [1, 1]} : vector<8x512xf32> to vector<8x128xf32>
    %175 = arith.negf %174 : vector<8x128xf32>
    %176 = math.exp %175 : vector<8x128xf32>
    %cst_47 = arith.constant 1.000000e+00 : f32
    %177 = vector.broadcast %cst_47 : f32 to vector<8x128xf32>
    %178 = arith.addf %177, %176 : vector<8x128xf32>
    %179 = arith.divf %177, %178 : vector<8x128xf32>
    %180 = vector.extract_strided_slice %167 {offsets = [0, 256], sizes = [8, 128], strides = [1, 1]} : vector<8x512xf32> to vector<8x128xf32>
    %181 = vector.extract_strided_slice %167 {offsets = [0, 384], sizes = [8, 128], strides = [1, 1]} : vector<8x512xf32> to vector<8x128xf32>
    %182 = arith.mulf %173, %181 : vector<8x128xf32>
    %183 = arith.addf %180, %182 : vector<8x128xf32>
    %184 = math.tanh %183 : vector<8x128xf32>
    %cst_48 = arith.constant 1.000000e+00 : f32
    %185 = vector.broadcast %cst_48 : f32 to vector<8x128xf32>
    %186 = arith.subf %185, %179 : vector<8x128xf32>
    %187 = arith.mulf %186, %184 : vector<8x128xf32>
    %188 = arith.mulf %179, %132 : vector<8x128xf32>
    %189 = arith.addf %187, %188 : vector<8x128xf32>
    %c3_i32 = arith.constant 3 : i32
    %c8_i32_49 = arith.constant 8 : i32
    %190 = arith.muli %c3_i32, %c8_i32_49 : i32
    %191 = tpu.assume_multiple %190, 8 : i32
    %192 = arith.index_cast %191 : i32 to index
    %c0_50 = arith.constant 0 : index
    %193 = vector.load %arg12[%192, %c0_50] : memref<64x384xf32, #tpu.memory_space<vmem>>, vector<8x384xf32>
    %cst_51 = arith.constant dense<0.000000e+00> : vector<8x384xf32>
    %194 = tpu.matmul %164, %7, %cst_51 {dimension_numbers = #tpu.dot_dimension_numbers<[1], [0], [0], [1], [0, 0, 1, 1], [], []>} : vector<8x128xf32>, vector<128x384xf32>, vector<8x384xf32> -> vector<8x384xf32>
    %195 = vector.extract_strided_slice %193 {offsets = [0, 0], sizes = [8, 128], strides = [1, 1]} : vector<8x384xf32> to vector<8x128xf32>
    %196 = vector.extract_strided_slice %194 {offsets = [0, 0], sizes = [8, 128], strides = [1, 1]} : vector<8x384xf32> to vector<8x128xf32>
    %197 = arith.addf %195, %196 : vector<8x128xf32>
    %198 = arith.negf %197 : vector<8x128xf32>
    %199 = math.exp %198 : vector<8x128xf32>
    %cst_52 = arith.constant 1.000000e+00 : f32
    %200 = vector.broadcast %cst_52 : f32 to vector<8x128xf32>
    %201 = arith.addf %200, %199 : vector<8x128xf32>
    %202 = arith.divf %200, %201 : vector<8x128xf32>
    %203 = vector.extract_strided_slice %193 {offsets = [0, 128], sizes = [8, 128], strides = [1, 1]} : vector<8x384xf32> to vector<8x128xf32>
    %204 = vector.extract_strided_slice %194 {offsets = [0, 128], sizes = [8, 128], strides = [1, 1]} : vector<8x384xf32> to vector<8x128xf32>
    %205 = arith.addf %203, %204 : vector<8x128xf32>
    %206 = arith.negf %205 : vector<8x128xf32>
    %207 = math.exp %206 : vector<8x128xf32>
    %cst_53 = arith.constant 1.000000e+00 : f32
    %208 = vector.broadcast %cst_53 : f32 to vector<8x128xf32>
    %209 = arith.addf %208, %207 : vector<8x128xf32>
    %210 = arith.divf %208, %209 : vector<8x128xf32>
    %211 = vector.extract_strided_slice %193 {offsets = [0, 256], sizes = [8, 128], strides = [1, 1]} : vector<8x384xf32> to vector<8x128xf32>
    %212 = vector.extract_strided_slice %194 {offsets = [0, 256], sizes = [8, 128], strides = [1, 1]} : vector<8x384xf32> to vector<8x128xf32>
    %213 = arith.addf %212, %14 : vector<8x128xf32>
    %214 = arith.mulf %202, %213 : vector<8x128xf32>
    %215 = arith.addf %211, %214 : vector<8x128xf32>
    %216 = math.tanh %215 : vector<8x128xf32>
    %cst_54 = arith.constant 1.000000e+00 : f32
    %217 = vector.broadcast %cst_54 : f32 to vector<8x128xf32>
    %218 = arith.subf %217, %210 : vector<8x128xf32>
    %219 = arith.mulf %218, %216 : vector<8x128xf32>
    %220 = arith.mulf %210, %164 : vector<8x128xf32>
    %221 = arith.addf %219, %220 : vector<8x128xf32>
    %222 = tpu.concatenate %221, %189 in 1 : vector<8x128xf32>, vector<8x128xf32> -> vector<8x256xf32>
    %cst_55 = arith.constant dense<0.000000e+00> : vector<8x512xf32>
    %223 = tpu.matmul %222, %8, %cst_55 {dimension_numbers = #tpu.dot_dimension_numbers<[1], [0], [0], [1], [0, 0, 1, 1], [], []>} : vector<8x256xf32>, vector<256x512xf32>, vector<8x512xf32> -> vector<8x512xf32>
    %224 = arith.addf %223, %11 : vector<8x512xf32>
    %225 = vector.extract_strided_slice %224 {offsets = [0, 0], sizes = [8, 128], strides = [1, 1]} : vector<8x512xf32> to vector<8x128xf32>
    %226 = arith.negf %225 : vector<8x128xf32>
    %227 = math.exp %226 : vector<8x128xf32>
    %cst_56 = arith.constant 1.000000e+00 : f32
    %228 = vector.broadcast %cst_56 : f32 to vector<8x128xf32>
    %229 = arith.addf %228, %227 : vector<8x128xf32>
    %230 = arith.divf %228, %229 : vector<8x128xf32>
    %231 = vector.extract_strided_slice %224 {offsets = [0, 128], sizes = [8, 128], strides = [1, 1]} : vector<8x512xf32> to vector<8x128xf32>
    %232 = arith.negf %231 : vector<8x128xf32>
    %233 = math.exp %232 : vector<8x128xf32>
    %cst_57 = arith.constant 1.000000e+00 : f32
    %234 = vector.broadcast %cst_57 : f32 to vector<8x128xf32>
    %235 = arith.addf %234, %233 : vector<8x128xf32>
    %236 = arith.divf %234, %235 : vector<8x128xf32>
    %237 = vector.extract_strided_slice %224 {offsets = [0, 256], sizes = [8, 128], strides = [1, 1]} : vector<8x512xf32> to vector<8x128xf32>
    %238 = vector.extract_strided_slice %224 {offsets = [0, 384], sizes = [8, 128], strides = [1, 1]} : vector<8x512xf32> to vector<8x128xf32>
    %239 = arith.mulf %230, %238 : vector<8x128xf32>
    %240 = arith.addf %237, %239 : vector<8x128xf32>
    %241 = math.tanh %240 : vector<8x128xf32>
    %cst_58 = arith.constant 1.000000e+00 : f32
    %242 = vector.broadcast %cst_58 : f32 to vector<8x128xf32>
    %243 = arith.subf %242, %236 : vector<8x128xf32>
    %244 = arith.mulf %243, %241 : vector<8x128xf32>
    %245 = arith.mulf %236, %189 : vector<8x128xf32>
    %246 = arith.addf %244, %245 : vector<8x128xf32>
    %c4_i32 = arith.constant 4 : i32
    %c8_i32_59 = arith.constant 8 : i32
    %247 = arith.muli %c4_i32, %c8_i32_59 : i32
    %248 = tpu.assume_multiple %247, 8 : i32
    %249 = arith.index_cast %248 : i32 to index
    %c0_60 = arith.constant 0 : index
    %250 = vector.load %arg12[%249, %c0_60] : memref<64x384xf32, #tpu.memory_space<vmem>>, vector<8x384xf32>
    %cst_61 = arith.constant dense<0.000000e+00> : vector<8x384xf32>
    %251 = tpu.matmul %221, %7, %cst_61 {dimension_numbers = #tpu.dot_dimension_numbers<[1], [0], [0], [1], [0, 0, 1, 1], [], []>} : vector<8x128xf32>, vector<128x384xf32>, vector<8x384xf32> -> vector<8x384xf32>
    %252 = vector.extract_strided_slice %250 {offsets = [0, 0], sizes = [8, 128], strides = [1, 1]} : vector<8x384xf32> to vector<8x128xf32>
    %253 = vector.extract_strided_slice %251 {offsets = [0, 0], sizes = [8, 128], strides = [1, 1]} : vector<8x384xf32> to vector<8x128xf32>
    %254 = arith.addf %252, %253 : vector<8x128xf32>
    %255 = arith.negf %254 : vector<8x128xf32>
    %256 = math.exp %255 : vector<8x128xf32>
    %cst_62 = arith.constant 1.000000e+00 : f32
    %257 = vector.broadcast %cst_62 : f32 to vector<8x128xf32>
    %258 = arith.addf %257, %256 : vector<8x128xf32>
    %259 = arith.divf %257, %258 : vector<8x128xf32>
    %260 = vector.extract_strided_slice %250 {offsets = [0, 128], sizes = [8, 128], strides = [1, 1]} : vector<8x384xf32> to vector<8x128xf32>
    %261 = vector.extract_strided_slice %251 {offsets = [0, 128], sizes = [8, 128], strides = [1, 1]} : vector<8x384xf32> to vector<8x128xf32>
    %262 = arith.addf %260, %261 : vector<8x128xf32>
    %263 = arith.negf %262 : vector<8x128xf32>
    %264 = math.exp %263 : vector<8x128xf32>
    %cst_63 = arith.constant 1.000000e+00 : f32
    %265 = vector.broadcast %cst_63 : f32 to vector<8x128xf32>
    %266 = arith.addf %265, %264 : vector<8x128xf32>
    %267 = arith.divf %265, %266 : vector<8x128xf32>
    %268 = vector.extract_strided_slice %250 {offsets = [0, 256], sizes = [8, 128], strides = [1, 1]} : vector<8x384xf32> to vector<8x128xf32>
    %269 = vector.extract_strided_slice %251 {offsets = [0, 256], sizes = [8, 128], strides = [1, 1]} : vector<8x384xf32> to vector<8x128xf32>
    %270 = arith.addf %269, %14 : vector<8x128xf32>
    %271 = arith.mulf %259, %270 : vector<8x128xf32>
    %272 = arith.addf %268, %271 : vector<8x128xf32>
    %273 = math.tanh %272 : vector<8x128xf32>
    %cst_64 = arith.constant 1.000000e+00 : f32
    %274 = vector.broadcast %cst_64 : f32 to vector<8x128xf32>
    %275 = arith.subf %274, %267 : vector<8x128xf32>
    %276 = arith.mulf %275, %273 : vector<8x128xf32>
    %277 = arith.mulf %267, %221 : vector<8x128xf32>
    %278 = arith.addf %276, %277 : vector<8x128xf32>
    %279 = tpu.concatenate %278, %246 in 1 : vector<8x128xf32>, vector<8x128xf32> -> vector<8x256xf32>
    %cst_65 = arith.constant dense<0.000000e+00> : vector<8x512xf32>
    %280 = tpu.matmul %279, %8, %cst_65 {dimension_numbers = #tpu.dot_dimension_numbers<[1], [0], [0], [1], [0, 0, 1, 1], [], []>} : vector<8x256xf32>, vector<256x512xf32>, vector<8x512xf32> -> vector<8x512xf32>
    %281 = arith.addf %280, %11 : vector<8x512xf32>
    %282 = vector.extract_strided_slice %281 {offsets = [0, 0], sizes = [8, 128], strides = [1, 1]} : vector<8x512xf32> to vector<8x128xf32>
    %283 = arith.negf %282 : vector<8x128xf32>
    %284 = math.exp %283 : vector<8x128xf32>
    %cst_66 = arith.constant 1.000000e+00 : f32
    %285 = vector.broadcast %cst_66 : f32 to vector<8x128xf32>
    %286 = arith.addf %285, %284 : vector<8x128xf32>
    %287 = arith.divf %285, %286 : vector<8x128xf32>
    %288 = vector.extract_strided_slice %281 {offsets = [0, 128], sizes = [8, 128], strides = [1, 1]} : vector<8x512xf32> to vector<8x128xf32>
    %289 = arith.negf %288 : vector<8x128xf32>
    %290 = math.exp %289 : vector<8x128xf32>
    %cst_67 = arith.constant 1.000000e+00 : f32
    %291 = vector.broadcast %cst_67 : f32 to vector<8x128xf32>
    %292 = arith.addf %291, %290 : vector<8x128xf32>
    %293 = arith.divf %291, %292 : vector<8x128xf32>
    %294 = vector.extract_strided_slice %281 {offsets = [0, 256], sizes = [8, 128], strides = [1, 1]} : vector<8x512xf32> to vector<8x128xf32>
    %295 = vector.extract_strided_slice %281 {offsets = [0, 384], sizes = [8, 128], strides = [1, 1]} : vector<8x512xf32> to vector<8x128xf32>
    %296 = arith.mulf %287, %295 : vector<8x128xf32>
    %297 = arith.addf %294, %296 : vector<8x128xf32>
    %298 = math.tanh %297 : vector<8x128xf32>
    %cst_68 = arith.constant 1.000000e+00 : f32
    %299 = vector.broadcast %cst_68 : f32 to vector<8x128xf32>
    %300 = arith.subf %299, %293 : vector<8x128xf32>
    %301 = arith.mulf %300, %298 : vector<8x128xf32>
    %302 = arith.mulf %293, %246 : vector<8x128xf32>
    %303 = arith.addf %301, %302 : vector<8x128xf32>
    %c5_i32 = arith.constant 5 : i32
    %c8_i32_69 = arith.constant 8 : i32
    %304 = arith.muli %c5_i32, %c8_i32_69 : i32
    %305 = tpu.assume_multiple %304, 8 : i32
    %306 = arith.index_cast %305 : i32 to index
    %c0_70 = arith.constant 0 : index
    %307 = vector.load %arg12[%306, %c0_70] : memref<64x384xf32, #tpu.memory_space<vmem>>, vector<8x384xf32>
    %cst_71 = arith.constant dense<0.000000e+00> : vector<8x384xf32>
    %308 = tpu.matmul %278, %7, %cst_71 {dimension_numbers = #tpu.dot_dimension_numbers<[1], [0], [0], [1], [0, 0, 1, 1], [], []>} : vector<8x128xf32>, vector<128x384xf32>, vector<8x384xf32> -> vector<8x384xf32>
    %309 = vector.extract_strided_slice %307 {offsets = [0, 0], sizes = [8, 128], strides = [1, 1]} : vector<8x384xf32> to vector<8x128xf32>
    %310 = vector.extract_strided_slice %308 {offsets = [0, 0], sizes = [8, 128], strides = [1, 1]} : vector<8x384xf32> to vector<8x128xf32>
    %311 = arith.addf %309, %310 : vector<8x128xf32>
    %312 = arith.negf %311 : vector<8x128xf32>
    %313 = math.exp %312 : vector<8x128xf32>
    %cst_72 = arith.constant 1.000000e+00 : f32
    %314 = vector.broadcast %cst_72 : f32 to vector<8x128xf32>
    %315 = arith.addf %314, %313 : vector<8x128xf32>
    %316 = arith.divf %314, %315 : vector<8x128xf32>
    %317 = vector.extract_strided_slice %307 {offsets = [0, 128], sizes = [8, 128], strides = [1, 1]} : vector<8x384xf32> to vector<8x128xf32>
    %318 = vector.extract_strided_slice %308 {offsets = [0, 128], sizes = [8, 128], strides = [1, 1]} : vector<8x384xf32> to vector<8x128xf32>
    %319 = arith.addf %317, %318 : vector<8x128xf32>
    %320 = arith.negf %319 : vector<8x128xf32>
    %321 = math.exp %320 : vector<8x128xf32>
    %cst_73 = arith.constant 1.000000e+00 : f32
    %322 = vector.broadcast %cst_73 : f32 to vector<8x128xf32>
    %323 = arith.addf %322, %321 : vector<8x128xf32>
    %324 = arith.divf %322, %323 : vector<8x128xf32>
    %325 = vector.extract_strided_slice %307 {offsets = [0, 256], sizes = [8, 128], strides = [1, 1]} : vector<8x384xf32> to vector<8x128xf32>
    %326 = vector.extract_strided_slice %308 {offsets = [0, 256], sizes = [8, 128], strides = [1, 1]} : vector<8x384xf32> to vector<8x128xf32>
    %327 = arith.addf %326, %14 : vector<8x128xf32>
    %328 = arith.mulf %316, %327 : vector<8x128xf32>
    %329 = arith.addf %325, %328 : vector<8x128xf32>
    %330 = math.tanh %329 : vector<8x128xf32>
    %cst_74 = arith.constant 1.000000e+00 : f32
    %331 = vector.broadcast %cst_74 : f32 to vector<8x128xf32>
    %332 = arith.subf %331, %324 : vector<8x128xf32>
    %333 = arith.mulf %332, %330 : vector<8x128xf32>
    %334 = arith.mulf %324, %278 : vector<8x128xf32>
    %335 = arith.addf %333, %334 : vector<8x128xf32>
    %336 = tpu.concatenate %335, %303 in 1 : vector<8x128xf32>, vector<8x128xf32> -> vector<8x256xf32>
    %cst_75 = arith.constant dense<0.000000e+00> : vector<8x512xf32>
    %337 = tpu.matmul %336, %8, %cst_75 {dimension_numbers = #tpu.dot_dimension_numbers<[1], [0], [0], [1], [0, 0, 1, 1], [], []>} : vector<8x256xf32>, vector<256x512xf32>, vector<8x512xf32> -> vector<8x512xf32>
    %338 = arith.addf %337, %11 : vector<8x512xf32>
    %339 = vector.extract_strided_slice %338 {offsets = [0, 0], sizes = [8, 128], strides = [1, 1]} : vector<8x512xf32> to vector<8x128xf32>
    %340 = arith.negf %339 : vector<8x128xf32>
    %341 = math.exp %340 : vector<8x128xf32>
    %cst_76 = arith.constant 1.000000e+00 : f32
    %342 = vector.broadcast %cst_76 : f32 to vector<8x128xf32>
    %343 = arith.addf %342, %341 : vector<8x128xf32>
    %344 = arith.divf %342, %343 : vector<8x128xf32>
    %345 = vector.extract_strided_slice %338 {offsets = [0, 128], sizes = [8, 128], strides = [1, 1]} : vector<8x512xf32> to vector<8x128xf32>
    %346 = arith.negf %345 : vector<8x128xf32>
    %347 = math.exp %346 : vector<8x128xf32>
    %cst_77 = arith.constant 1.000000e+00 : f32
    %348 = vector.broadcast %cst_77 : f32 to vector<8x128xf32>
    %349 = arith.addf %348, %347 : vector<8x128xf32>
    %350 = arith.divf %348, %349 : vector<8x128xf32>
    %351 = vector.extract_strided_slice %338 {offsets = [0, 256], sizes = [8, 128], strides = [1, 1]} : vector<8x512xf32> to vector<8x128xf32>
    %352 = vector.extract_strided_slice %338 {offsets = [0, 384], sizes = [8, 128], strides = [1, 1]} : vector<8x512xf32> to vector<8x128xf32>
    %353 = arith.mulf %344, %352 : vector<8x128xf32>
    %354 = arith.addf %351, %353 : vector<8x128xf32>
    %355 = math.tanh %354 : vector<8x128xf32>
    %cst_78 = arith.constant 1.000000e+00 : f32
    %356 = vector.broadcast %cst_78 : f32 to vector<8x128xf32>
    %357 = arith.subf %356, %350 : vector<8x128xf32>
    %358 = arith.mulf %357, %355 : vector<8x128xf32>
    %359 = arith.mulf %350, %303 : vector<8x128xf32>
    %360 = arith.addf %358, %359 : vector<8x128xf32>
    %c6_i32 = arith.constant 6 : i32
    %c8_i32_79 = arith.constant 8 : i32
    %361 = arith.muli %c6_i32, %c8_i32_79 : i32
    %362 = tpu.assume_multiple %361, 8 : i32
    %363 = arith.index_cast %362 : i32 to index
    %c0_80 = arith.constant 0 : index
    %364 = vector.load %arg12[%363, %c0_80] : memref<64x384xf32, #tpu.memory_space<vmem>>, vector<8x384xf32>
    %cst_81 = arith.constant dense<0.000000e+00> : vector<8x384xf32>
    %365 = tpu.matmul %335, %7, %cst_81 {dimension_numbers = #tpu.dot_dimension_numbers<[1], [0], [0], [1], [0, 0, 1, 1], [], []>} : vector<8x128xf32>, vector<128x384xf32>, vector<8x384xf32> -> vector<8x384xf32>
    %366 = vector.extract_strided_slice %364 {offsets = [0, 0], sizes = [8, 128], strides = [1, 1]} : vector<8x384xf32> to vector<8x128xf32>
    %367 = vector.extract_strided_slice %365 {offsets = [0, 0], sizes = [8, 128], strides = [1, 1]} : vector<8x384xf32> to vector<8x128xf32>
    %368 = arith.addf %366, %367 : vector<8x128xf32>
    %369 = arith.negf %368 : vector<8x128xf32>
    %370 = math.exp %369 : vector<8x128xf32>
    %cst_82 = arith.constant 1.000000e+00 : f32
    %371 = vector.broadcast %cst_82 : f32 to vector<8x128xf32>
    %372 = arith.addf %371, %370 : vector<8x128xf32>
    %373 = arith.divf %371, %372 : vector<8x128xf32>
    %374 = vector.extract_strided_slice %364 {offsets = [0, 128], sizes = [8, 128], strides = [1, 1]} : vector<8x384xf32> to vector<8x128xf32>
    %375 = vector.extract_strided_slice %365 {offsets = [0, 128], sizes = [8, 128], strides = [1, 1]} : vector<8x384xf32> to vector<8x128xf32>
    %376 = arith.addf %374, %375 : vector<8x128xf32>
    %377 = arith.negf %376 : vector<8x128xf32>
    %378 = math.exp %377 : vector<8x128xf32>
    %cst_83 = arith.constant 1.000000e+00 : f32
    %379 = vector.broadcast %cst_83 : f32 to vector<8x128xf32>
    %380 = arith.addf %379, %378 : vector<8x128xf32>
    %381 = arith.divf %379, %380 : vector<8x128xf32>
    %382 = vector.extract_strided_slice %364 {offsets = [0, 256], sizes = [8, 128], strides = [1, 1]} : vector<8x384xf32> to vector<8x128xf32>
    %383 = vector.extract_strided_slice %365 {offsets = [0, 256], sizes = [8, 128], strides = [1, 1]} : vector<8x384xf32> to vector<8x128xf32>
    %384 = arith.addf %383, %14 : vector<8x128xf32>
    %385 = arith.mulf %373, %384 : vector<8x128xf32>
    %386 = arith.addf %382, %385 : vector<8x128xf32>
    %387 = math.tanh %386 : vector<8x128xf32>
    %cst_84 = arith.constant 1.000000e+00 : f32
    %388 = vector.broadcast %cst_84 : f32 to vector<8x128xf32>
    %389 = arith.subf %388, %381 : vector<8x128xf32>
    %390 = arith.mulf %389, %387 : vector<8x128xf32>
    %391 = arith.mulf %381, %335 : vector<8x128xf32>
    %392 = arith.addf %390, %391 : vector<8x128xf32>
    %393 = tpu.concatenate %392, %360 in 1 : vector<8x128xf32>, vector<8x128xf32> -> vector<8x256xf32>
    %cst_85 = arith.constant dense<0.000000e+00> : vector<8x512xf32>
    %394 = tpu.matmul %393, %8, %cst_85 {dimension_numbers = #tpu.dot_dimension_numbers<[1], [0], [0], [1], [0, 0, 1, 1], [], []>} : vector<8x256xf32>, vector<256x512xf32>, vector<8x512xf32> -> vector<8x512xf32>
    %395 = arith.addf %394, %11 : vector<8x512xf32>
    %396 = vector.extract_strided_slice %395 {offsets = [0, 0], sizes = [8, 128], strides = [1, 1]} : vector<8x512xf32> to vector<8x128xf32>
    %397 = arith.negf %396 : vector<8x128xf32>
    %398 = math.exp %397 : vector<8x128xf32>
    %cst_86 = arith.constant 1.000000e+00 : f32
    %399 = vector.broadcast %cst_86 : f32 to vector<8x128xf32>
    %400 = arith.addf %399, %398 : vector<8x128xf32>
    %401 = arith.divf %399, %400 : vector<8x128xf32>
    %402 = vector.extract_strided_slice %395 {offsets = [0, 128], sizes = [8, 128], strides = [1, 1]} : vector<8x512xf32> to vector<8x128xf32>
    %403 = arith.negf %402 : vector<8x128xf32>
    %404 = math.exp %403 : vector<8x128xf32>
    %cst_87 = arith.constant 1.000000e+00 : f32
    %405 = vector.broadcast %cst_87 : f32 to vector<8x128xf32>
    %406 = arith.addf %405, %404 : vector<8x128xf32>
    %407 = arith.divf %405, %406 : vector<8x128xf32>
    %408 = vector.extract_strided_slice %395 {offsets = [0, 256], sizes = [8, 128], strides = [1, 1]} : vector<8x512xf32> to vector<8x128xf32>
    %409 = vector.extract_strided_slice %395 {offsets = [0, 384], sizes = [8, 128], strides = [1, 1]} : vector<8x512xf32> to vector<8x128xf32>
    %410 = arith.mulf %401, %409 : vector<8x128xf32>
    %411 = arith.addf %408, %410 : vector<8x128xf32>
    %412 = math.tanh %411 : vector<8x128xf32>
    %cst_88 = arith.constant 1.000000e+00 : f32
    %413 = vector.broadcast %cst_88 : f32 to vector<8x128xf32>
    %414 = arith.subf %413, %407 : vector<8x128xf32>
    %415 = arith.mulf %414, %412 : vector<8x128xf32>
    %416 = arith.mulf %407, %360 : vector<8x128xf32>
    %417 = arith.addf %415, %416 : vector<8x128xf32>
    %c7_i32 = arith.constant 7 : i32
    %c8_i32_89 = arith.constant 8 : i32
    %418 = arith.muli %c7_i32, %c8_i32_89 : i32
    %419 = tpu.assume_multiple %418, 8 : i32
    %420 = arith.index_cast %419 : i32 to index
    %c0_90 = arith.constant 0 : index
    %421 = vector.load %arg12[%420, %c0_90] : memref<64x384xf32, #tpu.memory_space<vmem>>, vector<8x384xf32>
    %cst_91 = arith.constant dense<0.000000e+00> : vector<8x384xf32>
    %422 = tpu.matmul %392, %7, %cst_91 {dimension_numbers = #tpu.dot_dimension_numbers<[1], [0], [0], [1], [0, 0, 1, 1], [], []>} : vector<8x128xf32>, vector<128x384xf32>, vector<8x384xf32> -> vector<8x384xf32>
    %423 = vector.extract_strided_slice %421 {offsets = [0, 0], sizes = [8, 128], strides = [1, 1]} : vector<8x384xf32> to vector<8x128xf32>
    %424 = vector.extract_strided_slice %422 {offsets = [0, 0], sizes = [8, 128], strides = [1, 1]} : vector<8x384xf32> to vector<8x128xf32>
    %425 = arith.addf %423, %424 : vector<8x128xf32>
    %426 = arith.negf %425 : vector<8x128xf32>
    %427 = math.exp %426 : vector<8x128xf32>
    %cst_92 = arith.constant 1.000000e+00 : f32
    %428 = vector.broadcast %cst_92 : f32 to vector<8x128xf32>
    %429 = arith.addf %428, %427 : vector<8x128xf32>
    %430 = arith.divf %428, %429 : vector<8x128xf32>
    %431 = vector.extract_strided_slice %421 {offsets = [0, 128], sizes = [8, 128], strides = [1, 1]} : vector<8x384xf32> to vector<8x128xf32>
    %432 = vector.extract_strided_slice %422 {offsets = [0, 128], sizes = [8, 128], strides = [1, 1]} : vector<8x384xf32> to vector<8x128xf32>
    %433 = arith.addf %431, %432 : vector<8x128xf32>
    %434 = arith.negf %433 : vector<8x128xf32>
    %435 = math.exp %434 : vector<8x128xf32>
    %cst_93 = arith.constant 1.000000e+00 : f32
    %436 = vector.broadcast %cst_93 : f32 to vector<8x128xf32>
    %437 = arith.addf %436, %435 : vector<8x128xf32>
    %438 = arith.divf %436, %437 : vector<8x128xf32>
    %439 = vector.extract_strided_slice %421 {offsets = [0, 256], sizes = [8, 128], strides = [1, 1]} : vector<8x384xf32> to vector<8x128xf32>
    %440 = vector.extract_strided_slice %422 {offsets = [0, 256], sizes = [8, 128], strides = [1, 1]} : vector<8x384xf32> to vector<8x128xf32>
    %441 = arith.addf %440, %14 : vector<8x128xf32>
    %442 = arith.mulf %430, %441 : vector<8x128xf32>
    %443 = arith.addf %439, %442 : vector<8x128xf32>
    %444 = math.tanh %443 : vector<8x128xf32>
    %cst_94 = arith.constant 1.000000e+00 : f32
    %445 = vector.broadcast %cst_94 : f32 to vector<8x128xf32>
    %446 = arith.subf %445, %438 : vector<8x128xf32>
    %447 = arith.mulf %446, %444 : vector<8x128xf32>
    %448 = arith.mulf %438, %392 : vector<8x128xf32>
    %449 = arith.addf %447, %448 : vector<8x128xf32>
    %450 = tpu.concatenate %449, %417 in 1 : vector<8x128xf32>, vector<8x128xf32> -> vector<8x256xf32>
    %cst_95 = arith.constant dense<0.000000e+00> : vector<8x512xf32>
    %451 = tpu.matmul %450, %8, %cst_95 {dimension_numbers = #tpu.dot_dimension_numbers<[1], [0], [0], [1], [0, 0, 1, 1], [], []>} : vector<8x256xf32>, vector<256x512xf32>, vector<8x512xf32> -> vector<8x512xf32>
    %452 = arith.addf %451, %11 : vector<8x512xf32>
    %453 = vector.extract_strided_slice %452 {offsets = [0, 0], sizes = [8, 128], strides = [1, 1]} : vector<8x512xf32> to vector<8x128xf32>
    %454 = arith.negf %453 : vector<8x128xf32>
    %455 = math.exp %454 : vector<8x128xf32>
    %cst_96 = arith.constant 1.000000e+00 : f32
    %456 = vector.broadcast %cst_96 : f32 to vector<8x128xf32>
    %457 = arith.addf %456, %455 : vector<8x128xf32>
    %458 = arith.divf %456, %457 : vector<8x128xf32>
    %459 = vector.extract_strided_slice %452 {offsets = [0, 128], sizes = [8, 128], strides = [1, 1]} : vector<8x512xf32> to vector<8x128xf32>
    %460 = arith.negf %459 : vector<8x128xf32>
    %461 = math.exp %460 : vector<8x128xf32>
    %cst_97 = arith.constant 1.000000e+00 : f32
    %462 = vector.broadcast %cst_97 : f32 to vector<8x128xf32>
    %463 = arith.addf %462, %461 : vector<8x128xf32>
    %464 = arith.divf %462, %463 : vector<8x128xf32>
    %465 = vector.extract_strided_slice %452 {offsets = [0, 256], sizes = [8, 128], strides = [1, 1]} : vector<8x512xf32> to vector<8x128xf32>
    %466 = vector.extract_strided_slice %452 {offsets = [0, 384], sizes = [8, 128], strides = [1, 1]} : vector<8x512xf32> to vector<8x128xf32>
    %467 = arith.mulf %458, %466 : vector<8x128xf32>
    %468 = arith.addf %465, %467 : vector<8x128xf32>
    %469 = math.tanh %468 : vector<8x128xf32>
    %cst_98 = arith.constant 1.000000e+00 : f32
    %470 = vector.broadcast %cst_98 : f32 to vector<8x128xf32>
    %471 = arith.subf %470, %464 : vector<8x128xf32>
    %472 = arith.mulf %471, %469 : vector<8x128xf32>
    %473 = arith.mulf %464, %417 : vector<8x128xf32>
    %474 = arith.addf %472, %473 : vector<8x128xf32>
    %c8_i32_99 = arith.constant 8 : i32
    %c0_100 = arith.constant 0 : index
    %c0_101 = arith.constant 0 : index
    %c0_102 = arith.constant 0 : index
    %475 = vector.load %arg11[%c0_100, %c0_101, %c0_102] : memref<2x8x128xf32, #tpu.memory_space<vmem>>, vector<1x8x128xf32>
    %476 = vector.shape_cast %475 : vector<1x8x128xf32> to vector<8x128xf32>
    %477 = vector.shape_cast %449 : vector<8x128xf32> to vector<1x8x128xf32>
    tpu.vector_store %arg11[%c0_100, %c0_101, %c0_102], %477 {strides = array<i32>} : memref<2x8x128xf32, #tpu.memory_space<vmem>>, vector<1x8x128xf32>,
    %c1_103 = arith.constant 1 : index
    %c0_104 = arith.constant 0 : index
    %c0_105 = arith.constant 0 : index
    %478 = vector.load %arg11[%c1_103, %c0_104, %c0_105] : memref<2x8x128xf32, #tpu.memory_space<vmem>>, vector<1x8x128xf32>
    %479 = vector.shape_cast %478 : vector<1x8x128xf32> to vector<8x128xf32>
    %480 = vector.shape_cast %474 : vector<8x128xf32> to vector<1x8x128xf32>
    tpu.vector_store %arg11[%c1_103, %c0_104, %c0_105], %480 {strides = array<i32>} : memref<2x8x128xf32, #tpu.memory_space<vmem>>, vector<1x8x128xf32>,
    %cst_106 = arith.constant 0.000000e+00 : f32
    %481 = vector.broadcast %cst_106 : f32 to vector<8x128xf32>
    %482 = arith.maximumf %474, %481 : vector<8x128xf32>
    %c0_107 = arith.constant 0 : index
    %c0_108 = arith.constant 0 : index
    %483 = vector.load %arg8[%c0_107, %c0_108] : memref<128x1xf32, #tpu.memory_space<vmem>>, vector<128x1xf32>
    %cst_109 = arith.constant dense<0.000000e+00> : vector<8x1xf32>
    %484 = tpu.matmul %482, %483, %cst_109 {dimension_numbers = #tpu.dot_dimension_numbers<[1], [0], [0], [1], [0, 0, 1, 1], [], []>} : vector<8x128xf32>, vector<128x1xf32>, vector<8x1xf32> -> vector<8x1xf32>
    %c0_110 = arith.constant 0 : index
    %c0_111 = arith.constant 0 : index
    %485 = vector.load %arg9[%c0_110, %c0_111] : memref<1x1xf32, #tpu.memory_space<vmem>>, vector<1x1xf32>
    %486 = vector.broadcast %485 : vector<1x1xf32> to vector<8x1xf32>
    %487 = arith.addf %484, %486 : vector<8x1xf32>
    %c0_112 = arith.constant 0 : index
    %c0_113 = arith.constant 0 : index
    %488 = vector.load %arg10[%c0_112, %c0_113] : memref<8x1xf32, #tpu.memory_space<vmem>>, vector<8x1xf32>
    tpu.vector_store %arg10[%c0_112, %c0_113], %487 {strides = array<i32>} : memref<8x1xf32, #tpu.memory_space<vmem>>, vector<8x1xf32>,
    return
  }
}

</mosaic_0001>

<llo_original>
// kernel: grunet_forward.1
$region0: #{grunet_forward.1}
  #allocation0 [shape = 'u32[]', space=smem, size = 0x4, offset = 0x4, fixed_abs, tag = 'smem constant byte address 0x4 - core index']
  #allocation1 [shape = 'u32[144,128]{1,0:T(1,128)}', space=vmem, size = 0x12000, scoped, tag = 'internal scratch']
  #allocation2 [shape = 'f32[64,384]{1,0:T(8,128)}', space=vmem, size = 0x18000, scoped, tag = 'scratch operand']
  #allocation3 [shape = 'f32[1,1]{1,0:T(1,128)S(1)}', space=vmem, size = 0x200, scoped, tag = 'scoped memory for grunet_forward.1']
  %s0 = inlined_call_operand.vmem [shape: f32[64,8], index: 0, kind: input, shape index: {}]
  %s1 = inlined_call_operand.vmem [shape: f32[2,8,128], index: 1, kind: input, shape index: {}]
  %s2 = inlined_call_operand.vmem [shape: f32[8,384], index: 2, kind: input, shape index: {}]
  %s3 = inlined_call_operand.vmem [shape: f32[128,384], index: 3, kind: input, shape index: {}]
  %s4 = inlined_call_operand.vmem [shape: f32[1,384], index: 4, kind: input, shape index: {}]
  %s5 = inlined_call_operand.vmem [shape: f32[1,128], index: 5, kind: input, shape index: {}]
  %s6 = inlined_call_operand.vmem [shape: f32[256,512], index: 6, kind: input, shape index: {}]
  %s7 = inlined_call_operand.vmem [shape: f32[1,512], index: 7, kind: input, shape index: {}]
  %s8 = inlined_call_operand.vmem [shape: f32[128,1], index: 8, kind: input, shape index: {}]
  %s9 = inlined_call_operand.<no memory space> [shape: f32[1,1], index: 9, kind: input, shape index: {}]
  %s10 = inlined_call_operand.vmem [shape: f32[8,1], index: 10, kind: output, shape index: {0}]
  %s11 = inlined_call_operand.vmem [shape: f32[2,8,128], index: 11, kind: output, shape index: {1}]
  %12 = xla_tuple %s10, %s11
  %s13 = sld [smem:[#allocation0]]
  $region58: #{grunet_forward.1} parent=0
    _
  %s15 = ssub.s32 1, %s13
  %s16 = scalar_select 0, %s15, %s13
  %v17 = vstv %s9
  %18 = vst [vmem:[#allocation3] sm:$0x1] %v17
  // Predicated region
  $region2: #{grunet_forward.1} parent=0 // pred_check
    _
  $region3: #{grunet_forward.1} parent=0 // pred_check_branch
    %20 = sbr.rel (0) target = $region5
  $region4: #{grunet_forward.1} parent=0 // pred_region
    _
  $region5: #{grunet_forward.1} parent=0 // pred_fallthru
    _
  // Predicated region
  $region6: #{grunet_forward.1} parent=0 // pred_check
    _
  $region7: #{grunet_forward.1} parent=0 // pred_check_branch
    %22 = sbr.rel (0) target = $region9
  $region8: #{grunet_forward.1} parent=0 // pred_region
    _
  $region9: #{grunet_forward.1} parent=0 // pred_fallthru
    _
  // Predicated region
  $region10: #{grunet_forward.1} parent=0 // pred_check
    _
  $region11: #{grunet_forward.1} parent=0 // pred_check_branch
    %24 = sbr.rel (0) target = $region13
  $region12: #{grunet_forward.1} parent=0 // pred_region
    _
  $region13: #{grunet_forward.1} parent=0 // pred_fallthru
    _
  // Predicated region
  $region14: #{grunet_forward.1} parent=0 // pred_check
    _
  $region15: #{grunet_forward.1} parent=0 // pred_check_branch
    %26 = sbr.rel (0) target = $region17
  $region16: #{grunet_forward.1} parent=0 // pred_region
    _
  $region17: #{grunet_forward.1} parent=0 // pred_fallthru
    _
  // Predicated region
  $region18: #{grunet_forward.1} parent=0 // pred_check
    _
  $region19: #{grunet_forward.1} parent=0 // pred_check_branch
    %28 = sbr.rel (0) target = $region21
  $region20: #{grunet_forward.1} parent=0 // pred_region
    _
  $region21: #{grunet_forward.1} parent=0 // pred_fallthru
    _
  // Predicated region
  $region22: #{grunet_forward.1} parent=0 // pred_check
    _
  $region23: #{grunet_forward.1} parent=0 // pred_check_branch
    %30 = sbr.rel (0) target = $region25
  $region24: #{grunet_forward.1} parent=0 // pred_region
    _
  $region25: #{grunet_forward.1} parent=0 // pred_fallthru
    _
  // Predicated region
  $region26: #{grunet_forward.1} parent=0 // pred_check
    _
  $region27: #{grunet_forward.1} parent=0 // pred_check_branch
    %32 = sbr.rel (0) target = $region29
  $region28: #{grunet_forward.1} parent=0 // pred_region
    _
  $region29: #{grunet_forward.1} parent=0 // pred_fallthru
    _
  // Predicated region
  $region30: #{grunet_forward.1} parent=0 // pred_check
    _
  $region31: #{grunet_forward.1} parent=0 // pred_check_branch
    %34 = sbr.rel (0) target = $region33
  $region32: #{grunet_forward.1} parent=0 // pred_region
    _
  $region33: #{grunet_forward.1} parent=0 // pred_fallthru
    _
  // Predicated region
  $region34: #{grunet_forward.1} parent=0 // pred_check
    _
  $region35: #{grunet_forward.1} parent=0 // pred_check_branch
    %36 = sbr.rel (0) target = $region37
  $region36: #{grunet_forward.1} parent=0 // pred_region
    _
  $region37: #{grunet_forward.1} parent=0 // pred_fallthru
    _
  // Predicated region
  $region38: #{grunet_forward.1} parent=0 // pred_check
    _
  $region39: #{grunet_forward.1} parent=0 // pred_check_branch
    %38 = sbr.rel (0) target = $region41
  $region40: #{grunet_forward.1} parent=0 // pred_region
    _
  $region41: #{grunet_forward.1} parent=0 // pred_fallthru
    _
  %v39 = vld [vmem:[%s0] sm:$0xff]
  %v40 = vld [vmem:[%s0 + $0x8] sm:$0xff]
  %v41 = vld [vmem:[%s0 + $0x10] sm:$0xff]
  %v42 = vld [vmem:[%s0 + $0x18] sm:$0xff]
  %v43 = vld [vmem:[%s0 + $0x20] sm:$0xff]
  %v44 = vld [vmem:[%s0 + $0x28] sm:$0xff]
  %v45 = vld [vmem:[%s0 + $0x30] sm:$0xff]
  %v46 = vld [vmem:[%s0 + $0x38] sm:$0xff]
  %v47 = vld [vmem:[%s2] sm:$0xff]
  %v48 = vld [vmem:[%s2 + $0x8] sm:$0xff]
  %v49 = vld [vmem:[%s2 + $0x10] sm:$0xff]
  %v50 = vld [vmem:[%s4] sm:$0x7]
  %v52 = vlaneseq
  %v53 = vshrl.u32 %v52, 7
  %v54 = vsub.s32 0, %v53
  %v55 = vrot.slane %v50, %v54
  %v56 = vlaneseq
  %v57 = vshrl.u32 %v56, 7
  %v58 = vsub.s32 1, %v57
  %v59 = vrot.slane %v50, %v58
  %v60 = vlaneseq
  %v61 = vshrl.u32 %v60, 7
  %v62 = vsub.s32 2, %v61
  %v63 = vrot.slane %v50, %v62
  %vm67 = vcmask 64512
  %v69 = vsel %vm67, %v39, 0
  %v72 = vsel %vm67, %v40, 0
  %v75 = vsel %vm67, %v41, 0
  %v78 = vsel %vm67, %v42, 0
  %v81 = vsel %vm67, %v43, 0
  %v84 = vsel %vm67, %v44, 0
  %v87 = vsel %vm67, %v45, 0
  %v90 = vsel %vm67, %v46, 0
  %92 = vmatprep.subr.mxu0 0.0
  %93 = vmatpush1.msra.mxu0 0.0
  %94 = vmatprep.subr.mxu0 0.0
  %95 = vmatpush1.msra.mxu0 0.0
  %96 = vmatprep.subr.mxu0 0.0
  %97 = vmatpush1.msra.mxu0 0.0
  %98 = vmatprep.subr.mxu0 0.0
  %99 = vmatpush1.msra.mxu0 0.0
  %100 = vmatprep.subr.mxu0 0.0
  %101 = vmatpush1.msra.mxu0 0.0
  %102 = vmatprep.subr.mxu0 0.0
  %103 = vmatpush1.msra.mxu0 0.0
  %104 = vmatprep.subr.mxu0 0.0
  %105 = vmatpush1.msra.mxu0 0.0
  %106 = vmatprep.subr.mxu0 0.0
  %107 = vmatpush1.msra.mxu0 0.0
  %108 = vmatprep.subr.mxu0 0.0
  %109 = vmatpush1.msra.mxu0 0.0
  %110 = vmatprep.subr.mxu0 0.0
  %111 = vmatpush1.msra.mxu0 0.0
  %112 = vmatprep.subr.mxu0 0.0
  %113 = vmatpush1.msra.mxu0 0.0
  %114 = vmatprep.subr.mxu0 0.0
  %115 = vmatpush1.msra.mxu0 0.0
  %116 = vmatprep.subr.mxu0 0.0
  %117 = vmatpush1.msra.mxu0 0.0
  %118 = vmatprep.subr.mxu0 0.0
  %119 = vmatpush1.msra.mxu0 0.0
  %120 = vmatprep.subr.mxu0 0.0
  %121 = vmatpush1.msra.mxu0 0.0
  %122 = vmatprep.subr.mxu0 %v48
  %123 = vmatpush1.msra.mxu0 %v47
  %124 = vmatprep.subr.mxu0 0.0
  %125 = vmatpush2.msra.mxu0 0.0
  %126 = vmatprep.subr.mxu0 0.0
  %127 = vmatpush2.msra.mxu0 0.0
  %128 = vmatprep.subr.mxu0 0.0
  %129 = vmatpush2.msra.mxu0 0.0
  %130 = vmatprep.subr.mxu0 0.0
  %131 = vmatpush2.msra.mxu0 0.0
  %132 = vmatprep.subr.mxu0 0.0
  %133 = vmatpush2.msra.mxu0 0.0
  %134 = vmatprep.subr.mxu0 0.0
  %135 = vmatpush2.msra.mxu0 0.0
  %136 = vmatprep.subr.mxu0 0.0
  %137 = vmatpush2.msra.mxu0 0.0
  %138 = vmatprep.subr.mxu0 0.0
  %139 = vmatpush2.msra.mxu0 0.0
  %140 = vmatprep.subr.mxu0 0.0
  %141 = vmatpush2.msra.mxu0 0.0
  %142 = vmatprep.subr.mxu0 0.0
  %143 = vmatpush2.msra.mxu0 0.0
  %144 = vmatprep.subr.mxu0 0.0
  %145 = vmatpush2.msra.mxu0 0.0
  %146 = vmatprep.subr.mxu0 0.0
  %147 = vmatpush2.msra.mxu0 0.0
  %148 = vmatprep.subr.mxu0 0.0
  %149 = vmatpush2.msra.mxu0 0.0
  %150 = vmatprep.subr.mxu0 0.0
  %151 = vmatpush2.msra.mxu0 0.0
  %152 = vmatprep.subr.mxu0 0.0
  %153 = vmatpush2.msra.mxu0 0.0
  %154 = vmatprep.subr.mxu0 0.0
  %155 = vmatpush2.msra.mxu0 0.0
  %156 = vmatprep.mubr.f32.mxu0 0.0
  %157 = vmatmul.mubr.f32.gmra.mxu0 %v69
  %v158 = vpop.f32.mrf.mxu0
  %v159 = vadd.f32 %v55, %v158
  %v160 = vpop.f32.mrf.mxu0
  %v161 = vadd.f32 %v59, %v160
  %162 = vmatprep.mubr.f32.mxu0 0.0
  %163 = vmatmul.mubr.f32.gmra.mxu0 %v72
  %v164 = vpop.f32.mrf.mxu0
  %v165 = vadd.f32 %v55, %v164
  %v166 = vpop.f32.mrf.mxu0
  %v167 = vadd.f32 %v59, %v166
  %168 = vmatprep.mubr.f32.mxu0 0.0
  %169 = vmatmul.mubr.f32.gmra.mxu0 %v75
  %v170 = vpop.f32.mrf.mxu0
  %v171 = vadd.f32 %v55, %v170
  %v172 = vpop.f32.mrf.mxu0
  %v173 = vadd.f32 %v59, %v172
  %174 = vmatprep.mubr.f32.mxu0 0.0
  %175 = vmatmul.mubr.f32.gmra.mxu0 %v78
  %v176 = vpop.f32.mrf.mxu0
  %v177 = vadd.f32 %v55, %v176
  %v178 = vpop.f32.mrf.mxu0
  %v179 = vadd.f32 %v59, %v178
  %180 = vmatprep.mubr.f32.mxu0 0.0
  %181 = vmatmul.mubr.f32.gmra.mxu0 %v81
  %v182 = vpop.f32.mrf.mxu0
  %v183 = vadd.f32 %v55, %v182
  %v184 = vpop.f32.mrf.mxu0
  %v185 = vadd.f32 %v59, %v184
  %186 = vmatprep.mubr.f32.mxu0 0.0
  %187 = vmatmul.mubr.f32.gmra.mxu0 %v84
  %v188 = vpop.f32.mrf.mxu0
  %v189 = vadd.f32 %v55, %v188
  %v190 = vpop.f32.mrf.mxu0
  %v191 = vadd.f32 %v59, %v190
  %192 = vmatprep.mubr.f32.mxu0 0.0
  %193 = vmatmul.mubr.f32.gmra.mxu0 %v87
  %v194 = vpop.f32.mrf.mxu0
  %v195 = vadd.f32 %v55, %v194
  %v196 = vpop.f32.mrf.mxu0
  %v197 = vadd.f32 %v59, %v196
  %198 = vmatprep.mubr.f32.mxu0 0.0
  %199 = vmatmul.mubr.f32.gmra.mxu0 %v90
  %v200 = vpop.f32.mrf.mxu0
  %v201 = vadd.f32 %v55, %v200
  %v202 = vpop.f32.mrf.mxu0
  %v203 = vadd.f32 %v59, %v202
  %204 = vdwg.mxu0
  %205 = vmatprep.subr.mxu0 0.0
  %206 = vmatpush1.msra.mxu0 0.0
  %207 = vmatprep.subr.mxu0 0.0
  %208 = vmatpush1.msra.mxu0 0.0
  %209 = vmatprep.subr.mxu0 0.0
  %210 = vmatpush1.msra.mxu0 0.0
  %211 = vmatprep.subr.mxu0 0.0
  %212 = vmatpush1.msra.mxu0 0.0
  %213 = vmatprep.subr.mxu0 0.0
  %214 = vmatpush1.msra.mxu0 0.0
  %215 = vmatprep.subr.mxu0 0.0
  %216 = vmatpush1.msra.mxu0 0.0
  %217 = vmatprep.subr.mxu0 0.0
  %218 = vmatpush1.msra.mxu0 0.0
  %219 = vmatprep.subr.mxu0 0.0
  %220 = vmatpush1.msra.mxu0 0.0
  %221 = vmatprep.subr.mxu0 0.0
  %222 = vmatpush1.msra.mxu0 0.0
  %223 = vmatprep.subr.mxu0 0.0
  %224 = vmatpush1.msra.mxu0 0.0
  %225 = vmatprep.subr.mxu0 0.0
  %226 = vmatpush1.msra.mxu0 0.0
  %227 = vmatprep.subr.mxu0 0.0
  %228 = vmatpush1.msra.mxu0 0.0
  %229 = vmatprep.subr.mxu0 0.0
  %230 = vmatpush1.msra.mxu0 0.0
  %231 = vmatprep.subr.mxu0 0.0
  %232 = vmatpush1.msra.mxu0 0.0
  %233 = vmatprep.subr.mxu0 0.0
  %234 = vmatpush1.msra.mxu0 0.0
  %235 = vmatprep.subr.mxu0 0.0
  %236 = vmatpush1.msra.mxu0 %v49
  %237 = vmatprep.subr.mxu0 0.0
  %238 = vmatpush2.msra.mxu0 0.0
  %239 = vmatprep.subr.mxu0 0.0
  %240 = vmatpush2.msra.mxu0 0.0
  %241 = vmatprep.subr.mxu0 0.0
  %242 = vmatpush2.msra.mxu0 0.0
  %243 = vmatprep.subr.mxu0 0.0
  %244 = vmatpush2.msra.mxu0 0.0
  %245 = vmatprep.subr.mxu0 0.0
  %246 = vmatpush2.msra.mxu0 0.0
  %247 = vmatprep.subr.mxu0 0.0
  %248 = vmatpush2.msra.mxu0 0.0
  %249 = vmatprep.subr.mxu0 0.0
  %250 = vmatpush2.msra.mxu0 0.0
  %251 = vmatprep.subr.mxu0 0.0
  %252 = vmatpush2.msra.mxu0 0.0
  %253 = vmatprep.subr.mxu0 0.0
  %254 = vmatpush2.msra.mxu0 0.0
  %255 = vmatprep.subr.mxu0 0.0
  %256 = vmatpush2.msra.mxu0 0.0
  %257 = vmatprep.subr.mxu0 0.0
  %258 = vmatpush2.msra.mxu0 0.0
  %259 = vmatprep.subr.mxu0 0.0
  %260 = vmatpush2.msra.mxu0 0.0
  %261 = vmatprep.subr.mxu0 0.0
  %262 = vmatpush2.msra.mxu0 0.0
  %263 = vmatprep.subr.mxu0 0.0
  %264 = vmatpush2.msra.mxu0 0.0
  %265 = vmatprep.subr.mxu0 0.0
  %266 = vmatpush2.msra.mxu0 0.0
  %267 = vmatprep.subr.mxu0 0.0
  %268 = vmatpush2.msra.mxu0 0.0
  %269 = vmatprep.mubr.f32.mxu0 0.0
  %270 = vmatmul.mubr.f32.gmra.mxu0 %v69
  %v271 = vpop.f32.mrf.mxu0
  %v272 = vadd.f32 %v63, %v271
  %v273 = vpop.f32.mrf.mxu0
  %274 = vmatprep.mubr.f32.mxu0 0.0
  %275 = vmatmul.mubr.f32.gmra.mxu0 %v72
  %v276 = vpop.f32.mrf.mxu0
  %v277 = vadd.f32 %v63, %v276
  %v278 = vpop.f32.mrf.mxu0
  %279 = vmatprep.mubr.f32.mxu0 0.0
  %280 = vmatmul.mubr.f32.gmra.mxu0 %v75
  %v281 = vpop.f32.mrf.mxu0
  %v282 = vadd.f32 %v63, %v281
  %v283 = vpop.f32.mrf.mxu0
  %284 = vmatprep.mubr.f32.mxu0 0.0
  %285 = vmatmul.mubr.f32.gmra.mxu0 %v78
  %v286 = vpop.f32.mrf.mxu0
  %v287 = vadd.f32 %v63, %v286
  %v288 = vpop.f32.mrf.mxu0
  %289 = vmatprep.mubr.f32.mxu0 0.0
  %290 = vmatmul.mubr.f32.gmra.mxu0 %v81
  %v291 = vpop.f32.mrf.mxu0
  %v292 = vadd.f32 %v63, %v291
  %v293 = vpop.f32.mrf.mxu0
  %294 = vmatprep.mubr.f32.mxu0 0.0
  %295 = vmatmul.mubr.f32.gmra.mxu0 %v84
  %v296 = vpop.f32.mrf.mxu0
  %v297 = vadd.f32 %v63, %v296
  %v298 = vpop.f32.mrf.mxu0
  %299 = vmatprep.mubr.f32.mxu0 0.0
  %300 = vmatmul.mubr.f32.gmra.mxu0 %v87
  %v301 = vpop.f32.mrf.mxu0
  %v302 = vadd.f32 %v63, %v301
  %v303 = vpop.f32.mrf.mxu0
  %304 = vmatprep.mubr.f32.mxu0 0.0
  %305 = vmatmul.mubr.f32.gmra.mxu0 %v90
  %v306 = vpop.f32.mrf.mxu0
  %v307 = vadd.f32 %v63, %v306
  %v308 = vpop.f32.mrf.mxu0
  %309 = vdwg.mxu0
  %310 = vst [vmem:[#allocation2] sm:$0xff] %v159
  %311 = vst [vmem:[#allocation2 + $0x8] sm:$0xff] %v161
  %312 = vst [vmem:[#allocation2 + $0x10] sm:$0xff] %v272
  %313 = vst [vmem:[#allocation2 + $0x18] sm:$0xff] %v165
  %314 = vst [vmem:[#allocation2 + $0x20] sm:$0xff] %v167
  %315 = vst [vmem:[#allocation2 + $0x28] sm:$0xff] %v277
  %316 = vst [vmem:[#allocation2 + $0x30] sm:$0xff] %v171
  %317 = vst [vmem:[#allocation2 + $0x38] sm:$0xff] %v173
  %318 = vst [vmem:[#allocation2 + $0x40] sm:$0xff] %v282
  %319 = vst [vmem:[#allocation2 + $0x48] sm:$0xff] %v177
  %320 = vst [vmem:[#allocation2 + $0x50] sm:$0xff] %v179
  %321 = vst [vmem:[#allocation2 + $0x58] sm:$0xff] %v287
  %322 = vst [vmem:[#allocation2 + $0x60] sm:$0xff] %v183
  %323 = vst [vmem:[#allocation2 + $0x68] sm:$0xff] %v185
  %324 = vst [vmem:[#allocation2 + $0x70] sm:$0xff] %v292
  %325 = vst [vmem:[#allocation2 + $0x78] sm:$0xff] %v189
  %326 = vst [vmem:[#allocation2 + $0x80] sm:$0xff] %v191
  %327 = vst [vmem:[#allocation2 + $0x88] sm:$0xff] %v297
  %328 = vst [vmem:[#allocation2 + $0x90] sm:$0xff] %v195
  %329 = vst [vmem:[#allocation2 + $0x98] sm:$0xff] %v197
  %330 = vst [vmem:[#allocation2 + $0xa0] sm:$0xff] %v302
  %331 = vst [vmem:[#allocation2 + $0xa8] sm:$0xff] %v201
  %332 = vst [vmem:[#allocation2 + $0xb0] sm:$0xff] %v203
  %333 = vst [vmem:[#allocation2 + $0xb8] sm:$0xff] %v307
  %v334 = vld [vmem:[%s3] sm:$0xff]
  %v335 = vld [vmem:[%s3 + $0x8] sm:$0xff]
  %v336 = vld [vmem:[%s3 + $0x10] sm:$0xff]
  %v337 = vld [vmem:[%s3 + $0x18] sm:$0xff]
  %v338 = vld [vmem:[%s3 + $0x20] sm:$0xff]
  %v339 = vld [vmem:[%s3 + $0x28] sm:$0xff]
  %v340 = vld [vmem:[%s3 + $0x30] sm:$0xff]
  %v341 = vld [vmem:[%s3 + $0x38] sm:$0xff]
  %v342 = vld [vmem:[%s3 + $0x40] sm:$0xff]
  %v343 = vld [vmem:[%s3 + $0x48] sm:$0xff]
  %v344 = vld [vmem:[%s3 + $0x50] sm:$0xff]
  %v345 = vld [vmem:[%s3 + $0x58] sm:$0xff]
  %v346 = vld [vmem:[%s3 + $0x60] sm:$0xff]
  %v347 = vld [vmem:[%s3 + $0x68] sm:$0xff]
  %v348 = vld [vmem:[%s3 + $0x70] sm:$0xff]
  %v349 = vld [vmem:[%s3 + $0x78] sm:$0xff]
  %v350 = vld [vmem:[%s3 + $0x80] sm:$0xff]
  %v351 = vld [vmem:[%s3 + $0x88] sm:$0xff]
  %v352 = vld [vmem:[%s3 + $0x90] sm:$0xff]
  %v353 = vld [vmem:[%s3 + $0x98] sm:$0xff]
  %v354 = vld [vmem:[%s3 + $0xa0] sm:$0xff]
  %v355 = vld [vmem:[%s3 + $0xa8] sm:$0xff]
  %v356 = vld [vmem:[%s3 + $0xb0] sm:$0xff]
  %v357 = vld [vmem:[%s3 + $0xb8] sm:$0xff]
  %v358 = vld [vmem:[%s3 + $0xc0] sm:$0xff]
  %v359 = vld [vmem:[%s3 + $0xc8] sm:$0xff]
  %v360 = vld [vmem:[%s3 + $0xd0] sm:$0xff]
  %v361 = vld [vmem:[%s3 + $0xd8] sm:$0xff]
  %v362 = vld [vmem:[%s3 + $0xe0] sm:$0xff]
  %v363 = vld [vmem:[%s3 + $0xe8] sm:$0xff]
  %v364 = vld [vmem:[%s3 + $0xf0] sm:$0xff]
  %v365 = vld [vmem:[%s3 + $0xf8] sm:$0xff]
  %v366 = vld [vmem:[%s3 + $0x100] sm:$0xff]
  %v367 = vld [vmem:[%s3 + $0x108] sm:$0xff]
  %v368 = vld [vmem:[%s3 + $0x110] sm:$0xff]
  %v369 = vld [vmem:[%s3 + $0x118] sm:$0xff]
  %v370 = vld [vmem:[%s3 + $0x120] sm:$0xff]
  %v371 = vld [vmem:[%s3 + $0x128] sm:$0xff]
  %v372 = vld [vmem:[%s3 + $0x130] sm:$0xff]
  %v373 = vld [vmem:[%s3 + $0x138] sm:$0xff]
  %v374 = vld [vmem:[%s3 + $0x140] sm:$0xff]
  %v375 = vld [vmem:[%s3 + $0x148] sm:$0xff]
  %v376 = vld [vmem:[%s3 + $0x150] sm:$0xff]
  %v377 = vld [vmem:[%s3 + $0x158] sm:$0xff]
  %v378 = vld [vmem:[%s3 + $0x160] sm:$0xff]
  %v379 = vld [vmem:[%s3 + $0x168] sm:$0xff]
  %v380 = vld [vmem:[%s3 + $0x170] sm:$0xff]
  %v381 = vld [vmem:[%s3 + $0x178] sm:$0xff]
  %v382 = vld [vmem:[%s6] sm:$0xff]
  %v383 = vld [vmem:[%s6 + $0x8] sm:$0xff]
  %v384 = vld [vmem:[%s6 + $0x10] sm:$0xff]
  %v385 = vld [vmem:[%s6 + $0x18] sm:$0xff]
  %v386 = vld [vmem:[%s6 + $0x20] sm:$0xff]
  %v387 = vld [vmem:[%s6 + $0x28] sm:$0xff]
  %v388 = vld [vmem:[%s6 + $0x30] sm:$0xff]
  %v389 = vld [vmem:[%s6 + $0x38] sm:$0xff]
  %v390 = vld [vmem:[%s6 + $0x40] sm:$0xff]
  %v391 = vld [vmem:[%s6 + $0x48] sm:$0xff]
  %v392 = vld [vmem:[%s6 + $0x50] sm:$0xff]
  %v393 = vld [vmem:[%s6 + $0x58] sm:$0xff]
  %v394 = vld [vmem:[%s6 + $0x60] sm:$0xff]
  %v395 = vld [vmem:[%s6 + $0x68] sm:$0xff]
  %v396 = vld [vmem:[%s6 + $0x70] sm:$0xff]
  %v397 = vld [vmem:[%s6 + $0x78] sm:$0xff]
  %v398 = vld [vmem:[%s6 + $0x80] sm:$0xff]
  %v399 = vld [vmem:[%s6 + $0x88] sm:$0xff]
  %v400 = vld [vmem:[%s6 + $0x90] sm:$0xff]
  %v401 = vld [vmem:[%s6 + $0x98] sm:$0xff]
  %v402 = vld [vmem:[%s6 + $0xa0] sm:$0xff]
  %v403 = vld [vmem:[%s6 + $0xa8] sm:$0xff]
  %v404 = vld [vmem:[%s6 + $0xb0] sm:$0xff]
  %v405 = vld [vmem:[%s6 + $0xb8] sm:$0xff]
  %v406 = vld [vmem:[%s6 + $0xc0] sm:$0xff]
  %v407 = vld [vmem:[%s6 + $0xc8] sm:$0xff]
  %v408 = vld [vmem:[%s6 + $0xd0] sm:$0xff]
  %v409 = vld [vmem:[%s6 + $0xd8] sm:$0xff]
  %v410 = vld [vmem:[%s6 + $0xe0] sm:$0xff]
  %v411 = vld [vmem:[%s6 + $0xe8] sm:$0xff]
  %v412 = vld [vmem:[%s6 + $0xf0] sm:$0xff]
  %v413 = vld [vmem:[%s6 + $0xf8] sm:$0xff]
  %v414 = vld [vmem:[%s6 + $0x100] sm:$0xff]
  %v415 = vld [vmem:[%s6 + $0x108] sm:$0xff]
  %v416 = vld [vmem:[%s6 + $0x110] sm:$0xff]
  %v417 = vld [vmem:[%s6 + $0x118] sm:$0xff]
  %v418 = vld [vmem:[%s6 + $0x120] sm:$0xff]
  %v419 = vld [vmem:[%s6 + $0x128] sm:$0xff]
  %v420 = vld [vmem:[%s6 + $0x130] sm:$0xff]
  %v421 = vld [vmem:[%s6 + $0x138] sm:$0xff]
  %v422 = vld [vmem:[%s6 + $0x140] sm:$0xff]
  %v423 = vld [vmem:[%s6 + $0x148] sm:$0xff]
  %v424 = vld [vmem:[%s6 + $0x150] sm:$0xff]
  %v425 = vld [vmem:[%s6 + $0x158] sm:$0xff]
  %v426 = vld [vmem:[%s6 + $0x160] sm:$0xff]
  %v427 = vld [vmem:[%s6 + $0x168] sm:$0xff]
  %v428 = vld [vmem:[%s6 + $0x170] sm:$0xff]
  %v429 = vld [vmem:[%s6 + $0x178] sm:$0xff]
  %v430 = vld [vmem:[%s6 + $0x180] sm:$0xff]
  %v431 = vld [vmem:[%s6 + $0x188] sm:$0xff]
  %v432 = vld [vmem:[%s6 + $0x190] sm:$0xff]
  %v433 = vld [vmem:[%s6 + $0x198] sm:$0xff]
  %v434 = vld [vmem:[%s6 + $0x1a0] sm:$0xff]
  %v435 = vld [vmem:[%s6 + $0x1a8] sm:$0xff]
  %v436 = vld [vmem:[%s6 + $0x1b0] sm:$0xff]
  %v437 = vld [vmem:[%s6 + $0x1b8] sm:$0xff]
  %v438 = vld [vmem:[%s6 + $0x1c0] sm:$0xff]
  %v439 = vld [vmem:[%s6 + $0x1c8] sm:$0xff]
  %v440 = vld [vmem:[%s6 + $0x1d0] sm:$0xff]
  %v441 = vld [vmem:[%s6 + $0x1d8] sm:$0xff]
  %v442 = vld [vmem:[%s6 + $0x1e0] sm:$0xff]
  %v443 = vld [vmem:[%s6 + $0x1e8] sm:$0xff]
  %v444 = vld [vmem:[%s6 + $0x1f0] sm:$0xff]
  %v445 = vld [vmem:[%s6 + $0x1f8] sm:$0xff]
  %v446 = vld [vmem:[%s6 + $0x200] sm:$0xff]
  %v447 = vld [vmem:[%s6 + $0x208] sm:$0xff]
  %v448 = vld [vmem:[%s6 + $0x210] sm:$0xff]
  %v449 = vld [vmem:[%s6 + $0x218] sm:$0xff]
  %v450 = vld [vmem:[%s6 + $0x220] sm:$0xff]
  %v451 = vld [vmem:[%s6 + $0x228] sm:$0xff]
  %v452 = vld [vmem:[%s6 + $0x230] sm:$0xff]
  %v453 = vld [vmem:[%s6 + $0x238] sm:$0xff]
  %v454 = vld [vmem:[%s6 + $0x240] sm:$0xff]
  %v455 = vld [vmem:[%s6 + $0x248] sm:$0xff]
  %v456 = vld [vmem:[%s6 + $0x250] sm:$0xff]
  %v457 = vld [vmem:[%s6 + $0x258] sm:$0xff]
  %v458 = vld [vmem:[%s6 + $0x260] sm:$0xff]
  %v459 = vld [vmem:[%s6 + $0x268] sm:$0xff]
  %v460 = vld [vmem:[%s6 + $0x270] sm:$0xff]
  %v461 = vld [vmem:[%s6 + $0x278] sm:$0xff]
  %v462 = vld [vmem:[%s6 + $0x280] sm:$0xff]
  %v463 = vld [vmem:[%s6 + $0x288] sm:$0xff]
  %v464 = vld [vmem:[%s6 + $0x290] sm:$0xff]
  %v465 = vld [vmem:[%s6 + $0x298] sm:$0xff]
  %v466 = vld [vmem:[%s6 + $0x2a0] sm:$0xff]
  %v467 = vld [vmem:[%s6 + $0x2a8] sm:$0xff]
  %v468 = vld [vmem:[%s6 + $0x2b0] sm:$0xff]
  %v469 = vld [vmem:[%s6 + $0x2b8] sm:$0xff]
  %v470 = vld [vmem:[%s6 + $0x2c0] sm:$0xff]
  %v471 = vld [vmem:[%s6 + $0x2c8] sm:$0xff]
  %v472 = vld [vmem:[%s6 + $0x2d0] sm:$0xff]
  %v473 = vld [vmem:[%s6 + $0x2d8] sm:$0xff]
  %v474 = vld [vmem:[%s6 + $0x2e0] sm:$0xff]
  %v475 = vld [vmem:[%s6 + $0x2e8] sm:$0xff]
  %v476 = vld [vmem:[%s6 + $0x2f0] sm:$0xff]
  %v477 = vld [vmem:[%s6 + $0x2f8] sm:$0xff]
  %v478 = vld [vmem:[%s6 + $0x300] sm:$0xff]
  %v479 = vld [vmem:[%s6 + $0x308] sm:$0xff]
  %v480 = vld [vmem:[%s6 + $0x310] sm:$0xff]
  %v481 = vld [vmem:[%s6 + $0x318] sm:$0xff]
  %v482 = vld [vmem:[%s6 + $0x320] sm:$0xff]
  %v483 = vld [vmem:[%s6 + $0x328] sm:$0xff]
  %v484 = vld [vmem:[%s6 + $0x330] sm:$0xff]
  %v485 = vld [vmem:[%s6 + $0x338] sm:$0xff]
  %v486 = vld [vmem:[%s6 + $0x340] sm:$0xff]
  %v487 = vld [vmem:[%s6 + $0x348] sm:$0xff]
  %v488 = vld [vmem:[%s6 + $0x350] sm:$0xff]
  %v489 = vld [vmem:[%s6 + $0x358] sm:$0xff]
  %v490 = vld [vmem:[%s6 + $0x360] sm:$0xff]
  %v491 = vld [vmem:[%s6 + $0x368] sm:$0xff]
  %v492 = vld [vmem:[%s6 + $0x370] sm:$0xff]
  %v493 = vld [vmem:[%s6 + $0x378] sm:$0xff]
  %v494 = vld [vmem:[%s6 + $0x380] sm:$0xff]
  %v495 = vld [vmem:[%s6 + $0x388] sm:$0xff]
  %v496 = vld [vmem:[%s6 + $0x390] sm:$0xff]
  %v497 = vld [vmem:[%s6 + $0x398] sm:$0xff]
  %v498 = vld [vmem:[%s6 + $0x3a0] sm:$0xff]
  %v499 = vld [vmem:[%s6 + $0x3a8] sm:$0xff]
  %v500 = vld [vmem:[%s6 + $0x3b0] sm:$0xff]
  %v501 = vld [vmem:[%s6 + $0x3b8] sm:$0xff]
  %v502 = vld [vmem:[%s6 + $0x3c0] sm:$0xff]
  %v503 = vld [vmem:[%s6 + $0x3c8] sm:$0xff]
  %v504 = vld [vmem:[%s6 + $0x3d0] sm:$0xff]
  %v505 = vld [vmem:[%s6 + $0x3d8] sm:$0xff]
  %v506 = vld [vmem:[%s6 + $0x3e0] sm:$0xff]
  %v507 = vld [vmem:[%s6 + $0x3e8] sm:$0xff]
  %v508 = vld [vmem:[%s6 + $0x3f0] sm:$0xff]
  %v509 = vld [vmem:[%s6 + $0x3f8] sm:$0xff]
  %v510 = vld [vmem:[%s7] sm:$0xf]
  %v512 = vlaneseq
  %v513 = vshrl.u32 %v512, 7
  %v514 = vsub.s32 0, %v513
  %v515 = vrot.slane %v510, %v514
  %v516 = vlaneseq
  %v517 = vshrl.u32 %v516, 7
  %v518 = vsub.s32 1, %v517
  %v519 = vrot.slane %v510, %v518
  %v520 = vlaneseq
  %v521 = vshrl.u32 %v520, 7
  %v522 = vsub.s32 2, %v521
  %v523 = vrot.slane %v510, %v522
  %v524 = vlaneseq
  %v525 = vshrl.u32 %v524, 7
  %v526 = vsub.s32 3, %v525
  %v527 = vrot.slane %v510, %v526
  %v532 = vld [vmem:[%s5] sm:$0x1]
  %v534 = vlaneseq
  %v535 = vshrl.u32 %v534, 7
  %v536 = vsub.s32 0, %v535
  %v537 = vrot.slane %v532, %v536
  %v539 = vld [vmem:[%s1] sm:$0xff]
  %s540 = scalar_lea.vmem %s1, 8
  %v541 = vld [vmem:[%s540] sm:$0xff]
  %s542 = smul.u32 0, 3
  %s543 = smul.addr %s542, 8
  %s544 = scalar_lea.vmem [#allocation2], %s543
  %v545 = vld [vmem:[%s544] sm:$0xff]
  %v546 = vld [vmem:[%s544 + $0x8] sm:$0xff]
  %v547 = vld [vmem:[%s544 + $0x10] sm:$0xff]
  %548 = vmatprep.subr.mxu0 %v380
  %549 = vmatpush1.msra.mxu0 %v379
  %550 = vmatprep.subr.mxu0 %v377
  %551 = vmatpush1.msra.mxu0 %v376
  %552 = vmatprep.subr.mxu0 %v374
  %553 = vmatpush1.msra.mxu0 %v373
  %554 = vmatprep.subr.mxu0 %v371
  %555 = vmatpush1.msra.mxu0 %v370
  %556 = vmatprep.subr.mxu0 %v368
  %557 = vmatpush1.msra.mxu0 %v367
  %558 = vmatprep.subr.mxu0 %v365
  %559 = vmatpush1.msra.mxu0 %v364
  %560 = vmatprep.subr.mxu0 %v362
  %561 = vmatpush1.msra.mxu0 %v361
  %562 = vmatprep.subr.mxu0 %v359
  %563 = vmatpush1.msra.mxu0 %v358
  %564 = vmatprep.subr.mxu0 %v356
  %565 = vmatpush1.msra.mxu0 %v355
  %566 = vmatprep.subr.mxu0 %v353
  %567 = vmatpush1.msra.mxu0 %v352
  %568 = vmatprep.subr.mxu0 %v350
  %569 = vmatpush1.msra.mxu0 %v349
  %570 = vmatprep.subr.mxu0 %v347
  %571 = vmatpush1.msra.mxu0 %v346
  %572 = vmatprep.subr.mxu0 %v344
  %573 = vmatpush1.msra.mxu0 %v343
  %574 = vmatprep.subr.mxu0 %v341
  %575 = vmatpush1.msra.mxu0 %v340
  %576 = vmatprep.subr.mxu0 %v338
  %577 = vmatpush1.msra.mxu0 %v337
  %578 = vmatprep.subr.mxu0 %v335
  %579 = vmatpush1.msra.mxu0 %v334
  %580 = vmatprep.subr.mxu0 0.0
  %581 = vmatpush2.msra.mxu0 0.0
  %582 = vmatprep.subr.mxu0 0.0
  %583 = vmatpush2.msra.mxu0 0.0
  %584 = vmatprep.subr.mxu0 0.0
  %585 = vmatpush2.msra.mxu0 0.0
  %586 = vmatprep.subr.mxu0 0.0
  %587 = vmatpush2.msra.mxu0 0.0
  %588 = vmatprep.subr.mxu0 0.0
  %589 = vmatpush2.msra.mxu0 0.0
  %590 = vmatprep.subr.mxu0 0.0
  %591 = vmatpush2.msra.mxu0 0.0
  %592 = vmatprep.subr.mxu0 0.0
  %593 = vmatpush2.msra.mxu0 0.0
  %594 = vmatprep.subr.mxu0 0.0
  %595 = vmatpush2.msra.mxu0 0.0
  %596 = vmatprep.subr.mxu0 0.0
  %597 = vmatpush2.msra.mxu0 0.0
  %598 = vmatprep.subr.mxu0 0.0
  %599 = vmatpush2.msra.mxu0 0.0
  %600 = vmatprep.subr.mxu0 0.0
  %601 = vmatpush2.msra.mxu0 0.0
  %602 = vmatprep.subr.mxu0 0.0
  %603 = vmatpush2.msra.mxu0 0.0
  %604 = vmatprep.subr.mxu0 0.0
  %605 = vmatpush2.msra.mxu0 0.0
  %606 = vmatprep.subr.mxu0 0.0
  %607 = vmatpush2.msra.mxu0 0.0
  %608 = vmatprep.subr.mxu0 0.0
  %609 = vmatpush2.msra.mxu0 0.0
  %610 = vmatprep.subr.mxu0 0.0
  %611 = vmatpush2.msra.mxu0 0.0
  %612 = vmatprep.mubr.f32.mxu0 0.0
  %613 = vmatmul.mubr.f32.gmra.mxu0 %v539
  %v614 = vpop.f32.mrf.mxu0
  %v615 = vadd.f32 0.0, %v614
  %v616 = vpop.f32.mrf.mxu0
  %v617 = vadd.f32 0.0, %v616
  %618 = vdwg.mxu0
  %619 = vmatprep.subr.mxu0 0.0
  %620 = vmatpush1.msra.mxu0 %v381
  %621 = vmatprep.subr.mxu0 0.0
  %622 = vmatpush1.msra.mxu0 %v378
  %623 = vmatprep.subr.mxu0 0.0
  %624 = vmatpush1.msra.mxu0 %v375
  %625 = vmatprep.subr.mxu0 0.0
  %626 = vmatpush1.msra.mxu0 %v372
  %627 = vmatprep.subr.mxu0 0.0
  %628 = vmatpush1.msra.mxu0 %v369
  %629 = vmatprep.subr.mxu0 0.0
  %630 = vmatpush1.msra.mxu0 %v366
  %631 = vmatprep.subr.mxu0 0.0
  %632 = vmatpush1.msra.mxu0 %v363
  %633 = vmatprep.subr.mxu0 0.0
  %634 = vmatpush1.msra.mxu0 %v360
  %635 = vmatprep.subr.mxu0 0.0
  %636 = vmatpush1.msra.mxu0 %v357
  %637 = vmatprep.subr.mxu0 0.0
  %638 = vmatpush1.msra.mxu0 %v354
  %639 = vmatprep.subr.mxu0 0.0
  %640 = vmatpush1.msra.mxu0 %v351
  %641 = vmatprep.subr.mxu0 0.0
  %642 = vmatpush1.msra.mxu0 %v348
  %643 = vmatprep.subr.mxu0 0.0
  %644 = vmatpush1.msra.mxu0 %v345
  %645 = vmatprep.subr.mxu0 0.0
  %646 = vmatpush1.msra.mxu0 %v342
  %647 = vmatprep.subr.mxu0 0.0
  %648 = vmatpush1.msra.mxu0 %v339
  %649 = vmatprep.subr.mxu0 0.0
  %650 = vmatpush1.msra.mxu0 %v336
  %651 = vmatprep.subr.mxu0 0.0
  %652 = vmatpush2.msra.mxu0 0.0
  %653 = vmatprep.subr.mxu0 0.0
  %654 = vmatpush2.msra.mxu0 0.0
  %655 = vmatprep.subr.mxu0 0.0
  %656 = vmatpush2.msra.mxu0 0.0
  %657 = vmatprep.subr.mxu0 0.0
  %658 = vmatpush2.msra.mxu0 0.0
  %659 = vmatprep.subr.mxu0 0.0
  %660 = vmatpush2.msra.mxu0 0.0
  %661 = vmatprep.subr.mxu0 0.0
  %662 = vmatpush2.msra.mxu0 0.0
  %663 = vmatprep.subr.mxu0 0.0
  %664 = vmatpush2.msra.mxu0 0.0
  %665 = vmatprep.subr.mxu0 0.0
  %666 = vmatpush2.msra.mxu0 0.0
  %667 = vmatprep.subr.mxu0 0.0
  %668 = vmatpush2.msra.mxu0 0.0
  %669 = vmatprep.subr.mxu0 0.0
  %670 = vmatpush2.msra.mxu0 0.0
  %671 = vmatprep.subr.mxu0 0.0
  %672 = vmatpush2.msra.mxu0 0.0
  %673 = vmatprep.subr.mxu0 0.0
  %674 = vmatpush2.msra.mxu0 0.0
  %675 = vmatprep.subr.mxu0 0.0
  %676 = vmatpush2.msra.mxu0 0.0
  %677 = vmatprep.subr.mxu0 0.0
  %678 = vmatpush2.msra.mxu0 0.0
  %679 = vmatprep.subr.mxu0 0.0
  %680 = vmatpush2.msra.mxu0 0.0
  %681 = vmatprep.subr.mxu0 0.0
  %682 = vmatpush2.msra.mxu0 0.0
  %683 = vmatprep.mubr.f32.mxu0 0.0
  %684 = vmatmul.mubr.f32.gmra.mxu0 %v539
  %v685 = vpop.f32.mrf.mxu0
  %v686 = vadd.f32 0.0, %v685
  %v687 = vpop.f32.mrf.mxu0
  %688 = vdwg.mxu0
  %v689 = vadd.f32 %v545, %v615
  %v690 = vxor.u32 %v689, 2147483648
  %v691 = vmul.f32 %v690, 1.442695
  %v692 = vpow.pop %v691
  %v693 = vadd.f32 %v692, 1.0
  %v694 = vrcp.pop %v693
  %v695 = vmul.f32 1.0, %v694
  %v696 = vadd.f32 %v546, %v617
  %v697 = vxor.u32 %v696, 2147483648
  %v698 = vmul.f32 %v697, 1.442695
  %v699 = vpow.pop %v698
  %v700 = vadd.f32 %v699, 1.0
  %v701 = vrcp.pop %v700
  %v702 = vmul.f32 1.0, %v701
  %v703 = vadd.f32 %v686, %v537
  %v704 = vmul.f32 %v695, %v703
  %v705 = vadd.f32 %v547, %v704
  %v706 = vtanh.pop %v705
  %v707 = vsub.f32 1.0, %v702
  %v708 = vmul.f32 %v707, %v706
  %v709 = vmul.f32 %v702, %v539
  %v710 = vadd.f32 %v708, %v709
  %711 = vmatprep.subr.mxu0 %v443
  %712 = vmatpush1.msra.mxu0 %v442
  %713 = vmatprep.subr.mxu0 %v439
  %714 = vmatpush1.msra.mxu0 %v438
  %715 = vmatprep.subr.mxu0 %v435
  %716 = vmatpush1.msra.mxu0 %v434
  %717 = vmatprep.subr.mxu0 %v431
  %718 = vmatpush1.msra.mxu0 %v430
  %719 = vmatprep.subr.mxu0 %v427
  %720 = vmatpush1.msra.mxu0 %v426
  %721 = vmatprep.subr.mxu0 %v423
  %722 = vmatpush1.msra.mxu0 %v422
  %723 = vmatprep.subr.mxu0 %v419
  %724 = vmatpush1.msra.mxu0 %v418
  %725 = vmatprep.subr.mxu0 %v415
  %726 = vmatpush1.msra.mxu0 %v414
  %727 = vmatprep.subr.mxu0 %v411
  %728 = vmatpush1.msra.mxu0 %v410
  %729 = vmatprep.subr.mxu0 %v407
  %730 = vmatpush1.msra.mxu0 %v406
  %731 = vmatprep.subr.mxu0 %v403
  %732 = vmatpush1.msra.mxu0 %v402
  %733 = vmatprep.subr.mxu0 %v399
  %734 = vmatpush1.msra.mxu0 %v398
  %735 = vmatprep.subr.mxu0 %v395
  %736 = vmatpush1.msra.mxu0 %v394
  %737 = vmatprep.subr.mxu0 %v391
  %738 = vmatpush1.msra.mxu0 %v390
  %739 = vmatprep.subr.mxu0 %v387
  %740 = vmatpush1.msra.mxu0 %v386
  %741 = vmatprep.subr.mxu0 %v383
  %742 = vmatpush1.msra.mxu0 %v382
  %743 = vmatprep.subr.mxu0 %v507
  %744 = vmatpush2.msra.mxu0 %v506
  %745 = vmatprep.subr.mxu0 %v503
  %746 = vmatpush2.msra.mxu0 %v502
  %747 = vmatprep.subr.mxu0 %v499
  %748 = vmatpush2.msra.mxu0 %v498
  %749 = vmatprep.subr.mxu0 %v495
  %750 = vmatpush2.msra.mxu0 %v494
  %751 = vmatprep.subr.mxu0 %v491
  %752 = vmatpush2.msra.mxu0 %v490
  %753 = vmatprep.subr.mxu0 %v487
  %754 = vmatpush2.msra.mxu0 %v486
  %755 = vmatprep.subr.mxu0 %v483
  %756 = vmatpush2.msra.mxu0 %v482
  %757 = vmatprep.subr.mxu0 %v479
  %758 = vmatpush2.msra.mxu0 %v478
  %759 = vmatprep.subr.mxu0 %v475
  %760 = vmatpush2.msra.mxu0 %v474
  %761 = vmatprep.subr.mxu0 %v471
  %762 = vmatpush2.msra.mxu0 %v470
  %763 = vmatprep.subr.mxu0 %v467
  %764 = vmatpush2.msra.mxu0 %v466
  %765 = vmatprep.subr.mxu0 %v463
  %766 = vmatpush2.msra.mxu0 %v462
  %767 = vmatprep.subr.mxu0 %v459
  %768 = vmatpush2.msra.mxu0 %v458
  %769 = vmatprep.subr.mxu0 %v455
  %770 = vmatpush2.msra.mxu0 %v454
  %771 = vmatprep.subr.mxu0 %v451
  %772 = vmatpush2.msra.mxu0 %v450
  %773 = vmatprep.subr.mxu0 %v447
  %774 = vmatpush2.msra.mxu0 %v446
  %775 = vmatprep.mubr.f32.mxu0 %v541
  %776 = vmatmul.mubr.f32.gmra.mxu0 %v710
  %v777 = vpop.f32.mrf.mxu0
  %v778 = vadd.f32 %v515, %v777
  %v779 = vpop.f32.mrf.mxu0
  %v780 = vadd.f32 %v519, %v779
  %781 = vdwg.mxu0
  %782 = vmatprep.subr.mxu0 %v445
  %783 = vmatpush1.msra.mxu0 %v444
  %784 = vmatprep.subr.mxu0 %v441
  %785 = vmatpush1.msra.mxu0 %v440
  %786 = vmatprep.subr.mxu0 %v437
  %787 = vmatpush1.msra.mxu0 %v436
  %788 = vmatprep.subr.mxu0 %v433
  %789 = vmatpush1.msra.mxu0 %v432
  %790 = vmatprep.subr.mxu0 %v429
  %791 = vmatpush1.msra.mxu0 %v428
  %792 = vmatprep.subr.mxu0 %v425
  %793 = vmatpush1.msra.mxu0 %v424
  %794 = vmatprep.subr.mxu0 %v421
  %795 = vmatpush1.msra.mxu0 %v420
  %796 = vmatprep.subr.mxu0 %v417
  %797 = vmatpush1.msra.mxu0 %v416
  %798 = vmatprep.subr.mxu0 %v413
  %799 = vmatpush1.msra.mxu0 %v412
  %800 = vmatprep.subr.mxu0 %v409
  %801 = vmatpush1.msra.mxu0 %v408
  %802 = vmatprep.subr.mxu0 %v405
  %803 = vmatpush1.msra.mxu0 %v404
  %804 = vmatprep.subr.mxu0 %v401
  %805 = vmatpush1.msra.mxu0 %v400
  %806 = vmatprep.subr.mxu0 %v397
  %807 = vmatpush1.msra.mxu0 %v396
  %808 = vmatprep.subr.mxu0 %v393
  %809 = vmatpush1.msra.mxu0 %v392
  %810 = vmatprep.subr.mxu0 %v389
  %811 = vmatpush1.msra.mxu0 %v388
  %812 = vmatprep.subr.mxu0 %v385
  %813 = vmatpush1.msra.mxu0 %v384
  %814 = vmatprep.subr.mxu0 %v509
  %815 = vmatpush2.msra.mxu0 %v508
  %816 = vmatprep.subr.mxu0 %v505
  %817 = vmatpush2.msra.mxu0 %v504
  %818 = vmatprep.subr.mxu0 %v501
  %819 = vmatpush2.msra.mxu0 %v500
  %820 = vmatprep.subr.mxu0 %v497
  %821 = vmatpush2.msra.mxu0 %v496
  %822 = vmatprep.subr.mxu0 %v493
  %823 = vmatpush2.msra.mxu0 %v492
  %824 = vmatprep.subr.mxu0 %v489
  %825 = vmatpush2.msra.mxu0 %v488
  %826 = vmatprep.subr.mxu0 %v485
  %827 = vmatpush2.msra.mxu0 %v484
  %828 = vmatprep.subr.mxu0 %v481
  %829 = vmatpush2.msra.mxu0 %v480
  %830 = vmatprep.subr.mxu0 %v477
  %831 = vmatpush2.msra.mxu0 %v476
  %832 = vmatprep.subr.mxu0 %v473
  %833 = vmatpush2.msra.mxu0 %v472
  %834 = vmatprep.subr.mxu0 %v469
  %835 = vmatpush2.msra.mxu0 %v468
  %836 = vmatprep.subr.mxu0 %v465
  %837 = vmatpush2.msra.mxu0 %v464
  %838 = vmatprep.subr.mxu0 %v461
  %839 = vmatpush2.msra.mxu0 %v460
  %840 = vmatprep.subr.mxu0 %v457
  %841 = vmatpush2.msra.mxu0 %v456
  %842 = vmatprep.subr.mxu0 %v453
  %843 = vmatpush2.msra.mxu0 %v452
  %844 = vmatprep.subr.mxu0 %v449
  %845 = vmatpush2.msra.mxu0 %v448
  %846 = vmatprep.mubr.f32.mxu0 %v541
  %847 = vmatmul.mubr.f32.gmra.mxu0 %v710
  %v848 = vpop.f32.mrf.mxu0
  %v849 = vadd.f32 %v523, %v848
  %v850 = vpop.f32.mrf.mxu0
  %v851 = vadd.f32 %v527, %v850
  %852 = vdwg.mxu0
  %v853 = vxor.u32 %v778, 2147483648
  %v854 = vmul.f32 %v853, 1.442695
  %v855 = vpow.pop %v854
  %v856 = vadd.f32 %v855, 1.0
  %v857 = vrcp.pop %v856
  %v858 = vmul.f32 1.0, %v857
  %v859 = vxor.u32 %v780, 2147483648
  %v860 = vmul.f32 %v859, 1.442695
  %v861 = vpow.pop %v860
  %v862 = vadd.f32 %v861, 1.0
  %v863 = vrcp.pop %v862
  %v864 = vmul.f32 1.0, %v863
  %v865 = vmul.f32 %v858, %v851
  %v866 = vadd.f32 %v849, %v865
  %v867 = vtanh.pop %v866
  %v868 = vsub.f32 1.0, %v864
  %v869 = vmul.f32 %v868, %v867
  %v870 = vmul.f32 %v864, %v541
  %v871 = vadd.f32 %v869, %v870
  %s872 = smul.u32 1, 3
  %s873 = smul.addr %s872, 8
  %s874 = scalar_lea.vmem [#allocation2], %s873
  %v875 = vld [vmem:[%s874] sm:$0xff]
  %v876 = vld [vmem:[%s874 + $0x8] sm:$0xff]
  %v877 = vld [vmem:[%s874 + $0x10] sm:$0xff]
  %878 = vmatprep.subr.mxu0 %v380
  %879 = vmatpush1.msra.mxu0 %v379
  %880 = vmatprep.subr.mxu0 %v377
  %881 = vmatpush1.msra.mxu0 %v376
  %882 = vmatprep.subr.mxu0 %v374
  %883 = vmatpush1.msra.mxu0 %v373
  %884 = vmatprep.subr.mxu0 %v371
  %885 = vmatpush1.msra.mxu0 %v370
  %886 = vmatprep.subr.mxu0 %v368
  %887 = vmatpush1.msra.mxu0 %v367
  %888 = vmatprep.subr.mxu0 %v365
  %889 = vmatpush1.msra.mxu0 %v364
  %890 = vmatprep.subr.mxu0 %v362
  %891 = vmatpush1.msra.mxu0 %v361
  %892 = vmatprep.subr.mxu0 %v359
  %893 = vmatpush1.msra.mxu0 %v358
  %894 = vmatprep.subr.mxu0 %v356
  %895 = vmatpush1.msra.mxu0 %v355
  %896 = vmatprep.subr.mxu0 %v353
  %897 = vmatpush1.msra.mxu0 %v352
  %898 = vmatprep.subr.mxu0 %v350
  %899 = vmatpush1.msra.mxu0 %v349
  %900 = vmatprep.subr.mxu0 %v347
  %901 = vmatpush1.msra.mxu0 %v346
  %902 = vmatprep.subr.mxu0 %v344
  %903 = vmatpush1.msra.mxu0 %v343
  %904 = vmatprep.subr.mxu0 %v341
  %905 = vmatpush1.msra.mxu0 %v340
  %906 = vmatprep.subr.mxu0 %v338
  %907 = vmatpush1.msra.mxu0 %v337
  %908 = vmatprep.subr.mxu0 %v335
  %909 = vmatpush1.msra.mxu0 %v334
  %910 = vmatprep.subr.mxu0 0.0
  %911 = vmatpush2.msra.mxu0 0.0
  %912 = vmatprep.subr.mxu0 0.0
  %913 = vmatpush2.msra.mxu0 0.0
  %914 = vmatprep.subr.mxu0 0.0
  %915 = vmatpush2.msra.mxu0 0.0
  %916 = vmatprep.subr.mxu0 0.0
  %917 = vmatpush2.msra.mxu0 0.0
  %918 = vmatprep.subr.mxu0 0.0
  %919 = vmatpush2.msra.mxu0 0.0
  %920 = vmatprep.subr.mxu0 0.0
  %921 = vmatpush2.msra.mxu0 0.0
  %922 = vmatprep.subr.mxu0 0.0
  %923 = vmatpush2.msra.mxu0 0.0
  %924 = vmatprep.subr.mxu0 0.0
  %925 = vmatpush2.msra.mxu0 0.0
  %926 = vmatprep.subr.mxu0 0.0
  %927 = vmatpush2.msra.mxu0 0.0
  %928 = vmatprep.subr.mxu0 0.0
  %929 = vmatpush2.msra.mxu0 0.0
  %930 = vmatprep.subr.mxu0 0.0
  %931 = vmatpush2.msra.mxu0 0.0
  %932 = vmatprep.subr.mxu0 0.0
  %933 = vmatpush2.msra.mxu0 0.0
  %934 = vmatprep.subr.mxu0 0.0
  %935 = vmatpush2.msra.mxu0 0.0
  %936 = vmatprep.subr.mxu0 0.0
  %937 = vmatpush2.msra.mxu0 0.0
  %938 = vmatprep.subr.mxu0 0.0
  %939 = vmatpush2.msra.mxu0 0.0
  %940 = vmatprep.subr.mxu0 0.0
  %941 = vmatpush2.msra.mxu0 0.0
  %942 = vmatprep.mubr.f32.mxu0 0.0
  %943 = vmatmul.mubr.f32.gmra.mxu0 %v710
  %v944 = vpop.f32.mrf.mxu0
  %v945 = vadd.f32 0.0, %v944
  %v946 = vpop.f32.mrf.mxu0
  %v947 = vadd.f32 0.0, %v946
  %948 = vdwg.mxu0
  %949 = vmatprep.subr.mxu0 0.0
  %950 = vmatpush1.msra.mxu0 %v381
  %951 = vmatprep.subr.mxu0 0.0
  %952 = vmatpush1.msra.mxu0 %v378
  %953 = vmatprep.subr.mxu0 0.0
  %954 = vmatpush1.msra.mxu0 %v375
  %955 = vmatprep.subr.mxu0 0.0
  %956 = vmatpush1.msra.mxu0 %v372
  %957 = vmatprep.subr.mxu0 0.0
  %958 = vmatpush1.msra.mxu0 %v369
  %959 = vmatprep.subr.mxu0 0.0
  %960 = vmatpush1.msra.mxu0 %v366
  %961 = vmatprep.subr.mxu0 0.0
  %962 = vmatpush1.msra.mxu0 %v363
  %963 = vmatprep.subr.mxu0 0.0
  %964 = vmatpush1.msra.mxu0 %v360
  %965 = vmatprep.subr.mxu0 0.0
  %966 = vmatpush1.msra.mxu0 %v357
  %967 = vmatprep.subr.mxu0 0.0
  %968 = vmatpush1.msra.mxu0 %v354
  %969 = vmatprep.subr.mxu0 0.0
  %970 = vmatpush1.msra.mxu0 %v351
  %971 = vmatprep.subr.mxu0 0.0
  %972 = vmatpush1.msra.mxu0 %v348
  %973 = vmatprep.subr.mxu0 0.0
  %974 = vmatpush1.msra.mxu0 %v345
  %975 = vmatprep.subr.mxu0 0.0
  %976 = vmatpush1.msra.mxu0 %v342
  %977 = vmatprep.subr.mxu0 0.0
  %978 = vmatpush1.msra.mxu0 %v339
  %979 = vmatprep.subr.mxu0 0.0
  %980 = vmatpush1.msra.mxu0 %v336
  %981 = vmatprep.subr.mxu0 0.0
  %982 = vmatpush2.msra.mxu0 0.0
  %983 = vmatprep.subr.mxu0 0.0
  %984 = vmatpush2.msra.mxu0 0.0
  %985 = vmatprep.subr.mxu0 0.0
  %986 = vmatpush2.msra.mxu0 0.0
  %987 = vmatprep.subr.mxu0 0.0
  %988 = vmatpush2.msra.mxu0 0.0
  %989 = vmatprep.subr.mxu0 0.0
  %990 = vmatpush2.msra.mxu0 0.0
  %991 = vmatprep.subr.mxu0 0.0
  %992 = vmatpush2.msra.mxu0 0.0
  %993 = vmatprep.subr.mxu0 0.0
  %994 = vmatpush2.msra.mxu0 0.0
  %995 = vmatprep.subr.mxu0 0.0
  %996 = vmatpush2.msra.mxu0 0.0
  %997 = vmatprep.subr.mxu0 0.0
  %998 = vmatpush2.msra.mxu0 0.0
  %999 = vmatprep.subr.mxu0 0.0
  %1000 = vmatpush2.msra.mxu0 0.0
  %1001 = vmatprep.subr.mxu0 0.0
  %1002 = vmatpush2.msra.mxu0 0.0
  %1003 = vmatprep.subr.mxu0 0.0
  %1004 = vmatpush2.msra.mxu0 0.0
  %1005 = vmatprep.subr.mxu0 0.0
  %1006 = vmatpush2.msra.mxu0 0.0
  %1007 = vmatprep.subr.mxu0 0.0
  %1008 = vmatpush2.msra.mxu0 0.0
  %1009 = vmatprep.subr.mxu0 0.0
  %1010 = vmatpush2.msra.mxu0 0.0
  %1011 = vmatprep.subr.mxu0 0.0
  %1012 = vmatpush2.msra.mxu0 0.0
  %1013 = vmatprep.mubr.f32.mxu0 0.0
  %1014 = vmatmul.mubr.f32.gmra.mxu0 %v710
  %v1015 = vpop.f32.mrf.mxu0
  %v1016 = vadd.f32 0.0, %v1015
  %v1017 = vpop.f32.mrf.mxu0
  %1018 = vdwg.mxu0
  %v1019 = vadd.f32 %v875, %v945
  %v1020 = vxor.u32 %v1019, 2147483648
  %v1021 = vmul.f32 %v1020, 1.442695
  %v1022 = vpow.pop %v1021
  %v1023 = vadd.f32 %v1022, 1.0
  %v1024 = vrcp.pop %v1023
  %v1025 = vmul.f32 1.0, %v1024
  %v1026 = vadd.f32 %v876, %v947
  %v1027 = vxor.u32 %v1026, 2147483648
  %v1028 = vmul.f32 %v1027, 1.442695
  %v1029 = vpow.pop %v1028
  %v1030 = vadd.f32 %v1029, 1.0
  %v1031 = vrcp.pop %v1030
  %v1032 = vmul.f32 1.0, %v1031
  %v1033 = vadd.f32 %v1016, %v537
  %v1034 = vmul.f32 %v1025, %v1033
  %v1035 = vadd.f32 %v877, %v1034
  %v1036 = vtanh.pop %v1035
  %v1037 = vsub.f32 1.0, %v1032
  %v1038 = vmul.f32 %v1037, %v1036
  %v1039 = vmul.f32 %v1032, %v710
  %v1040 = vadd.f32 %v1038, %v1039
  %1041 = vmatprep.subr.mxu0 %v443
  %1042 = vmatpush1.msra.mxu0 %v442
  %1043 = vmatprep.subr.mxu0 %v439
  %1044 = vmatpush1.msra.mxu0 %v438
  %1045 = vmatprep.subr.mxu0 %v435
  %1046 = vmatpush1.msra.mxu0 %v434
  %1047 = vmatprep.subr.mxu0 %v431
  %1048 = vmatpush1.msra.mxu0 %v430
  %1049 = vmatprep.subr.mxu0 %v427
  %1050 = vmatpush1.msra.mxu0 %v426
  %1051 = vmatprep.subr.mxu0 %v423
  %1052 = vmatpush1.msra.mxu0 %v422
  %1053 = vmatprep.subr.mxu0 %v419
  %1054 = vmatpush1.msra.mxu0 %v418
  %1055 = vmatprep.subr.mxu0 %v415
  %1056 = vmatpush1.msra.mxu0 %v414
  %1057 = vmatprep.subr.mxu0 %v411
  %1058 = vmatpush1.msra.mxu0 %v410
  %1059 = vmatprep.subr.mxu0 %v407
  %1060 = vmatpush1.msra.mxu0 %v406
  %1061 = vmatprep.subr.mxu0 %v403
  %1062 = vmatpush1.msra.mxu0 %v402
  %1063 = vmatprep.subr.mxu0 %v399
  %1064 = vmatpush1.msra.mxu0 %v398
  %1065 = vmatprep.subr.mxu0 %v395
  %1066 = vmatpush1.msra.mxu0 %v394
  %1067 = vmatprep.subr.mxu0 %v391
  %1068 = vmatpush1.msra.mxu0 %v390
  %1069 = vmatprep.subr.mxu0 %v387
  %1070 = vmatpush1.msra.mxu0 %v386
  %1071 = vmatprep.subr.mxu0 %v383
  %1072 = vmatpush1.msra.mxu0 %v382
  %1073 = vmatprep.subr.mxu0 %v507
  %1074 = vmatpush2.msra.mxu0 %v506
  %1075 = vmatprep.subr.mxu0 %v503
  %1076 = vmatpush2.msra.mxu0 %v502
  %1077 = vmatprep.subr.mxu0 %v499
  %1078 = vmatpush2.msra.mxu0 %v498
  %1079 = vmatprep.subr.mxu0 %v495
  %1080 = vmatpush2.msra.mxu0 %v494
  %1081 = vmatprep.subr.mxu0 %v491
  %1082 = vmatpush2.msra.mxu0 %v490
  %1083 = vmatprep.subr.mxu0 %v487
  %1084 = vmatpush2.msra.mxu0 %v486
  %1085 = vmatprep.subr.mxu0 %v483
  %1086 = vmatpush2.msra.mxu0 %v482
  %1087 = vmatprep.subr.mxu0 %v479
  %1088 = vmatpush2.msra.mxu0 %v478
  %1089 = vmatprep.subr.mxu0 %v475
  %1090 = vmatpush2.msra.mxu0 %v474
  %1091 = vmatprep.subr.mxu0 %v471
  %1092 = vmatpush2.msra.mxu0 %v470
  %1093 = vmatprep.subr.mxu0 %v467
  %1094 = vmatpush2.msra.mxu0 %v466
  %1095 = vmatprep.subr.mxu0 %v463
  %1096 = vmatpush2.msra.mxu0 %v462
  %1097 = vmatprep.subr.mxu0 %v459
  %1098 = vmatpush2.msra.mxu0 %v458
  %1099 = vmatprep.subr.mxu0 %v455
  %1100 = vmatpush2.msra.mxu0 %v454
  %1101 = vmatprep.subr.mxu0 %v451
  %1102 = vmatpush2.msra.mxu0 %v450
  %1103 = vmatprep.subr.mxu0 %v447
  %1104 = vmatpush2.msra.mxu0 %v446
  %1105 = vmatprep.mubr.f32.mxu0 %v871
  %1106 = vmatmul.mubr.f32.gmra.mxu0 %v1040
  %v1107 = vpop.f32.mrf.mxu0
  %v1108 = vadd.f32 %v515, %v1107
  %v1109 = vpop.f32.mrf.mxu0
  %v1110 = vadd.f32 %v519, %v1109
  %1111 = vdwg.mxu0
  %1112 = vmatprep.subr.mxu0 %v445
  %1113 = vmatpush1.msra.mxu0 %v444
  %1114 = vmatprep.subr.mxu0 %v441
  %1115 = vmatpush1.msra.mxu0 %v440
  %1116 = vmatprep.subr.mxu0 %v437
  %1117 = vmatpush1.msra.mxu0 %v436
  %1118 = vmatprep.subr.mxu0 %v433
  %1119 = vmatpush1.msra.mxu0 %v432
  %1120 = vmatprep.subr.mxu0 %v429
  %1121 = vmatpush1.msra.mxu0 %v428
  %1122 = vmatprep.subr.mxu0 %v425
  %1123 = vmatpush1.msra.mxu0 %v424
  %1124 = vmatprep.subr.mxu0 %v421
  %1125 = vmatpush1.msra.mxu0 %v420
  %1126 = vmatprep.subr.mxu0 %v417
  %1127 = vmatpush1.msra.mxu0 %v416
  %1128 = vmatprep.subr.mxu0 %v413
  %1129 = vmatpush1.msra.mxu0 %v412
  %1130 = vmatprep.subr.mxu0 %v409
  %1131 = vmatpush1.msra.mxu0 %v408
  %1132 = vmatprep.subr.mxu0 %v405
  %1133 = vmatpush1.msra.mxu0 %v404
  %1134 = vmatprep.subr.mxu0 %v401
  %1135 = vmatpush1.msra.mxu0 %v400
  %1136 = vmatprep.subr.mxu0 %v397
  %1137 = vmatpush1.msra.mxu0 %v396
  %1138 = vmatprep.subr.mxu0 %v393
  %1139 = vmatpush1.msra.mxu0 %v392
  %1140 = vmatprep.subr.mxu0 %v389
  %1141 = vmatpush1.msra.mxu0 %v388
  %1142 = vmatprep.subr.mxu0 %v385
  %1143 = vmatpush1.msra.mxu0 %v384
  %1144 = vmatprep.subr.mxu0 %v509
  %1145 = vmatpush2.msra.mxu0 %v508
  %1146 = vmatprep.subr.mxu0 %v505
  %1147 = vmatpush2.msra.mxu0 %v504
  %1148 = vmatprep.subr.mxu0 %v501
  %1149 = vmatpush2.msra.mxu0 %v500
  %1150 = vmatprep.subr.mxu0 %v497
  %1151 = vmatpush2.msra.mxu0 %v496
  %1152 = vmatprep.subr.mxu0 %v493
  %1153 = vmatpush2.msra.mxu0 %v492
  %1154 = vmatprep.subr.mxu0 %v489
  %1155 = vmatpush2.msra.mxu0 %v488
  %1156 = vmatprep.subr.mxu0 %v485
  %1157 = vmatpush2.msra.mxu0 %v484
  %1158 = vmatprep.subr.mxu0 %v481
  %1159 = vmatpush2.msra.mxu0 %v480
  %1160 = vmatprep.subr.mxu0 %v477
  %1161 = vmatpush2.msra.mxu0 %v476
  %1162 = vmatprep.subr.mxu0 %v473
  %1163 = vmatpush2.msra.mxu0 %v472
  %1164 = vmatprep.subr.mxu0 %v469
  %1165 = vmatpush2.msra.mxu0 %v468
  %1166 = vmatprep.subr.mxu0 %v465
  %1167 = vmatpush2.msra.mxu0 %v464
  %1168 = vmatprep.subr.mxu0 %v461
  %1169 = vmatpush2.msra.mxu0 %v460
  %1170 = vmatprep.subr.mxu0 %v457
  %1171 = vmatpush2.msra.mxu0 %v456
  %1172 = vmatprep.subr.mxu0 %v453
  %1173 = vmatpush2.msra.mxu0 %v452
  %1174 = vmatprep.subr.mxu0 %v449
  %1175 = vmatpush2.msra.mxu0 %v448
  %1176 = vmatprep.mubr.f32.mxu0 %v871
  %1177 = vmatmul.mubr.f32.gmra.mxu0 %v1040
  %v1178 = vpop.f32.mrf.mxu0
  %v1179 = vadd.f32 %v523, %v1178
  %v1180 = vpop.f32.mrf.mxu0
  %v1181 = vadd.f32 %v527, %v1180
  %1182 = vdwg.mxu0
  %v1183 = vxor.u32 %v1108, 2147483648
  %v1184 = vmul.f32 %v1183, 1.442695
  %v1185 = vpow.pop %v1184
  %v1186 = vadd.f32 %v1185, 1.0
  %v1187 = vrcp.pop %v1186
  %v1188 = vmul.f32 1.0, %v1187
  %v1189 = vxor.u32 %v1110, 2147483648
  %v1190 = vmul.f32 %v1189, 1.442695
  %v1191 = vpow.pop %v1190
  %v1192 = vadd.f32 %v1191, 1.0
  %v1193 = vrcp.pop %v1192
  %v1194 = vmul.f32 1.0, %v1193
  %v1195 = vmul.f32 %v1188, %v1181
  %v1196 = vadd.f32 %v1179, %v1195
  %v1197 = vtanh.pop %v1196
  %v1198 = vsub.f32 1.0, %v1194
  %v1199 = vmul.f32 %v1198, %v1197
  %v1200 = vmul.f32 %v1194, %v871
  %v1201 = vadd.f32 %v1199, %v1200
  %s1202 = smul.u32 2, 3
  %s1203 = smul.addr %s1202, 8
  %s1204 = scalar_lea.vmem [#allocation2], %s1203
  %v1205 = vld [vmem:[%s1204] sm:$0xff]
  %v1206 = vld [vmem:[%s1204 + $0x8] sm:$0xff]
  %v1207 = vld [vmem:[%s1204 + $0x10] sm:$0xff]
  %1208 = vmatprep.subr.mxu0 %v380
  %1209 = vmatpush1.msra.mxu0 %v379
  %1210 = vmatprep.subr.mxu0 %v377
  %1211 = vmatpush1.msra.mxu0 %v376
  %1212 = vmatprep.subr.mxu0 %v374
  %1213 = vmatpush1.msra.mxu0 %v373
  %1214 = vmatprep.subr.mxu0 %v371
  %1215 = vmatpush1.msra.mxu0 %v370
  %1216 = vmatprep.subr.mxu0 %v368
  %1217 = vmatpush1.msra.mxu0 %v367
  %1218 = vmatprep.subr.mxu0 %v365
  %1219 = vmatpush1.msra.mxu0 %v364
  %1220 = vmatprep.subr.mxu0 %v362
  %1221 = vmatpush1.msra.mxu0 %v361
  %1222 = vmatprep.subr.mxu0 %v359
  %1223 = vmatpush1.msra.mxu0 %v358
  %1224 = vmatprep.subr.mxu0 %v356
  %1225 = vmatpush1.msra.mxu0 %v355
  %1226 = vmatprep.subr.mxu0 %v353
  %1227 = vmatpush1.msra.mxu0 %v352
  %1228 = vmatprep.subr.mxu0 %v350
  %1229 = vmatpush1.msra.mxu0 %v349
  %1230 = vmatprep.subr.mxu0 %v347
  %1231 = vmatpush1.msra.mxu0 %v346
  %1232 = vmatprep.subr.mxu0 %v344
  %1233 = vmatpush1.msra.mxu0 %v343
  %1234 = vmatprep.subr.mxu0 %v341
  %1235 = vmatpush1.msra.mxu0 %v340
  %1236 = vmatprep.subr.mxu0 %v338
  %1237 = vmatpush1.msra.mxu0 %v337
  %1238 = vmatprep.subr.mxu0 %v335
  %1239 = vmatpush1.msra.mxu0 %v334
  %1240 = vmatprep.subr.mxu0 0.0
  %1241 = vmatpush2.msra.mxu0 0.0
  %1242 = vmatprep.subr.mxu0 0.0
  %1243 = vmatpush2.msra.mxu0 0.0
  %1244 = vmatprep.subr.mxu0 0.0
  %1245 = vmatpush2.msra.mxu0 0.0
  %1246 = vmatprep.subr.mxu0 0.0
  %1247 = vmatpush2.msra.mxu0 0.0
  %1248 = vmatprep.subr.mxu0 0.0
  %1249 = vmatpush2.msra.mxu0 0.0
  %1250 = vmatprep.subr.mxu0 0.0
  %1251 = vmatpush2.msra.mxu0 0.0
  %1252 = vmatprep.subr.mxu0 0.0
  %1253 = vmatpush2.msra.mxu0 0.0
  %1254 = vmatprep.subr.mxu0 0.0
  %1255 = vmatpush2.msra.mxu0 0.0
  %1256 = vmatprep.subr.mxu0 0.0
  %1257 = vmatpush2.msra.mxu0 0.0
  %1258 = vmatprep.subr.mxu0 0.0
  %1259 = vmatpush2.msra.mxu0 0.0
  %1260 = vmatprep.subr.mxu0 0.0
  %1261 = vmatpush2.msra.mxu0 0.0
  %1262 = vmatprep.subr.mxu0 0.0
  %1263 = vmatpush2.msra.mxu0 0.0
  %1264 = vmatprep.subr.mxu0 0.0
  %1265 = vmatpush2.msra.mxu0 0.0
  %1266 = vmatprep.subr.mxu0 0.0
  %1267 = vmatpush2.msra.mxu0 0.0
  %1268 = vmatprep.subr.mxu0 0.0
  %1269 = vmatpush2.msra.mxu0 0.0
  %1270 = vmatprep.subr.mxu0 0.0
  %1271 = vmatpush2.msra.mxu0 0.0
  %1272 = vmatprep.mubr.f32.mxu0 0.0
  %1273 = vmatmul.mubr.f32.gmra.mxu0 %v1040
  %v1274 = vpop.f32.mrf.mxu0
  %v1275 = vadd.f32 0.0, %v1274
  %v1276 = vpop.f32.mrf.mxu0
  %v1277 = vadd.f32 0.0, %v1276
  %1278 = vdwg.mxu0
  %1279 = vmatprep.subr.mxu0 0.0
  %1280 = vmatpush1.msra.mxu0 %v381
  %1281 = vmatprep.subr.mxu0 0.0
  %1282 = vmatpush1.msra.mxu0 %v378
  %1283 = vmatprep.subr.mxu0 0.0
  %1284 = vmatpush1.msra.mxu0 %v375
  %1285 = vmatprep.subr.mxu0 0.0
  %1286 = vmatpush1.msra.mxu0 %v372
  %1287 = vmatprep.subr.mxu0 0.0
  %1288 = vmatpush1.msra.mxu0 %v369
  %1289 = vmatprep.subr.mxu0 0.0
  %1290 = vmatpush1.msra.mxu0 %v366
  %1291 = vmatprep.subr.mxu0 0.0
  %1292 = vmatpush1.msra.mxu0 %v363
  %1293 = vmatprep.subr.mxu0 0.0
  %1294 = vmatpush1.msra.mxu0 %v360
  %1295 = vmatprep.subr.mxu0 0.0
  %1296 = vmatpush1.msra.mxu0 %v357
  %1297 = vmatprep.subr.mxu0 0.0
  %1298 = vmatpush1.msra.mxu0 %v354
  %1299 = vmatprep.subr.mxu0 0.0
  %1300 = vmatpush1.msra.mxu0 %v351
  %1301 = vmatprep.subr.mxu0 0.0
  %1302 = vmatpush1.msra.mxu0 %v348
  %1303 = vmatprep.subr.mxu0 0.0
  %1304 = vmatpush1.msra.mxu0 %v345
  %1305 = vmatprep.subr.mxu0 0.0
  %1306 = vmatpush1.msra.mxu0 %v342
  %1307 = vmatprep.subr.mxu0 0.0
  %1308 = vmatpush1.msra.mxu0 %v339
  %1309 = vmatprep.subr.mxu0 0.0
  %1310 = vmatpush1.msra.mxu0 %v336
  %1311 = vmatprep.subr.mxu0 0.0
  %1312 = vmatpush2.msra.mxu0 0.0
  %1313 = vmatprep.subr.mxu0 0.0
  %1314 = vmatpush2.msra.mxu0 0.0
  %1315 = vmatprep.subr.mxu0 0.0
  %1316 = vmatpush2.msra.mxu0 0.0
  %1317 = vmatprep.subr.mxu0 0.0
  %1318 = vmatpush2.msra.mxu0 0.0
  %1319 = vmatprep.subr.mxu0 0.0
  %1320 = vmatpush2.msra.mxu0 0.0
  %1321 = vmatprep.subr.mxu0 0.0
  %1322 = vmatpush2.msra.mxu0 0.0
  %1323 = vmatprep.subr.mxu0 0.0
  %1324 = vmatpush2.msra.mxu0 0.0
  %1325 = vmatprep.subr.mxu0 0.0
  %1326 = vmatpush2.msra.mxu0 0.0
  %1327 = vmatprep.subr.mxu0 0.0
  %1328 = vmatpush2.msra.mxu0 0.0
  %1329 = vmatprep.subr.mxu0 0.0
  %1330 = vmatpush2.msra.mxu0 0.0
  %1331 = vmatprep.subr.mxu0 0.0
  %1332 = vmatpush2.msra.mxu0 0.0
  %1333 = vmatprep.subr.mxu0 0.0
  %1334 = vmatpush2.msra.mxu0 0.0
  %1335 = vmatprep.subr.mxu0 0.0
  %1336 = vmatpush2.msra.mxu0 0.0
  %1337 = vmatprep.subr.mxu0 0.0
  %1338 = vmatpush2.msra.mxu0 0.0
  %1339 = vmatprep.subr.mxu0 0.0
  %1340 = vmatpush2.msra.mxu0 0.0
  %1341 = vmatprep.subr.mxu0 0.0
  %1342 = vmatpush2.msra.mxu0 0.0
  %1343 = vmatprep.mubr.f32.mxu0 0.0
  %1344 = vmatmul.mubr.f32.gmra.mxu0 %v1040
  %v1345 = vpop.f32.mrf.mxu0
  %v1346 = vadd.f32 0.0, %v1345
  %v1347 = vpop.f32.mrf.mxu0
  %1348 = vdwg.mxu0
  %v1349 = vadd.f32 %v1205, %v1275
  %v1350 = vxor.u32 %v1349, 2147483648
  %v1351 = vmul.f32 %v1350, 1.442695
  %v1352 = vpow.pop %v1351
  %v1353 = vadd.f32 %v1352, 1.0
  %v1354 = vrcp.pop %v1353
  %v1355 = vmul.f32 1.0, %v1354
  %v1356 = vadd.f32 %v1206, %v1277
  %v1357 = vxor.u32 %v1356, 2147483648
  %v1358 = vmul.f32 %v1357, 1.442695
  %v1359 = vpow.pop %v1358
  %v1360 = vadd.f32 %v1359, 1.0
  %v1361 = vrcp.pop %v1360
  %v1362 = vmul.f32 1.0, %v1361
  %v1363 = vadd.f32 %v1346, %v537
  %v1364 = vmul.f32 %v1355, %v1363
  %v1365 = vadd.f32 %v1207, %v1364
  %v1366 = vtanh.pop %v1365
  %v1367 = vsub.f32 1.0, %v1362
  %v1368 = vmul.f32 %v1367, %v1366
  %v1369 = vmul.f32 %v1362, %v1040
  %v1370 = vadd.f32 %v1368, %v1369
  %1371 = vmatprep.subr.mxu0 %v443
  %1372 = vmatpush1.msra.mxu0 %v442
  %1373 = vmatprep.subr.mxu0 %v439
  %1374 = vmatpush1.msra.mxu0 %v438
  %1375 = vmatprep.subr.mxu0 %v435
  %1376 = vmatpush1.msra.mxu0 %v434
  %1377 = vmatprep.subr.mxu0 %v431
  %1378 = vmatpush1.msra.mxu0 %v430
  %1379 = vmatprep.subr.mxu0 %v427
  %1380 = vmatpush1.msra.mxu0 %v426
  %1381 = vmatprep.subr.mxu0 %v423
  %1382 = vmatpush1.msra.mxu0 %v422
  %1383 = vmatprep.subr.mxu0 %v419
  %1384 = vmatpush1.msra.mxu0 %v418
  %1385 = vmatprep.subr.mxu0 %v415
  %1386 = vmatpush1.msra.mxu0 %v414
  %1387 = vmatprep.subr.mxu0 %v411
  %1388 = vmatpush1.msra.mxu0 %v410
  %1389 = vmatprep.subr.mxu0 %v407
  %1390 = vmatpush1.msra.mxu0 %v406
  %1391 = vmatprep.subr.mxu0 %v403
  %1392 = vmatpush1.msra.mxu0 %v402
  %1393 = vmatprep.subr.mxu0 %v399
  %1394 = vmatpush1.msra.mxu0 %v398
  %1395 = vmatprep.subr.mxu0 %v395
  %1396 = vmatpush1.msra.mxu0 %v394
  %1397 = vmatprep.subr.mxu0 %v391
  %1398 = vmatpush1.msra.mxu0 %v390
  %1399 = vmatprep.subr.mxu0 %v387
  %1400 = vmatpush1.msra.mxu0 %v386
  %1401 = vmatprep.subr.mxu0 %v383
  %1402 = vmatpush1.msra.mxu0 %v382
  %1403 = vmatprep.subr.mxu0 %v507
  %1404 = vmatpush2.msra.mxu0 %v506
  %1405 = vmatprep.subr.mxu0 %v503
  %1406 = vmatpush2.msra.mxu0 %v502
  %1407 = vmatprep.subr.mxu0 %v499
  %1408 = vmatpush2.msra.mxu0 %v498
  %1409 = vmatprep.subr.mxu0 %v495
  %1410 = vmatpush2.msra.mxu0 %v494
  %1411 = vmatprep.subr.mxu0 %v491
  %1412 = vmatpush2.msra.mxu0 %v490
  %1413 = vmatprep.subr.mxu0 %v487
  %1414 = vmatpush2.msra.mxu0 %v486
  %1415 = vmatprep.subr.mxu0 %v483
  %1416 = vmatpush2.msra.mxu0 %v482
  %1417 = vmatprep.subr.mxu0 %v479
  %1418 = vmatpush2.msra.mxu0 %v478
  %1419 = vmatprep.subr.mxu0 %v475
  %1420 = vmatpush2.msra.mxu0 %v474
  %1421 = vmatprep.subr.mxu0 %v471
  %1422 = vmatpush2.msra.mxu0 %v470
  %1423 = vmatprep.subr.mxu0 %v467
  %1424 = vmatpush2.msra.mxu0 %v466
  %1425 = vmatprep.subr.mxu0 %v463
  %1426 = vmatpush2.msra.mxu0 %v462
  %1427 = vmatprep.subr.mxu0 %v459
  %1428 = vmatpush2.msra.mxu0 %v458
  %1429 = vmatprep.subr.mxu0 %v455
  %1430 = vmatpush2.msra.mxu0 %v454
  %1431 = vmatprep.subr.mxu0 %v451
  %1432 = vmatpush2.msra.mxu0 %v450
  %1433 = vmatprep.subr.mxu0 %v447
  %1434 = vmatpush2.msra.mxu0 %v446
  %1435 = vmatprep.mubr.f32.mxu0 %v1201
  %1436 = vmatmul.mubr.f32.gmra.mxu0 %v1370
  %v1437 = vpop.f32.mrf.mxu0
  %v1438 = vadd.f32 %v515, %v1437
  %v1439 = vpop.f32.mrf.mxu0
  %v1440 = vadd.f32 %v519, %v1439
  %1441 = vdwg.mxu0
  %1442 = vmatprep.subr.mxu0 %v445
  %1443 = vmatpush1.msra.mxu0 %v444
  %1444 = vmatprep.subr.mxu0 %v441
  %1445 = vmatpush1.msra.mxu0 %v440
  %1446 = vmatprep.subr.mxu0 %v437
  %1447 = vmatpush1.msra.mxu0 %v436
  %1448 = vmatprep.subr.mxu0 %v433
  %1449 = vmatpush1.msra.mxu0 %v432
  %1450 = vmatprep.subr.mxu0 %v429
  %1451 = vmatpush1.msra.mxu0 %v428
  %1452 = vmatprep.subr.mxu0 %v425
  %1453 = vmatpush1.msra.mxu0 %v424
  %1454 = vmatprep.subr.mxu0 %v421
  %1455 = vmatpush1.msra.mxu0 %v420
  %1456 = vmatprep.subr.mxu0 %v417
  %1457 = vmatpush1.msra.mxu0 %v416
  %1458 = vmatprep.subr.mxu0 %v413
  %1459 = vmatpush1.msra.mxu0 %v412
  %1460 = vmatprep.subr.mxu0 %v409
  %1461 = vmatpush1.msra.mxu0 %v408
  %1462 = vmatprep.subr.mxu0 %v405
  %1463 = vmatpush1.msra.mxu0 %v404
  %1464 = vmatprep.subr.mxu0 %v401
  %1465 = vmatpush1.msra.mxu0 %v400
  %1466 = vmatprep.subr.mxu0 %v397
  %1467 = vmatpush1.msra.mxu0 %v396
  %1468 = vmatprep.subr.mxu0 %v393
  %1469 = vmatpush1.msra.mxu0 %v392
  %1470 = vmatprep.subr.mxu0 %v389
  %1471 = vmatpush1.msra.mxu0 %v388
  %1472 = vmatprep.subr.mxu0 %v385
  %1473 = vmatpush1.msra.mxu0 %v384
  %1474 = vmatprep.subr.mxu0 %v509
  %1475 = vmatpush2.msra.mxu0 %v508
  %1476 = vmatprep.subr.mxu0 %v505
  %1477 = vmatpush2.msra.mxu0 %v504
  %1478 = vmatprep.subr.mxu0 %v501
  %1479 = vmatpush2.msra.mxu0 %v500
  %1480 = vmatprep.subr.mxu0 %v497
  %1481 = vmatpush2.msra.mxu0 %v496
  %1482 = vmatprep.subr.mxu0 %v493
  %1483 = vmatpush2.msra.mxu0 %v492
  %1484 = vmatprep.subr.mxu0 %v489
  %1485 = vmatpush2.msra.mxu0 %v488
  %1486 = vmatprep.subr.mxu0 %v485
  %1487 = vmatpush2.msra.mxu0 %v484
  %1488 = vmatprep.subr.mxu0 %v481
  %1489 = vmatpush2.msra.mxu0 %v480
  %1490 = vmatprep.subr.mxu0 %v477
  %1491 = vmatpush2.msra.mxu0 %v476
  %1492 = vmatprep.subr.mxu0 %v473
  %1493 = vmatpush2.msra.mxu0 %v472
  %1494 = vmatprep.subr.mxu0 %v469
  %1495 = vmatpush2.msra.mxu0 %v468
  %1496 = vmatprep.subr.mxu0 %v465
  %1497 = vmatpush2.msra.mxu0 %v464
  %1498 = vmatprep.subr.mxu0 %v461
  %1499 = vmatpush2.msra.mxu0 %v460
  %1500 = vmatprep.subr.mxu0 %v457
  %1501 = vmatpush2.msra.mxu0 %v456
  %1502 = vmatprep.subr.mxu0 %v453
  %1503 = vmatpush2.msra.mxu0 %v452
  %1504 = vmatprep.subr.mxu0 %v449
  %1505 = vmatpush2.msra.mxu0 %v448
  %1506 = vmatprep.mubr.f32.mxu0 %v1201
  %1507 = vmatmul.mubr.f32.gmra.mxu0 %v1370
  %v1508 = vpop.f32.mrf.mxu0
  %v1509 = vadd.f32 %v523, %v1508
  %v1510 = vpop.f32.mrf.mxu0
  %v1511 = vadd.f32 %v527, %v1510
  %1512 = vdwg.mxu0
  %v1513 = vxor.u32 %v1438, 2147483648
  %v1514 = vmul.f32 %v1513, 1.442695
  %v1515 = vpow.pop %v1514
  %v1516 = vadd.f32 %v1515, 1.0
  %v1517 = vrcp.pop %v1516
  %v1518 = vmul.f32 1.0, %v1517
  %v1519 = vxor.u32 %v1440, 2147483648
  %v1520 = vmul.f32 %v1519, 1.442695
  %v1521 = vpow.pop %v1520
  %v1522 = vadd.f32 %v1521, 1.0
  %v1523 = vrcp.pop %v1522
  %v1524 = vmul.f32 1.0, %v1523
  %v1525 = vmul.f32 %v1518, %v1511
  %v1526 = vadd.f32 %v1509, %v1525
  %v1527 = vtanh.pop %v1526
  %v1528 = vsub.f32 1.0, %v1524
  %v1529 = vmul.f32 %v1528, %v1527
  %v1530 = vmul.f32 %v1524, %v1201
  %v1531 = vadd.f32 %v1529, %v1530
  %s1532 = smul.u32 3, 3
  %s1533 = smul.addr %s1532, 8
  %s1534 = scalar_lea.vmem [#allocation2], %s1533
  %v1535 = vld [vmem:[%s1534] sm:$0xff]
  %v1536 = vld [vmem:[%s1534 + $0x8] sm:$0xff]
  %v1537 = vld [vmem:[%s1534 + $0x10] sm:$0xff]
  %1538 = vmatprep.subr.mxu0 %v380
  %1539 = vmatpush1.msra.mxu0 %v379
  %1540 = vmatprep.subr.mxu0 %v377
  %1541 = vmatpush1.msra.mxu0 %v376
  %1542 = vmatprep.subr.mxu0 %v374
  %1543 = vmatpush1.msra.mxu0 %v373
  %1544 = vmatprep.subr.mxu0 %v371
  %1545 = vmatpush1.msra.mxu0 %v370
  %1546 = vmatprep.subr.mxu0 %v368
  %1547 = vmatpush1.msra.mxu0 %v367
  %1548 = vmatprep.subr.mxu0 %v365
  %1549 = vmatpush1.msra.mxu0 %v364
  %1550 = vmatprep.subr.mxu0 %v362
  %1551 = vmatpush1.msra.mxu0 %v361
  %1552 = vmatprep.subr.mxu0 %v359
  %1553 = vmatpush1.msra.mxu0 %v358
  %1554 = vmatprep.subr.mxu0 %v356
  %1555 = vmatpush1.msra.mxu0 %v355
  %1556 = vmatprep.subr.mxu0 %v353
  %1557 = vmatpush1.msra.mxu0 %v352
  %1558 = vmatprep.subr.mxu0 %v350
  %1559 = vmatpush1.msra.mxu0 %v349
  %1560 = vmatprep.subr.mxu0 %v347
  %1561 = vmatpush1.msra.mxu0 %v346
  %1562 = vmatprep.subr.mxu0 %v344
  %1563 = vmatpush1.msra.mxu0 %v343
  %1564 = vmatprep.subr.mxu0 %v341
  %1565 = vmatpush1.msra.mxu0 %v340
  %1566 = vmatprep.subr.mxu0 %v338
  %1567 = vmatpush1.msra.mxu0 %v337
  %1568 = vmatprep.subr.mxu0 %v335
  %1569 = vmatpush1.msra.mxu0 %v334
  %1570 = vmatprep.subr.mxu0 0.0
  %1571 = vmatpush2.msra.mxu0 0.0
  %1572 = vmatprep.subr.mxu0 0.0
  %1573 = vmatpush2.msra.mxu0 0.0
  %1574 = vmatprep.subr.mxu0 0.0
  %1575 = vmatpush2.msra.mxu0 0.0
  %1576 = vmatprep.subr.mxu0 0.0
  %1577 = vmatpush2.msra.mxu0 0.0
  %1578 = vmatprep.subr.mxu0 0.0
  %1579 = vmatpush2.msra.mxu0 0.0
  %1580 = vmatprep.subr.mxu0 0.0
  %1581 = vmatpush2.msra.mxu0 0.0
  %1582 = vmatprep.subr.mxu0 0.0
  %1583 = vmatpush2.msra.mxu0 0.0
  %1584 = vmatprep.subr.mxu0 0.0
  %1585 = vmatpush2.msra.mxu0 0.0
  %1586 = vmatprep.subr.mxu0 0.0
  %1587 = vmatpush2.msra.mxu0 0.0
  %1588 = vmatprep.subr.mxu0 0.0
  %1589 = vmatpush2.msra.mxu0 0.0
  %1590 = vmatprep.subr.mxu0 0.0
  %1591 = vmatpush2.msra.mxu0 0.0
  %1592 = vmatprep.subr.mxu0 0.0
  %1593 = vmatpush2.msra.mxu0 0.0
  %1594 = vmatprep.subr.mxu0 0.0
  %1595 = vmatpush2.msra.mxu0 0.0
  %1596 = vmatprep.subr.mxu0 0.0
  %1597 = vmatpush2.msra.mxu0 0.0
  %1598 = vmatprep.subr.mxu0 0.0
  %1599 = vmatpush2.msra.mxu0 0.0
  %1600 = vmatprep.subr.mxu0 0.0
  %1601 = vmatpush2.msra.mxu0 0.0
  %1602 = vmatprep.mubr.f32.mxu0 0.0
  %1603 = vmatmul.mubr.f32.gmra.mxu0 %v1370
  %v1604 = vpop.f32.mrf.mxu0
  %v1605 = vadd.f32 0.0, %v1604
  %v1606 = vpop.f32.mrf.mxu0
  %v1607 = vadd.f32 0.0, %v1606
  %1608 = vdwg.mxu0
  %1609 = vmatprep.subr.mxu0 0.0
  %1610 = vmatpush1.msra.mxu0 %v381
  %1611 = vmatprep.subr.mxu0 0.0
  %1612 = vmatpush1.msra.mxu0 %v378
  %1613 = vmatprep.subr.mxu0 0.0
  %1614 = vmatpush1.msra.mxu0 %v375
  %1615 = vmatprep.subr.mxu0 0.0
  %1616 = vmatpush1.msra.mxu0 %v372
  %1617 = vmatprep.subr.mxu0 0.0
  %1618 = vmatpush1.msra.mxu0 %v369
  %1619 = vmatprep.subr.mxu0 0.0
  %1620 = vmatpush1.msra.mxu0 %v366
  %1621 = vmatprep.subr.mxu0 0.0
  %1622 = vmatpush1.msra.mxu0 %v363
  %1623 = vmatprep.subr.mxu0 0.0
  %1624 = vmatpush1.msra.mxu0 %v360
  %1625 = vmatprep.subr.mxu0 0.0
  %1626 = vmatpush1.msra.mxu0 %v357
  %1627 = vmatprep.subr.mxu0 0.0
  %1628 = vmatpush1.msra.mxu0 %v354
  %1629 = vmatprep.subr.mxu0 0.0
  %1630 = vmatpush1.msra.mxu0 %v351
  %1631 = vmatprep.subr.mxu0 0.0
  %1632 = vmatpush1.msra.mxu0 %v348
  %1633 = vmatprep.subr.mxu0 0.0
  %1634 = vmatpush1.msra.mxu0 %v345
  %1635 = vmatprep.subr.mxu0 0.0
  %1636 = vmatpush1.msra.mxu0 %v342
  %1637 = vmatprep.subr.mxu0 0.0
  %1638 = vmatpush1.msra.mxu0 %v339
  %1639 = vmatprep.subr.mxu0 0.0
  %1640 = vmatpush1.msra.mxu0 %v336
  %1641 = vmatprep.subr.mxu0 0.0
  %1642 = vmatpush2.msra.mxu0 0.0
  %1643 = vmatprep.subr.mxu0 0.0
  %1644 = vmatpush2.msra.mxu0 0.0
  %1645 = vmatprep.subr.mxu0 0.0
  %1646 = vmatpush2.msra.mxu0 0.0
  %1647 = vmatprep.subr.mxu0 0.0
  %1648 = vmatpush2.msra.mxu0 0.0
  %1649 = vmatprep.subr.mxu0 0.0
  %1650 = vmatpush2.msra.mxu0 0.0
  %1651 = vmatprep.subr.mxu0 0.0
  %1652 = vmatpush2.msra.mxu0 0.0
  %1653 = vmatprep.subr.mxu0 0.0
  %1654 = vmatpush2.msra.mxu0 0.0
  %1655 = vmatprep.subr.mxu0 0.0
  %1656 = vmatpush2.msra.mxu0 0.0
  %1657 = vmatprep.subr.mxu0 0.0
  %1658 = vmatpush2.msra.mxu0 0.0
  %1659 = vmatprep.subr.mxu0 0.0
  %1660 = vmatpush2.msra.mxu0 0.0
  %1661 = vmatprep.subr.mxu0 0.0
  %1662 = vmatpush2.msra.mxu0 0.0
  %1663 = vmatprep.subr.mxu0 0.0
  %1664 = vmatpush2.msra.mxu0 0.0
  %1665 = vmatprep.subr.mxu0 0.0
  %1666 = vmatpush2.msra.mxu0 0.0
  %1667 = vmatprep.subr.mxu0 0.0
  %1668 = vmatpush2.msra.mxu0 0.0
  %1669 = vmatprep.subr.mxu0 0.0
  %1670 = vmatpush2.msra.mxu0 0.0
  %1671 = vmatprep.subr.mxu0 0.0
  %1672 = vmatpush2.msra.mxu0 0.0
  %1673 = vmatprep.mubr.f32.mxu0 0.0
  %1674 = vmatmul.mubr.f32.gmra.mxu0 %v1370
  %v1675 = vpop.f32.mrf.mxu0
  %v1676 = vadd.f32 0.0, %v1675
  %v1677 = vpop.f32.mrf.mxu0
  %1678 = vdwg.mxu0
  %v1679 = vadd.f32 %v1535, %v1605
  %v1680 = vxor.u32 %v1679, 2147483648
  %v1681 = vmul.f32 %v1680, 1.442695
  %v1682 = vpow.pop %v1681
  %v1683 = vadd.f32 %v1682, 1.0
  %v1684 = vrcp.pop %v1683
  %v1685 = vmul.f32 1.0, %v1684
  %v1686 = vadd.f32 %v1536, %v1607
  %v1687 = vxor.u32 %v1686, 2147483648
  %v1688 = vmul.f32 %v1687, 1.442695
  %v1689 = vpow.pop %v1688
  %v1690 = vadd.f32 %v1689, 1.0
  %v1691 = vrcp.pop %v1690
  %v1692 = vmul.f32 1.0, %v1691
  %v1693 = vadd.f32 %v1676, %v537
  %v1694 = vmul.f32 %v1685, %v1693
  %v1695 = vadd.f32 %v1537, %v1694
  %v1696 = vtanh.pop %v1695
  %v1697 = vsub.f32 1.0, %v1692
  %v1698 = vmul.f32 %v1697, %v1696
  %v1699 = vmul.f32 %v1692, %v1370
  %v1700 = vadd.f32 %v1698, %v1699
  %1701 = vmatprep.subr.mxu0 %v443
  %1702 = vmatpush1.msra.mxu0 %v442
  %1703 = vmatprep.subr.mxu0 %v439
  %1704 = vmatpush1.msra.mxu0 %v438
  %1705 = vmatprep.subr.mxu0 %v435
  %1706 = vmatpush1.msra.mxu0 %v434
  %1707 = vmatprep.subr.mxu0 %v431
  %1708 = vmatpush1.msra.mxu0 %v430
  %1709 = vmatprep.subr.mxu0 %v427
  %1710 = vmatpush1.msra.mxu0 %v426
  %1711 = vmatprep.subr.mxu0 %v423
  %1712 = vmatpush1.msra.mxu0 %v422
  %1713 = vmatprep.subr.mxu0 %v419
  %1714 = vmatpush1.msra.mxu0 %v418
  %1715 = vmatprep.subr.mxu0 %v415
  %1716 = vmatpush1.msra.mxu0 %v414
  %1717 = vmatprep.subr.mxu0 %v411
  %1718 = vmatpush1.msra.mxu0 %v410
  %1719 = vmatprep.subr.mxu0 %v407
  %1720 = vmatpush1.msra.mxu0 %v406
  %1721 = vmatprep.subr.mxu0 %v403
  %1722 = vmatpush1.msra.mxu0 %v402
  %1723 = vmatprep.subr.mxu0 %v399
  %1724 = vmatpush1.msra.mxu0 %v398
  %1725 = vmatprep.subr.mxu0 %v395
  %1726 = vmatpush1.msra.mxu0 %v394
  %1727 = vmatprep.subr.mxu0 %v391
  %1728 = vmatpush1.msra.mxu0 %v390
  %1729 = vmatprep.subr.mxu0 %v387
  %1730 = vmatpush1.msra.mxu0 %v386
  %1731 = vmatprep.subr.mxu0 %v383
  %1732 = vmatpush1.msra.mxu0 %v382
  %1733 = vmatprep.subr.mxu0 %v507
  %1734 = vmatpush2.msra.mxu0 %v506
  %1735 = vmatprep.subr.mxu0 %v503
  %1736 = vmatpush2.msra.mxu0 %v502
  %1737 = vmatprep.subr.mxu0 %v499
  %1738 = vmatpush2.msra.mxu0 %v498
  %1739 = vmatprep.subr.mxu0 %v495
  %1740 = vmatpush2.msra.mxu0 %v494
  %1741 = vmatprep.subr.mxu0 %v491
  %1742 = vmatpush2.msra.mxu0 %v490
  %1743 = vmatprep.subr.mxu0 %v487
  %1744 = vmatpush2.msra.mxu0 %v486
  %1745 = vmatprep.subr.mxu0 %v483
  %1746 = vmatpush2.msra.mxu0 %v482
  %1747 = vmatprep.subr.mxu0 %v479
  %1748 = vmatpush2.msra.mxu0 %v478
  %1749 = vmatprep.subr.mxu0 %v475
  %1750 = vmatpush2.msra.mxu0 %v474
  %1751 = vmatprep.subr.mxu0 %v471
  %1752 = vmatpush2.msra.mxu0 %v470
  %1753 = vmatprep.subr.mxu0 %v467
  %1754 = vmatpush2.msra.mxu0 %v466
  %1755 = vmatprep.subr.mxu0 %v463
  %1756 = vmatpush2.msra.mxu0 %v462
  %1757 = vmatprep.subr.mxu0 %v459
  %1758 = vmatpush2.msra.mxu0 %v458
  %1759 = vmatprep.subr.mxu0 %v455
  %1760 = vmatpush2.msra.mxu0 %v454
  %1761 = vmatprep.subr.mxu0 %v451
  %1762 = vmatpush2.msra.mxu0 %v450
  %1763 = vmatprep.subr.mxu0 %v447
  %1764 = vmatpush2.msra.mxu0 %v446
  %1765 = vmatprep.mubr.f32.mxu0 %v1531
  %1766 = vmatmul.mubr.f32.gmra.mxu0 %v1700
  %v1767 = vpop.f32.mrf.mxu0
  %v1768 = vadd.f32 %v515, %v1767
  %v1769 = vpop.f32.mrf.mxu0
  %v1770 = vadd.f32 %v519, %v1769
  %1771 = vdwg.mxu0
  %1772 = vmatprep.subr.mxu0 %v445
  %1773 = vmatpush1.msra.mxu0 %v444
  %1774 = vmatprep.subr.mxu0 %v441
  %1775 = vmatpush1.msra.mxu0 %v440
  %1776 = vmatprep.subr.mxu0 %v437
  %1777 = vmatpush1.msra.mxu0 %v436
  %1778 = vmatprep.subr.mxu0 %v433
  %1779 = vmatpush1.msra.mxu0 %v432
  %1780 = vmatprep.subr.mxu0 %v429
  %1781 = vmatpush1.msra.mxu0 %v428
  %1782 = vmatprep.subr.mxu0 %v425
  %1783 = vmatpush1.msra.mxu0 %v424
  %1784 = vmatprep.subr.mxu0 %v421
  %1785 = vmatpush1.msra.mxu0 %v420
  %1786 = vmatprep.subr.mxu0 %v417
  %1787 = vmatpush1.msra.mxu0 %v416
  %1788 = vmatprep.subr.mxu0 %v413
  %1789 = vmatpush1.msra.mxu0 %v412
  %1790 = vmatprep.subr.mxu0 %v409
  %1791 = vmatpush1.msra.mxu0 %v408
  %1792 = vmatprep.subr.mxu0 %v405
  %1793 = vmatpush1.msra.mxu0 %v404
  %1794 = vmatprep.subr.mxu0 %v401
  %1795 = vmatpush1.msra.mxu0 %v400
  %1796 = vmatprep.subr.mxu0 %v397
  %1797 = vmatpush1.msra.mxu0 %v396
  %1798 = vmatprep.subr.mxu0 %v393
  %1799 = vmatpush1.msra.mxu0 %v392
  %1800 = vmatprep.subr.mxu0 %v389
  %1801 = vmatpush1.msra.mxu0 %v388
  %1802 = vmatprep.subr.mxu0 %v385
  %1803 = vmatpush1.msra.mxu0 %v384
  %1804 = vmatprep.subr.mxu0 %v509
  %1805 = vmatpush2.msra.mxu0 %v508
  %1806 = vmatprep.subr.mxu0 %v505
  %1807 = vmatpush2.msra.mxu0 %v504
  %1808 = vmatprep.subr.mxu0 %v501
  %1809 = vmatpush2.msra.mxu0 %v500
  %1810 = vmatprep.subr.mxu0 %v497
  %1811 = vmatpush2.msra.mxu0 %v496
  %1812 = vmatprep.subr.mxu0 %v493
  %1813 = vmatpush2.msra.mxu0 %v492
  %1814 = vmatprep.subr.mxu0 %v489
  %1815 = vmatpush2.msra.mxu0 %v488
  %1816 = vmatprep.subr.mxu0 %v485
  %1817 = vmatpush2.msra.mxu0 %v484
  %1818 = vmatprep.subr.mxu0 %v481
  %1819 = vmatpush2.msra.mxu0 %v480
  %1820 = vmatprep.subr.mxu0 %v477
  %1821 = vmatpush2.msra.mxu0 %v476
  %1822 = vmatprep.subr.mxu0 %v473
  %1823 = vmatpush2.msra.mxu0 %v472
  %1824 = vmatprep.subr.mxu0 %v469
  %1825 = vmatpush2.msra.mxu0 %v468
  %1826 = vmatprep.subr.mxu0 %v465
  %1827 = vmatpush2.msra.mxu0 %v464
  %1828 = vmatprep.subr.mxu0 %v461
  %1829 = vmatpush2.msra.mxu0 %v460
  %1830 = vmatprep.subr.mxu0 %v457
  %1831 = vmatpush2.msra.mxu0 %v456
  %1832 = vmatprep.subr.mxu0 %v453
  %1833 = vmatpush2.msra.mxu0 %v452
  %1834 = vmatprep.subr.mxu0 %v449
  %1835 = vmatpush2.msra.mxu0 %v448
  %1836 = vmatprep.mubr.f32.mxu0 %v1531
  %1837 = vmatmul.mubr.f32.gmra.mxu0 %v1700
  %v1838 = vpop.f32.mrf.mxu0
  %v1839 = vadd.f32 %v523, %v1838
  %v1840 = vpop.f32.mrf.mxu0
  %v1841 = vadd.f32 %v527, %v1840
  %1842 = vdwg.mxu0
  %v1843 = vxor.u32 %v1768, 2147483648
  %v1844 = vmul.f32 %v1843, 1.442695
  %v1845 = vpow.pop %v1844
  %v1846 = vadd.f32 %v1845, 1.0
  %v1847 = vrcp.pop %v1846
  %v1848 = vmul.f32 1.0, %v1847
  %v1849 = vxor.u32 %v1770, 2147483648
  %v1850 = vmul.f32 %v1849, 1.442695
  %v1851 = vpow.pop %v1850
  %v1852 = vadd.f32 %v1851, 1.0
  %v1853 = vrcp.pop %v1852
  %v1854 = vmul.f32 1.0, %v1853
  %v1855 = vmul.f32 %v1848, %v1841
  %v1856 = vadd.f32 %v1839, %v1855
  %v1857 = vtanh.pop %v1856
  %v1858 = vsub.f32 1.0, %v1854
  %v1859 = vmul.f32 %v1858, %v1857
  %v1860 = vmul.f32 %v1854, %v1531
  %v1861 = vadd.f32 %v1859, %v1860
  %s1862 = smul.u32 4, 3
  %s1863 = smul.addr %s1862, 8
  %s1864 = scalar_lea.vmem [#allocation2], %s1863
  %v1865 = vld [vmem:[%s1864] sm:$0xff]
  %v1866 = vld [vmem:[%s1864 + $0x8] sm:$0xff]
  %v1867 = vld [vmem:[%s1864 + $0x10] sm:$0xff]
  %1868 = vmatprep.subr.mxu0 %v380
  %1869 = vmatpush1.msra.mxu0 %v379
  %1870 = vmatprep.subr.mxu0 %v377
  %1871 = vmatpush1.msra.mxu0 %v376
  %1872 = vmatprep.subr.mxu0 %v374
  %1873 = vmatpush1.msra.mxu0 %v373
  %1874 = vmatprep.subr.mxu0 %v371
  %1875 = vmatpush1.msra.mxu0 %v370
  %1876 = vmatprep.subr.mxu0 %v368
  %1877 = vmatpush1.msra.mxu0 %v367
  %1878 = vmatprep.subr.mxu0 %v365
  %1879 = vmatpush1.msra.mxu0 %v364
  %1880 = vmatprep.subr.mxu0 %v362
  %1881 = vmatpush1.msra.mxu0 %v361
  %1882 = vmatprep.subr.mxu0 %v359
  %1883 = vmatpush1.msra.mxu0 %v358
  %1884 = vmatprep.subr.mxu0 %v356
  %1885 = vmatpush1.msra.mxu0 %v355
  %1886 = vmatprep.subr.mxu0 %v353
  %1887 = vmatpush1.msra.mxu0 %v352
  %1888 = vmatprep.subr.mxu0 %v350
  %1889 = vmatpush1.msra.mxu0 %v349
  %1890 = vmatprep.subr.mxu0 %v347
  %1891 = vmatpush1.msra.mxu0 %v346
  %1892 = vmatprep.subr.mxu0 %v344
  %1893 = vmatpush1.msra.mxu0 %v343
  %1894 = vmatprep.subr.mxu0 %v341
  %1895 = vmatpush1.msra.mxu0 %v340
  %1896 = vmatprep.subr.mxu0 %v338
  %1897 = vmatpush1.msra.mxu0 %v337
  %1898 = vmatprep.subr.mxu0 %v335
  %1899 = vmatpush1.msra.mxu0 %v334
  %1900 = vmatprep.subr.mxu0 0.0
  %1901 = vmatpush2.msra.mxu0 0.0
  %1902 = vmatprep.subr.mxu0 0.0
  %1903 = vmatpush2.msra.mxu0 0.0
  %1904 = vmatprep.subr.mxu0 0.0
  %1905 = vmatpush2.msra.mxu0 0.0
  %1906 = vmatprep.subr.mxu0 0.0
  %1907 = vmatpush2.msra.mxu0 0.0
  %1908 = vmatprep.subr.mxu0 0.0
  %1909 = vmatpush2.msra.mxu0 0.0
  %1910 = vmatprep.subr.mxu0 0.0
  %1911 = vmatpush2.msra.mxu0 0.0
  %1912 = vmatprep.subr.mxu0 0.0
  %1913 = vmatpush2.msra.mxu0 0.0
  %1914 = vmatprep.subr.mxu0 0.0
  %1915 = vmatpush2.msra.mxu0 0.0
  %1916 = vmatprep.subr.mxu0 0.0
  %1917 = vmatpush2.msra.mxu0 0.0
  %1918 = vmatprep.subr.mxu0 0.0
  %1919 = vmatpush2.msra.mxu0 0.0
  %1920 = vmatprep.subr.mxu0 0.0
  %1921 = vmatpush2.msra.mxu0 0.0
  %1922 = vmatprep.subr.mxu0 0.0
  %1923 = vmatpush2.msra.mxu0 0.0
  %1924 = vmatprep.subr.mxu0 0.0
  %1925 = vmatpush2.msra.mxu0 0.0
  %1926 = vmatprep.subr.mxu0 0.0
  %1927 = vmatpush2.msra.mxu0 0.0
  %1928 = vmatprep.subr.mxu0 0.0
  %1929 = vmatpush2.msra.mxu0 0.0
  %1930 = vmatprep.subr.mxu0 0.0
  %1931 = vmatpush2.msra.mxu0 0.0
  %1932 = vmatprep.mubr.f32.mxu0 0.0
  %1933 = vmatmul.mubr.f32.gmra.mxu0 %v1700
  %v1934 = vpop.f32.mrf.mxu0
  %v1935 = vadd.f32 0.0, %v1934
  %v1936 = vpop.f32.mrf.mxu0
  %v1937 = vadd.f32 0.0, %v1936
  %1938 = vdwg.mxu0
  %1939 = vmatprep.subr.mxu0 0.0
  %1940 = vmatpush1.msra.mxu0 %v381
  %1941 = vmatprep.subr.mxu0 0.0
  %1942 = vmatpush1.msra.mxu0 %v378
  %1943 = vmatprep.subr.mxu0 0.0
  %1944 = vmatpush1.msra.mxu0 %v375
  %1945 = vmatprep.subr.mxu0 0.0
  %1946 = vmatpush1.msra.mxu0 %v372
  %1947 = vmatprep.subr.mxu0 0.0
  %1948 = vmatpush1.msra.mxu0 %v369
  %1949 = vmatprep.subr.mxu0 0.0
  %1950 = vmatpush1.msra.mxu0 %v366
  %1951 = vmatprep.subr.mxu0 0.0
  %1952 = vmatpush1.msra.mxu0 %v363
  %1953 = vmatprep.subr.mxu0 0.0
  %1954 = vmatpush1.msra.mxu0 %v360
  %1955 = vmatprep.subr.mxu0 0.0
  %1956 = vmatpush1.msra.mxu0 %v357
  %1957 = vmatprep.subr.mxu0 0.0
  %1958 = vmatpush1.msra.mxu0 %v354
  %1959 = vmatprep.subr.mxu0 0.0
  %1960 = vmatpush1.msra.mxu0 %v351
  %1961 = vmatprep.subr.mxu0 0.0
  %1962 = vmatpush1.msra.mxu0 %v348
  %1963 = vmatprep.subr.mxu0 0.0
  %1964 = vmatpush1.msra.mxu0 %v345
  %1965 = vmatprep.subr.mxu0 0.0
  %1966 = vmatpush1.msra.mxu0 %v342
  %1967 = vmatprep.subr.mxu0 0.0
  %1968 = vmatpush1.msra.mxu0 %v339
  %1969 = vmatprep.subr.mxu0 0.0
  %1970 = vmatpush1.msra.mxu0 %v336
  %1971 = vmatprep.subr.mxu0 0.0
  %1972 = vmatpush2.msra.mxu0 0.0
  %1973 = vmatprep.subr.mxu0 0.0
  %1974 = vmatpush2.msra.mxu0 0.0
  %1975 = vmatprep.subr.mxu0 0.0
  %1976 = vmatpush2.msra.mxu0 0.0
  %1977 = vmatprep.subr.mxu0 0.0
  %1978 = vmatpush2.msra.mxu0 0.0
  %1979 = vmatprep.subr.mxu0 0.0
  %1980 = vmatpush2.msra.mxu0 0.0
  %1981 = vmatprep.subr.mxu0 0.0
  %1982 = vmatpush2.msra.mxu0 0.0
  %1983 = vmatprep.subr.mxu0 0.0
  %1984 = vmatpush2.msra.mxu0 0.0
  %1985 = vmatprep.subr.mxu0 0.0
  %1986 = vmatpush2.msra.mxu0 0.0
  %1987 = vmatprep.subr.mxu0 0.0
  %1988 = vmatpush2.msra.mxu0 0.0
  %1989 = vmatprep.subr.mxu0 0.0
  %1990 = vmatpush2.msra.mxu0 0.0
  %1991 = vmatprep.subr.mxu0 0.0
  %1992 = vmatpush2.msra.mxu0 0.0
  %1993 = vmatprep.subr.mxu0 0.0
  %1994 = vmatpush2.msra.mxu0 0.0
  %1995 = vmatprep.subr.mxu0 0.0
  %1996 = vmatpush2.msra.mxu0 0.0
  %1997 = vmatprep.subr.mxu0 0.0
  %1998 = vmatpush2.msra.mxu0 0.0
  %1999 = vmatprep.subr.mxu0 0.0
  %2000 = vmatpush2.msra.mxu0 0.0
  %2001 = vmatprep.subr.mxu0 0.0
  %2002 = vmatpush2.msra.mxu0 0.0
  %2003 = vmatprep.mubr.f32.mxu0 0.0
  %2004 = vmatmul.mubr.f32.gmra.mxu0 %v1700
  %v2005 = vpop.f32.mrf.mxu0
  %v2006 = vadd.f32 0.0, %v2005
  %v2007 = vpop.f32.mrf.mxu0
  %2008 = vdwg.mxu0
  %v2009 = vadd.f32 %v1865, %v1935
  %v2010 = vxor.u32 %v2009, 2147483648
  %v2011 = vmul.f32 %v2010, 1.442695
  %v2012 = vpow.pop %v2011
  %v2013 = vadd.f32 %v2012, 1.0
  %v2014 = vrcp.pop %v2013
  %v2015 = vmul.f32 1.0, %v2014
  %v2016 = vadd.f32 %v1866, %v1937
  %v2017 = vxor.u32 %v2016, 2147483648
  %v2018 = vmul.f32 %v2017, 1.442695
  %v2019 = vpow.pop %v2018
  %v2020 = vadd.f32 %v2019, 1.0
  %v2021 = vrcp.pop %v2020
  %v2022 = vmul.f32 1.0, %v2021
  %v2023 = vadd.f32 %v2006, %v537
  %v2024 = vmul.f32 %v2015, %v2023
  %v2025 = vadd.f32 %v1867, %v2024
  %v2026 = vtanh.pop %v2025
  %v2027 = vsub.f32 1.0, %v2022
  %v2028 = vmul.f32 %v2027, %v2026
  %v2029 = vmul.f32 %v2022, %v1700
  %v2030 = vadd.f32 %v2028, %v2029
  %2031 = vmatprep.subr.mxu0 %v443
  %2032 = vmatpush1.msra.mxu0 %v442
  %2033 = vmatprep.subr.mxu0 %v439
  %2034 = vmatpush1.msra.mxu0 %v438
  %2035 = vmatprep.subr.mxu0 %v435
  %2036 = vmatpush1.msra.mxu0 %v434
  %2037 = vmatprep.subr.mxu0 %v431
  %2038 = vmatpush1.msra.mxu0 %v430
  %2039 = vmatprep.subr.mxu0 %v427
  %2040 = vmatpush1.msra.mxu0 %v426
  %2041 = vmatprep.subr.mxu0 %v423
  %2042 = vmatpush1.msra.mxu0 %v422
  %2043 = vmatprep.subr.mxu0 %v419
  %2044 = vmatpush1.msra.mxu0 %v418
  %2045 = vmatprep.subr.mxu0 %v415
  %2046 = vmatpush1.msra.mxu0 %v414
  %2047 = vmatprep.subr.mxu0 %v411
  %2048 = vmatpush1.msra.mxu0 %v410
  %2049 = vmatprep.subr.mxu0 %v407
  %2050 = vmatpush1.msra.mxu0 %v406
  %2051 = vmatprep.subr.mxu0 %v403
  %2052 = vmatpush1.msra.mxu0 %v402
  %2053 = vmatprep.subr.mxu0 %v399
  %2054 = vmatpush1.msra.mxu0 %v398
  %2055 = vmatprep.subr.mxu0 %v395
  %2056 = vmatpush1.msra.mxu0 %v394
  %2057 = vmatprep.subr.mxu0 %v391
  %2058 = vmatpush1.msra.mxu0 %v390
  %2059 = vmatprep.subr.mxu0 %v387
  %2060 = vmatpush1.msra.mxu0 %v386
  %2061 = vmatprep.subr.mxu0 %v383
  %2062 = vmatpush1.msra.mxu0 %v382
  %2063 = vmatprep.subr.mxu0 %v507
  %2064 = vmatpush2.msra.mxu0 %v506
  %2065 = vmatprep.subr.mxu0 %v503
  %2066 = vmatpush2.msra.mxu0 %v502
  %2067 = vmatprep.subr.mxu0 %v499
  %2068 = vmatpush2.msra.mxu0 %v498
  %2069 = vmatprep.subr.mxu0 %v495
  %2070 = vmatpush2.msra.mxu0 %v494
  %2071 = vmatprep.subr.mxu0 %v491
  %2072 = vmatpush2.msra.mxu0 %v490
  %2073 = vmatprep.subr.mxu0 %v487
  %2074 = vmatpush2.msra.mxu0 %v486
  %2075 = vmatprep.subr.mxu0 %v483
  %2076 = vmatpush2.msra.mxu0 %v482
  %2077 = vmatprep.subr.mxu0 %v479
  %2078 = vmatpush2.msra.mxu0 %v478
  %2079 = vmatprep.subr.mxu0 %v475
  %2080 = vmatpush2.msra.mxu0 %v474
  %2081 = vmatprep.subr.mxu0 %v471
  %2082 = vmatpush2.msra.mxu0 %v470
  %2083 = vmatprep.subr.mxu0 %v467
  %2084 = vmatpush2.msra.mxu0 %v466
  %2085 = vmatprep.subr.mxu0 %v463
  %2086 = vmatpush2.msra.mxu0 %v462
  %2087 = vmatprep.subr.mxu0 %v459
  %2088 = vmatpush2.msra.mxu0 %v458
  %2089 = vmatprep.subr.mxu0 %v455
  %2090 = vmatpush2.msra.mxu0 %v454
  %2091 = vmatprep.subr.mxu0 %v451
  %2092 = vmatpush2.msra.mxu0 %v450
  %2093 = vmatprep.subr.mxu0 %v447
  %2094 = vmatpush2.msra.mxu0 %v446
  %2095 = vmatprep.mubr.f32.mxu0 %v1861
  %2096 = vmatmul.mubr.f32.gmra.mxu0 %v2030
  %v2097 = vpop.f32.mrf.mxu0
  %v2098 = vadd.f32 %v515, %v2097
  %v2099 = vpop.f32.mrf.mxu0
  %v2100 = vadd.f32 %v519, %v2099
  %2101 = vdwg.mxu0
  %2102 = vmatprep.subr.mxu0 %v445
  %2103 = vmatpush1.msra.mxu0 %v444
  %2104 = vmatprep.subr.mxu0 %v441
  %2105 = vmatpush1.msra.mxu0 %v440
  %2106 = vmatprep.subr.mxu0 %v437
  %2107 = vmatpush1.msra.mxu0 %v436
  %2108 = vmatprep.subr.mxu0 %v433
  %2109 = vmatpush1.msra.mxu0 %v432
  %2110 = vmatprep.subr.mxu0 %v429
  %2111 = vmatpush1.msra.mxu0 %v428
  %2112 = vmatprep.subr.mxu0 %v425
  %2113 = vmatpush1.msra.mxu0 %v424
  %2114 = vmatprep.subr.mxu0 %v421
  %2115 = vmatpush1.msra.mxu0 %v420
  %2116 = vmatprep.subr.mxu0 %v417
  %2117 = vmatpush1.msra.mxu0 %v416
  %2118 = vmatprep.subr.mxu0 %v413
  %2119 = vmatpush1.msra.mxu0 %v412
  %2120 = vmatprep.subr.mxu0 %v409
  %2121 = vmatpush1.msra.mxu0 %v408
  %2122 = vmatprep.subr.mxu0 %v405
  %2123 = vmatpush1.msra.mxu0 %v404
  %2124 = vmatprep.subr.mxu0 %v401
  %2125 = vmatpush1.msra.mxu0 %v400
  %2126 = vmatprep.subr.mxu0 %v397
  %2127 = vmatpush1.msra.mxu0 %v396
  %2128 = vmatprep.subr.mxu0 %v393
  %2129 = vmatpush1.msra.mxu0 %v392
  %2130 = vmatprep.subr.mxu0 %v389
  %2131 = vmatpush1.msra.mxu0 %v388
  %2132 = vmatprep.subr.mxu0 %v385
  %2133 = vmatpush1.msra.mxu0 %v384
  %2134 = vmatprep.subr.mxu0 %v509
  %2135 = vmatpush2.msra.mxu0 %v508
  %2136 = vmatprep.subr.mxu0 %v505
  %2137 = vmatpush2.msra.mxu0 %v504
  %2138 = vmatprep.subr.mxu0 %v501
  %2139 = vmatpush2.msra.mxu0 %v500
  %2140 = vmatprep.subr.mxu0 %v497
  %2141 = vmatpush2.msra.mxu0 %v496
  %2142 = vmatprep.subr.mxu0 %v493
  %2143 = vmatpush2.msra.mxu0 %v492
  %2144 = vmatprep.subr.mxu0 %v489
  %2145 = vmatpush2.msra.mxu0 %v488
  %2146 = vmatprep.subr.mxu0 %v485
  %2147 = vmatpush2.msra.mxu0 %v484
  %2148 = vmatprep.subr.mxu0 %v481
  %2149 = vmatpush2.msra.mxu0 %v480
  %2150 = vmatprep.subr.mxu0 %v477
  %2151 = vmatpush2.msra.mxu0 %v476
  %2152 = vmatprep.subr.mxu0 %v473
  %2153 = vmatpush2.msra.mxu0 %v472
  %2154 = vmatprep.subr.mxu0 %v469
  %2155 = vmatpush2.msra.mxu0 %v468
  %2156 = vmatprep.subr.mxu0 %v465
  %2157 = vmatpush2.msra.mxu0 %v464
  %2158 = vmatprep.subr.mxu0 %v461
  %2159 = vmatpush2.msra.mxu0 %v460
  %2160 = vmatprep.subr.mxu0 %v457
  %2161 = vmatpush2.msra.mxu0 %v456
  %2162 = vmatprep.subr.mxu0 %v453
  %2163 = vmatpush2.msra.mxu0 %v452
  %2164 = vmatprep.subr.mxu0 %v449
  %2165 = vmatpush2.msra.mxu0 %v448
  %2166 = vmatprep.mubr.f32.mxu0 %v1861
  %2167 = vmatmul.mubr.f32.gmra.mxu0 %v2030
  %v2168 = vpop.f32.mrf.mxu0
  %v2169 = vadd.f32 %v523, %v2168
  %v2170 = vpop.f32.mrf.mxu0
  %v2171 = vadd.f32 %v527, %v2170
  %2172 = vdwg.mxu0
  %v2173 = vxor.u32 %v2098, 2147483648
  %v2174 = vmul.f32 %v2173, 1.442695
  %v2175 = vpow.pop %v2174
  %v2176 = vadd.f32 %v2175, 1.0
  %v2177 = vrcp.pop %v2176
  %v2178 = vmul.f32 1.0, %v2177
  %v2179 = vxor.u32 %v2100, 2147483648
  %v2180 = vmul.f32 %v2179, 1.442695
  %v2181 = vpow.pop %v2180
  %v2182 = vadd.f32 %v2181, 1.0
  %v2183 = vrcp.pop %v2182
  %v2184 = vmul.f32 1.0, %v2183
  %v2185 = vmul.f32 %v2178, %v2171
  %v2186 = vadd.f32 %v2169, %v2185
  %v2187 = vtanh.pop %v2186
  %v2188 = vsub.f32 1.0, %v2184
  %v2189 = vmul.f32 %v2188, %v2187
  %v2190 = vmul.f32 %v2184, %v1861
  %v2191 = vadd.f32 %v2189, %v2190
  %s2192 = smul.u32 5, 3
  %s2193 = smul.addr %s2192, 8
  %s2194 = scalar_lea.vmem [#allocation2], %s2193
  %v2195 = vld [vmem:[%s2194] sm:$0xff]
  %v2196 = vld [vmem:[%s2194 + $0x8] sm:$0xff]
  %v2197 = vld [vmem:[%s2194 + $0x10] sm:$0xff]
  %2198 = vmatprep.subr.mxu0 %v380
  %2199 = vmatpush1.msra.mxu0 %v379
  %2200 = vmatprep.subr.mxu0 %v377
  %2201 = vmatpush1.msra.mxu0 %v376
  %2202 = vmatprep.subr.mxu0 %v374
  %2203 = vmatpush1.msra.mxu0 %v373
  %2204 = vmatprep.subr.mxu0 %v371
  %2205 = vmatpush1.msra.mxu0 %v370
  %2206 = vmatprep.subr.mxu0 %v368
  %2207 = vmatpush1.msra.mxu0 %v367
  %2208 = vmatprep.subr.mxu0 %v365
  %2209 = vmatpush1.msra.mxu0 %v364
  %2210 = vmatprep.subr.mxu0 %v362
  %2211 = vmatpush1.msra.mxu0 %v361
  %2212 = vmatprep.subr.mxu0 %v359
  %2213 = vmatpush1.msra.mxu0 %v358
  %2214 = vmatprep.subr.mxu0 %v356
  %2215 = vmatpush1.msra.mxu0 %v355
  %2216 = vmatprep.subr.mxu0 %v353
  %2217 = vmatpush1.msra.mxu0 %v352
  %2218 = vmatprep.subr.mxu0 %v350
  %2219 = vmatpush1.msra.mxu0 %v349
  %2220 = vmatprep.subr.mxu0 %v347
  %2221 = vmatpush1.msra.mxu0 %v346
  %2222 = vmatprep.subr.mxu0 %v344
  %2223 = vmatpush1.msra.mxu0 %v343
  %2224 = vmatprep.subr.mxu0 %v341
  %2225 = vmatpush1.msra.mxu0 %v340
  %2226 = vmatprep.subr.mxu0 %v338
  %2227 = vmatpush1.msra.mxu0 %v337
  %2228 = vmatprep.subr.mxu0 %v335
  %2229 = vmatpush1.msra.mxu0 %v334
  %2230 = vmatprep.subr.mxu0 0.0
  %2231 = vmatpush2.msra.mxu0 0.0
  %2232 = vmatprep.subr.mxu0 0.0
  %2233 = vmatpush2.msra.mxu0 0.0
  %2234 = vmatprep.subr.mxu0 0.0
  %2235 = vmatpush2.msra.mxu0 0.0
  %2236 = vmatprep.subr.mxu0 0.0
  %2237 = vmatpush2.msra.mxu0 0.0
  %2238 = vmatprep.subr.mxu0 0.0
  %2239 = vmatpush2.msra.mxu0 0.0
  %2240 = vmatprep.subr.mxu0 0.0
  %2241 = vmatpush2.msra.mxu0 0.0
  %2242 = vmatprep.subr.mxu0 0.0
  %2243 = vmatpush2.msra.mxu0 0.0
  %2244 = vmatprep.subr.mxu0 0.0
  %2245 = vmatpush2.msra.mxu0 0.0
  %2246 = vmatprep.subr.mxu0 0.0
  %2247 = vmatpush2.msra.mxu0 0.0
  %2248 = vmatprep.subr.mxu0 0.0
  %2249 = vmatpush2.msra.mxu0 0.0
  %2250 = vmatprep.subr.mxu0 0.0
  %2251 = vmatpush2.msra.mxu0 0.0
  %2252 = vmatprep.subr.mxu0 0.0
  %2253 = vmatpush2.msra.mxu0 0.0
  %2254 = vmatprep.subr.mxu0 0.0
  %2255 = vmatpush2.msra.mxu0 0.0
  %2256 = vmatprep.subr.mxu0 0.0
  %2257 = vmatpush2.msra.mxu0 0.0
  %2258 = vmatprep.subr.mxu0 0.0
  %2259 = vmatpush2.msra.mxu0 0.0
  %2260 = vmatprep.subr.mxu0 0.0
  %2261 = vmatpush2.msra.mxu0 0.0
  %2262 = vmatprep.mubr.f32.mxu0 0.0
  %2263 = vmatmul.mubr.f32.gmra.mxu0 %v2030
  %v2264 = vpop.f32.mrf.mxu0
  %v2265 = vadd.f32 0.0, %v2264
  %v2266 = vpop.f32.mrf.mxu0
  %v2267 = vadd.f32 0.0, %v2266
  %2268 = vdwg.mxu0
  %2269 = vmatprep.subr.mxu0 0.0
  %2270 = vmatpush1.msra.mxu0 %v381
  %2271 = vmatprep.subr.mxu0 0.0
  %2272 = vmatpush1.msra.mxu0 %v378
  %2273 = vmatprep.subr.mxu0 0.0
  %2274 = vmatpush1.msra.mxu0 %v375
  %2275 = vmatprep.subr.mxu0 0.0
  %2276 = vmatpush1.msra.mxu0 %v372
  %2277 = vmatprep.subr.mxu0 0.0
  %2278 = vmatpush1.msra.mxu0 %v369
  %2279 = vmatprep.subr.mxu0 0.0
  %2280 = vmatpush1.msra.mxu0 %v366
  %2281 = vmatprep.subr.mxu0 0.0
  %2282 = vmatpush1.msra.mxu0 %v363
  %2283 = vmatprep.subr.mxu0 0.0
  %2284 = vmatpush1.msra.mxu0 %v360
  %2285 = vmatprep.subr.mxu0 0.0
  %2286 = vmatpush1.msra.mxu0 %v357
  %2287 = vmatprep.subr.mxu0 0.0
  %2288 = vmatpush1.msra.mxu0 %v354
  %2289 = vmatprep.subr.mxu0 0.0
  %2290 = vmatpush1.msra.mxu0 %v351
  %2291 = vmatprep.subr.mxu0 0.0
  %2292 = vmatpush1.msra.mxu0 %v348
  %2293 = vmatprep.subr.mxu0 0.0
  %2294 = vmatpush1.msra.mxu0 %v345
  %2295 = vmatprep.subr.mxu0 0.0
  %2296 = vmatpush1.msra.mxu0 %v342
  %2297 = vmatprep.subr.mxu0 0.0
  %2298 = vmatpush1.msra.mxu0 %v339
  %2299 = vmatprep.subr.mxu0 0.0
  %2300 = vmatpush1.msra.mxu0 %v336
  %2301 = vmatprep.subr.mxu0 0.0
  %2302 = vmatpush2.msra.mxu0 0.0
  %2303 = vmatprep.subr.mxu0 0.0
  %2304 = vmatpush2.msra.mxu0 0.0
  %2305 = vmatprep.subr.mxu0 0.0
  %2306 = vmatpush2.msra.mxu0 0.0
  %2307 = vmatprep.subr.mxu0 0.0
  %2308 = vmatpush2.msra.mxu0 0.0
  %2309 = vmatprep.subr.mxu0 0.0
  %2310 = vmatpush2.msra.mxu0 0.0
  %2311 = vmatprep.subr.mxu0 0.0
  %2312 = vmatpush2.msra.mxu0 0.0
  %2313 = vmatprep.subr.mxu0 0.0
  %2314 = vmatpush2.msra.mxu0 0.0
  %2315 = vmatprep.subr.mxu0 0.0
  %2316 = vmatpush2.msra.mxu0 0.0
  %2317 = vmatprep.subr.mxu0 0.0
  %2318 = vmatpush2.msra.mxu0 0.0
  %2319 = vmatprep.subr.mxu0 0.0
  %2320 = vmatpush2.msra.mxu0 0.0
  %2321 = vmatprep.subr.mxu0 0.0
  %2322 = vmatpush2.msra.mxu0 0.0
  %2323 = vmatprep.subr.mxu0 0.0
  %2324 = vmatpush2.msra.mxu0 0.0
  %2325 = vmatprep.subr.mxu0 0.0
  %2326 = vmatpush2.msra.mxu0 0.0
  %2327 = vmatprep.subr.mxu0 0.0
  %2328 = vmatpush2.msra.mxu0 0.0
  %2329 = vmatprep.subr.mxu0 0.0
  %2330 = vmatpush2.msra.mxu0 0.0
  %2331 = vmatprep.subr.mxu0 0.0
  %2332 = vmatpush2.msra.mxu0 0.0
  %2333 = vmatprep.mubr.f32.mxu0 0.0
  %2334 = vmatmul.mubr.f32.gmra.mxu0 %v2030
  %v2335 = vpop.f32.mrf.mxu0
  %v2336 = vadd.f32 0.0, %v2335
  %v2337 = vpop.f32.mrf.mxu0
  %2338 = vdwg.mxu0
  %v2339 = vadd.f32 %v2195, %v2265
  %v2340 = vxor.u32 %v2339, 2147483648
  %v2341 = vmul.f32 %v2340, 1.442695
  %v2342 = vpow.pop %v2341
  %v2343 = vadd.f32 %v2342, 1.0
  %v2344 = vrcp.pop %v2343
  %v2345 = vmul.f32 1.0, %v2344
  %v2346 = vadd.f32 %v2196, %v2267
  %v2347 = vxor.u32 %v2346, 2147483648
  %v2348 = vmul.f32 %v2347, 1.442695
  %v2349 = vpow.pop %v2348
  %v2350 = vadd.f32 %v2349, 1.0
  %v2351 = vrcp.pop %v2350
  %v2352 = vmul.f32 1.0, %v2351
  %v2353 = vadd.f32 %v2336, %v537
  %v2354 = vmul.f32 %v2345, %v2353
  %v2355 = vadd.f32 %v2197, %v2354
  %v2356 = vtanh.pop %v2355
  %v2357 = vsub.f32 1.0, %v2352
  %v2358 = vmul.f32 %v2357, %v2356
  %v2359 = vmul.f32 %v2352, %v2030
  %v2360 = vadd.f32 %v2358, %v2359
  %2361 = vmatprep.subr.mxu0 %v443
  %2362 = vmatpush1.msra.mxu0 %v442
  %2363 = vmatprep.subr.mxu0 %v439
  %2364 = vmatpush1.msra.mxu0 %v438
  %2365 = vmatprep.subr.mxu0 %v435
  %2366 = vmatpush1.msra.mxu0 %v434
  %2367 = vmatprep.subr.mxu0 %v431
  %2368 = vmatpush1.msra.mxu0 %v430
  %2369 = vmatprep.subr.mxu0 %v427
  %2370 = vmatpush1.msra.mxu0 %v426
  %2371 = vmatprep.subr.mxu0 %v423
  %2372 = vmatpush1.msra.mxu0 %v422
  %2373 = vmatprep.subr.mxu0 %v419
  %2374 = vmatpush1.msra.mxu0 %v418
  %2375 = vmatprep.subr.mxu0 %v415
  %2376 = vmatpush1.msra.mxu0 %v414
  %2377 = vmatprep.subr.mxu0 %v411
  %2378 = vmatpush1.msra.mxu0 %v410
  %2379 = vmatprep.subr.mxu0 %v407
  %2380 = vmatpush1.msra.mxu0 %v406
  %2381 = vmatprep.subr.mxu0 %v403
  %2382 = vmatpush1.msra.mxu0 %v402
  %2383 = vmatprep.subr.mxu0 %v399
  %2384 = vmatpush1.msra.mxu0 %v398
  %2385 = vmatprep.subr.mxu0 %v395
  %2386 = vmatpush1.msra.mxu0 %v394
  %2387 = vmatprep.subr.mxu0 %v391
  %2388 = vmatpush1.msra.mxu0 %v390
  %2389 = vmatprep.subr.mxu0 %v387
  %2390 = vmatpush1.msra.mxu0 %v386
  %2391 = vmatprep.subr.mxu0 %v383
  %2392 = vmatpush1.msra.mxu0 %v382
  %2393 = vmatprep.subr.mxu0 %v507
  %2394 = vmatpush2.msra.mxu0 %v506
  %2395 = vmatprep.subr.mxu0 %v503
  %2396 = vmatpush2.msra.mxu0 %v502
  %2397 = vmatprep.subr.mxu0 %v499
  %2398 = vmatpush2.msra.mxu0 %v498
  %2399 = vmatprep.subr.mxu0 %v495
  %2400 = vmatpush2.msra.mxu0 %v494
  %2401 = vmatprep.subr.mxu0 %v491
  %2402 = vmatpush2.msra.mxu0 %v490
  %2403 = vmatprep.subr.mxu0 %v487
  %2404 = vmatpush2.msra.mxu0 %v486
  %2405 = vmatprep.subr.mxu0 %v483
  %2406 = vmatpush2.msra.mxu0 %v482
  %2407 = vmatprep.subr.mxu0 %v479
  %2408 = vmatpush2.msra.mxu0 %v478
  %2409 = vmatprep.subr.mxu0 %v475
  %2410 = vmatpush2.msra.mxu0 %v474
  %2411 = vmatprep.subr.mxu0 %v471
  %2412 = vmatpush2.msra.mxu0 %v470
  %2413 = vmatprep.subr.mxu0 %v467
  %2414 = vmatpush2.msra.mxu0 %v466
  %2415 = vmatprep.subr.mxu0 %v463
  %2416 = vmatpush2.msra.mxu0 %v462
  %2417 = vmatprep.subr.mxu0 %v459
  %2418 = vmatpush2.msra.mxu0 %v458
  %2419 = vmatprep.subr.mxu0 %v455
  %2420 = vmatpush2.msra.mxu0 %v454
  %2421 = vmatprep.subr.mxu0 %v451
  %2422 = vmatpush2.msra.mxu0 %v450
  %2423 = vmatprep.subr.mxu0 %v447
  %2424 = vmatpush2.msra.mxu0 %v446
  %2425 = vmatprep.mubr.f32.mxu0 %v2191
  %2426 = vmatmul.mubr.f32.gmra.mxu0 %v2360
  %v2427 = vpop.f32.mrf.mxu0
  %v2428 = vadd.f32 %v515, %v2427
  %v2429 = vpop.f32.mrf.mxu0
  %v2430 = vadd.f32 %v519, %v2429
  %2431 = vdwg.mxu0
  %2432 = vmatprep.subr.mxu0 %v445
  %2433 = vmatpush1.msra.mxu0 %v444
  %2434 = vmatprep.subr.mxu0 %v441
  %2435 = vmatpush1.msra.mxu0 %v440
  %2436 = vmatprep.subr.mxu0 %v437
  %2437 = vmatpush1.msra.mxu0 %v436
  %2438 = vmatprep.subr.mxu0 %v433
  %2439 = vmatpush1.msra.mxu0 %v432
  %2440 = vmatprep.subr.mxu0 %v429
  %2441 = vmatpush1.msra.mxu0 %v428
  %2442 = vmatprep.subr.mxu0 %v425
  %2443 = vmatpush1.msra.mxu0 %v424
  %2444 = vmatprep.subr.mxu0 %v421
  %2445 = vmatpush1.msra.mxu0 %v420
  %2446 = vmatprep.subr.mxu0 %v417
  %2447 = vmatpush1.msra.mxu0 %v416
  %2448 = vmatprep.subr.mxu0 %v413
  %2449 = vmatpush1.msra.mxu0 %v412
  %2450 = vmatprep.subr.mxu0 %v409
  %2451 = vmatpush1.msra.mxu0 %v408
  %2452 = vmatprep.subr.mxu0 %v405
  %2453 = vmatpush1.msra.mxu0 %v404
  %2454 = vmatprep.subr.mxu0 %v401
  %2455 = vmatpush1.msra.mxu0 %v400
  %2456 = vmatprep.subr.mxu0 %v397
  %2457 = vmatpush1.msra.mxu0 %v396
  %2458 = vmatprep.subr.mxu0 %v393
  %2459 = vmatpush1.msra.mxu0 %v392
  %2460 = vmatprep.subr.mxu0 %v389
  %2461 = vmatpush1.msra.mxu0 %v388
  %2462 = vmatprep.subr.mxu0 %v385
  %2463 = vmatpush1.msra.mxu0 %v384
  %2464 = vmatprep.subr.mxu0 %v509
  %2465 = vmatpush2.msra.mxu0 %v508
  %2466 = vmatprep.subr.mxu0 %v505
  %2467 = vmatpush2.msra.mxu0 %v504
  %2468 = vmatprep.subr.mxu0 %v501
  %2469 = vmatpush2.msra.mxu0 %v500
  %2470 = vmatprep.subr.mxu0 %v497
  %2471 = vmatpush2.msra.mxu0 %v496
  %2472 = vmatprep.subr.mxu0 %v493
  %2473 = vmatpush2.msra.mxu0 %v492
  %2474 = vmatprep.subr.mxu0 %v489
  %2475 = vmatpush2.msra.mxu0 %v488
  %2476 = vmatprep.subr.mxu0 %v485
  %2477 = vmatpush2.msra.mxu0 %v484
  %2478 = vmatprep.subr.mxu0 %v481
  %2479 = vmatpush2.msra.mxu0 %v480
  %2480 = vmatprep.subr.mxu0 %v477
  %2481 = vmatpush2.msra.mxu0 %v476
  %2482 = vmatprep.subr.mxu0 %v473
  %2483 = vmatpush2.msra.mxu0 %v472
  %2484 = vmatprep.subr.mxu0 %v469
  %2485 = vmatpush2.msra.mxu0 %v468
  %2486 = vmatprep.subr.mxu0 %v465
  %2487 = vmatpush2.msra.mxu0 %v464
  %2488 = vmatprep.subr.mxu0 %v461
  %2489 = vmatpush2.msra.mxu0 %v460
  %2490 = vmatprep.subr.mxu0 %v457
  %2491 = vmatpush2.msra.mxu0 %v456
  %2492 = vmatprep.subr.mxu0 %v453
  %2493 = vmatpush2.msra.mxu0 %v452
  %2494 = vmatprep.subr.mxu0 %v449
  %2495 = vmatpush2.msra.mxu0 %v448
  %2496 = vmatprep.mubr.f32.mxu0 %v2191
  %2497 = vmatmul.mubr.f32.gmra.mxu0 %v2360
  %v2498 = vpop.f32.mrf.mxu0
  %v2499 = vadd.f32 %v523, %v2498
  %v2500 = vpop.f32.mrf.mxu0
  %v2501 = vadd.f32 %v527, %v2500
  %2502 = vdwg.mxu0
  %v2503 = vxor.u32 %v2428, 2147483648
  %v2504 = vmul.f32 %v2503, 1.442695
  %v2505 = vpow.pop %v2504
  %v2506 = vadd.f32 %v2505, 1.0
  %v2507 = vrcp.pop %v2506
  %v2508 = vmul.f32 1.0, %v2507
  %v2509 = vxor.u32 %v2430, 2147483648
  %v2510 = vmul.f32 %v2509, 1.442695
  %v2511 = vpow.pop %v2510
  %v2512 = vadd.f32 %v2511, 1.0
  %v2513 = vrcp.pop %v2512
  %v2514 = vmul.f32 1.0, %v2513
  %v2515 = vmul.f32 %v2508, %v2501
  %v2516 = vadd.f32 %v2499, %v2515
  %v2517 = vtanh.pop %v2516
  %v2518 = vsub.f32 1.0, %v2514
  %v2519 = vmul.f32 %v2518, %v2517
  %v2520 = vmul.f32 %v2514, %v2191
  %v2521 = vadd.f32 %v2519, %v2520
  %s2522 = smul.u32 6, 3
  %s2523 = smul.addr %s2522, 8
  %s2524 = scalar_lea.vmem [#allocation2], %s2523
  %v2525 = vld [vmem:[%s2524] sm:$0xff]
  %v2526 = vld [vmem:[%s2524 + $0x8] sm:$0xff]
  %v2527 = vld [vmem:[%s2524 + $0x10] sm:$0xff]
  %2528 = vmatprep.subr.mxu0 %v380
  %2529 = vmatpush1.msra.mxu0 %v379
  %2530 = vmatprep.subr.mxu0 %v377
  %2531 = vmatpush1.msra.mxu0 %v376
  %2532 = vmatprep.subr.mxu0 %v374
  %2533 = vmatpush1.msra.mxu0 %v373
  %2534 = vmatprep.subr.mxu0 %v371
  %2535 = vmatpush1.msra.mxu0 %v370
  %2536 = vmatprep.subr.mxu0 %v368
  %2537 = vmatpush1.msra.mxu0 %v367
  %2538 = vmatprep.subr.mxu0 %v365
  %2539 = vmatpush1.msra.mxu0 %v364
  %2540 = vmatprep.subr.mxu0 %v362
  %2541 = vmatpush1.msra.mxu0 %v361
  %2542 = vmatprep.subr.mxu0 %v359
  %2543 = vmatpush1.msra.mxu0 %v358
  %2544 = vmatprep.subr.mxu0 %v356
  %2545 = vmatpush1.msra.mxu0 %v355
  %2546 = vmatprep.subr.mxu0 %v353
  %2547 = vmatpush1.msra.mxu0 %v352
  %2548 = vmatprep.subr.mxu0 %v350
  %2549 = vmatpush1.msra.mxu0 %v349
  %2550 = vmatprep.subr.mxu0 %v347
  %2551 = vmatpush1.msra.mxu0 %v346
  %2552 = vmatprep.subr.mxu0 %v344
  %2553 = vmatpush1.msra.mxu0 %v343
  %2554 = vmatprep.subr.mxu0 %v341
  %2555 = vmatpush1.msra.mxu0 %v340
  %2556 = vmatprep.subr.mxu0 %v338
  %2557 = vmatpush1.msra.mxu0 %v337
  %2558 = vmatprep.subr.mxu0 %v335
  %2559 = vmatpush1.msra.mxu0 %v334
  %2560 = vmatprep.subr.mxu0 0.0
  %2561 = vmatpush2.msra.mxu0 0.0
  %2562 = vmatprep.subr.mxu0 0.0
  %2563 = vmatpush2.msra.mxu0 0.0
  %2564 = vmatprep.subr.mxu0 0.0
  %2565 = vmatpush2.msra.mxu0 0.0
  %2566 = vmatprep.subr.mxu0 0.0
  %2567 = vmatpush2.msra.mxu0 0.0
  %2568 = vmatprep.subr.mxu0 0.0
  %2569 = vmatpush2.msra.mxu0 0.0
  %2570 = vmatprep.subr.mxu0 0.0
  %2571 = vmatpush2.msra.mxu0 0.0
  %2572 = vmatprep.subr.mxu0 0.0
  %2573 = vmatpush2.msra.mxu0 0.0
  %2574 = vmatprep.subr.mxu0 0.0
  %2575 = vmatpush2.msra.mxu0 0.0
  %2576 = vmatprep.subr.mxu0 0.0
  %2577 = vmatpush2.msra.mxu0 0.0
  %2578 = vmatprep.subr.mxu0 0.0
  %2579 = vmatpush2.msra.mxu0 0.0
  %2580 = vmatprep.subr.mxu0 0.0
  %2581 = vmatpush2.msra.mxu0 0.0
  %2582 = vmatprep.subr.mxu0 0.0
  %2583 = vmatpush2.msra.mxu0 0.0
  %2584 = vmatprep.subr.mxu0 0.0
  %2585 = vmatpush2.msra.mxu0 0.0
  %2586 = vmatprep.subr.mxu0 0.0
  %2587 = vmatpush2.msra.mxu0 0.0
  %2588 = vmatprep.subr.mxu0 0.0
  %2589 = vmatpush2.msra.mxu0 0.0
  %2590 = vmatprep.subr.mxu0 0.0
  %2591 = vmatpush2.msra.mxu0 0.0
  %2592 = vmatprep.mubr.f32.mxu0 0.0
  %2593 = vmatmul.mubr.f32.gmra.mxu0 %v2360
  %v2594 = vpop.f32.mrf.mxu0
  %v2595 = vadd.f32 0.0, %v2594
  %v2596 = vpop.f32.mrf.mxu0
  %v2597 = vadd.f32 0.0, %v2596
  %2598 = vdwg.mxu0
  %2599 = vmatprep.subr.mxu0 0.0
  %2600 = vmatpush1.msra.mxu0 %v381
  %2601 = vmatprep.subr.mxu0 0.0
  %2602 = vmatpush1.msra.mxu0 %v378
  %2603 = vmatprep.subr.mxu0 0.0
  %2604 = vmatpush1.msra.mxu0 %v375
  %2605 = vmatprep.subr.mxu0 0.0
  %2606 = vmatpush1.msra.mxu0 %v372
  %2607 = vmatprep.subr.mxu0 0.0
  %2608 = vmatpush1.msra.mxu0 %v369
  %2609 = vmatprep.subr.mxu0 0.0
  %2610 = vmatpush1.msra.mxu0 %v366
  %2611 = vmatprep.subr.mxu0 0.0
  %2612 = vmatpush1.msra.mxu0 %v363
  %2613 = vmatprep.subr.mxu0 0.0
  %2614 = vmatpush1.msra.mxu0 %v360
  %2615 = vmatprep.subr.mxu0 0.0
  %2616 = vmatpush1.msra.mxu0 %v357
  %2617 = vmatprep.subr.mxu0 0.0
  %2618 = vmatpush1.msra.mxu0 %v354
  %2619 = vmatprep.subr.mxu0 0.0
  %2620 = vmatpush1.msra.mxu0 %v351
  %2621 = vmatprep.subr.mxu0 0.0
  %2622 = vmatpush1.msra.mxu0 %v348
  %2623 = vmatprep.subr.mxu0 0.0
  %2624 = vmatpush1.msra.mxu0 %v345
  %2625 = vmatprep.subr.mxu0 0.0
  %2626 = vmatpush1.msra.mxu0 %v342
  %2627 = vmatprep.subr.mxu0 0.0
  %2628 = vmatpush1.msra.mxu0 %v339
  %2629 = vmatprep.subr.mxu0 0.0
  %2630 = vmatpush1.msra.mxu0 %v336
  %2631 = vmatprep.subr.mxu0 0.0
  %2632 = vmatpush2.msra.mxu0 0.0
  %2633 = vmatprep.subr.mxu0 0.0
  %2634 = vmatpush2.msra.mxu0 0.0
  %2635 = vmatprep.subr.mxu0 0.0
  %2636 = vmatpush2.msra.mxu0 0.0
  %2637 = vmatprep.subr.mxu0 0.0
  %2638 = vmatpush2.msra.mxu0 0.0
  %2639 = vmatprep.subr.mxu0 0.0
  %2640 = vmatpush2.msra.mxu0 0.0
  %2641 = vmatprep.subr.mxu0 0.0
  %2642 = vmatpush2.msra.mxu0 0.0
  %2643 = vmatprep.subr.mxu0 0.0
  %2644 = vmatpush2.msra.mxu0 0.0
  %2645 = vmatprep.subr.mxu0 0.0
  %2646 = vmatpush2.msra.mxu0 0.0
  %2647 = vmatprep.subr.mxu0 0.0
  %2648 = vmatpush2.msra.mxu0 0.0
  %2649 = vmatprep.subr.mxu0 0.0
  %2650 = vmatpush2.msra.mxu0 0.0
  %2651 = vmatprep.subr.mxu0 0.0
  %2652 = vmatpush2.msra.mxu0 0.0
  %2653 = vmatprep.subr.mxu0 0.0
  %2654 = vmatpush2.msra.mxu0 0.0
  %2655 = vmatprep.subr.mxu0 0.0
  %2656 = vmatpush2.msra.mxu0 0.0
  %2657 = vmatprep.subr.mxu0 0.0
  %2658 = vmatpush2.msra.mxu0 0.0
  %2659 = vmatprep.subr.mxu0 0.0
  %2660 = vmatpush2.msra.mxu0 0.0
  %2661 = vmatprep.subr.mxu0 0.0
  %2662 = vmatpush2.msra.mxu0 0.0
  %2663 = vmatprep.mubr.f32.mxu0 0.0
  %2664 = vmatmul.mubr.f32.gmra.mxu0 %v2360
  %v2665 = vpop.f32.mrf.mxu0
  %v2666 = vadd.f32 0.0, %v2665
  %v2667 = vpop.f32.mrf.mxu0
  %2668 = vdwg.mxu0
  %v2669 = vadd.f32 %v2525, %v2595
  %v2670 = vxor.u32 %v2669, 2147483648
  %v2671 = vmul.f32 %v2670, 1.442695
  %v2672 = vpow.pop %v2671
  %v2673 = vadd.f32 %v2672, 1.0
  %v2674 = vrcp.pop %v2673
  %v2675 = vmul.f32 1.0, %v2674
  %v2676 = vadd.f32 %v2526, %v2597
  %v2677 = vxor.u32 %v2676, 2147483648
  %v2678 = vmul.f32 %v2677, 1.442695
  %v2679 = vpow.pop %v2678
  %v2680 = vadd.f32 %v2679, 1.0
  %v2681 = vrcp.pop %v2680
  %v2682 = vmul.f32 1.0, %v2681
  %v2683 = vadd.f32 %v2666, %v537
  %v2684 = vmul.f32 %v2675, %v2683
  %v2685 = vadd.f32 %v2527, %v2684
  %v2686 = vtanh.pop %v2685
  %v2687 = vsub.f32 1.0, %v2682
  %v2688 = vmul.f32 %v2687, %v2686
  %v2689 = vmul.f32 %v2682, %v2360
  %v2690 = vadd.f32 %v2688, %v2689
  %2691 = vmatprep.subr.mxu0 %v443
  %2692 = vmatpush1.msra.mxu0 %v442
  %2693 = vmatprep.subr.mxu0 %v439
  %2694 = vmatpush1.msra.mxu0 %v438
  %2695 = vmatprep.subr.mxu0 %v435
  %2696 = vmatpush1.msra.mxu0 %v434
  %2697 = vmatprep.subr.mxu0 %v431
  %2698 = vmatpush1.msra.mxu0 %v430
  %2699 = vmatprep.subr.mxu0 %v427
  %2700 = vmatpush1.msra.mxu0 %v426
  %2701 = vmatprep.subr.mxu0 %v423
  %2702 = vmatpush1.msra.mxu0 %v422
  %2703 = vmatprep.subr.mxu0 %v419
  %2704 = vmatpush1.msra.mxu0 %v418
  %2705 = vmatprep.subr.mxu0 %v415
  %2706 = vmatpush1.msra.mxu0 %v414
  %2707 = vmatprep.subr.mxu0 %v411
  %2708 = vmatpush1.msra.mxu0 %v410
  %2709 = vmatprep.subr.mxu0 %v407
  %2710 = vmatpush1.msra.mxu0 %v406
  %2711 = vmatprep.subr.mxu0 %v403
  %2712 = vmatpush1.msra.mxu0 %v402
  %2713 = vmatprep.subr.mxu0 %v399
  %2714 = vmatpush1.msra.mxu0 %v398
  %2715 = vmatprep.subr.mxu0 %v395
  %2716 = vmatpush1.msra.mxu0 %v394
  %2717 = vmatprep.subr.mxu0 %v391
  %2718 = vmatpush1.msra.mxu0 %v390
  %2719 = vmatprep.subr.mxu0 %v387
  %2720 = vmatpush1.msra.mxu0 %v386
  %2721 = vmatprep.subr.mxu0 %v383
  %2722 = vmatpush1.msra.mxu0 %v382
  %2723 = vmatprep.subr.mxu0 %v507
  %2724 = vmatpush2.msra.mxu0 %v506
  %2725 = vmatprep.subr.mxu0 %v503
  %2726 = vmatpush2.msra.mxu0 %v502
  %2727 = vmatprep.subr.mxu0 %v499
  %2728 = vmatpush2.msra.mxu0 %v498
  %2729 = vmatprep.subr.mxu0 %v495
  %2730 = vmatpush2.msra.mxu0 %v494
  %2731 = vmatprep.subr.mxu0 %v491
  %2732 = vmatpush2.msra.mxu0 %v490
  %2733 = vmatprep.subr.mxu0 %v487
  %2734 = vmatpush2.msra.mxu0 %v486
  %2735 = vmatprep.subr.mxu0 %v483
  %2736 = vmatpush2.msra.mxu0 %v482
  %2737 = vmatprep.subr.mxu0 %v479
  %2738 = vmatpush2.msra.mxu0 %v478
  %2739 = vmatprep.subr.mxu0 %v475
  %2740 = vmatpush2.msra.mxu0 %v474
  %2741 = vmatprep.subr.mxu0 %v471
  %2742 = vmatpush2.msra.mxu0 %v470
  %2743 = vmatprep.subr.mxu0 %v467
  %2744 = vmatpush2.msra.mxu0 %v466
  %2745 = vmatprep.subr.mxu0 %v463
  %2746 = vmatpush2.msra.mxu0 %v462
  %2747 = vmatprep.subr.mxu0 %v459
  %2748 = vmatpush2.msra.mxu0 %v458
  %2749 = vmatprep.subr.mxu0 %v455
  %2750 = vmatpush2.msra.mxu0 %v454
  %2751 = vmatprep.subr.mxu0 %v451
  %2752 = vmatpush2.msra.mxu0 %v450
  %2753 = vmatprep.subr.mxu0 %v447
  %2754 = vmatpush2.msra.mxu0 %v446
  %2755 = vmatprep.mubr.f32.mxu0 %v2521
  %2756 = vmatmul.mubr.f32.gmra.mxu0 %v2690
  %v2757 = vpop.f32.mrf.mxu0
  %v2758 = vadd.f32 %v515, %v2757
  %v2759 = vpop.f32.mrf.mxu0
  %v2760 = vadd.f32 %v519, %v2759
  %2761 = vdwg.mxu0
  %2762 = vmatprep.subr.mxu0 %v445
  %2763 = vmatpush1.msra.mxu0 %v444
  %2764 = vmatprep.subr.mxu0 %v441
  %2765 = vmatpush1.msra.mxu0 %v440
  %2766 = vmatprep.subr.mxu0 %v437
  %2767 = vmatpush1.msra.mxu0 %v436
  %2768 = vmatprep.subr.mxu0 %v433
  %2769 = vmatpush1.msra.mxu0 %v432
  %2770 = vmatprep.subr.mxu0 %v429
  %2771 = vmatpush1.msra.mxu0 %v428
  %2772 = vmatprep.subr.mxu0 %v425
  %2773 = vmatpush1.msra.mxu0 %v424
  %2774 = vmatprep.subr.mxu0 %v421
  %2775 = vmatpush1.msra.mxu0 %v420
  %2776 = vmatprep.subr.mxu0 %v417
  %2777 = vmatpush1.msra.mxu0 %v416
  %2778 = vmatprep.subr.mxu0 %v413
  %2779 = vmatpush1.msra.mxu0 %v412
  %2780 = vmatprep.subr.mxu0 %v409
  %2781 = vmatpush1.msra.mxu0 %v408
  %2782 = vmatprep.subr.mxu0 %v405
  %2783 = vmatpush1.msra.mxu0 %v404
  %2784 = vmatprep.subr.mxu0 %v401
  %2785 = vmatpush1.msra.mxu0 %v400
  %2786 = vmatprep.subr.mxu0 %v397
  %2787 = vmatpush1.msra.mxu0 %v396
  %2788 = vmatprep.subr.mxu0 %v393
  %2789 = vmatpush1.msra.mxu0 %v392
  %2790 = vmatprep.subr.mxu0 %v389
  %2791 = vmatpush1.msra.mxu0 %v388
  %2792 = vmatprep.subr.mxu0 %v385
  %2793 = vmatpush1.msra.mxu0 %v384
  %2794 = vmatprep.subr.mxu0 %v509
  %2795 = vmatpush2.msra.mxu0 %v508
  %2796 = vmatprep.subr.mxu0 %v505
  %2797 = vmatpush2.msra.mxu0 %v504
  %2798 = vmatprep.subr.mxu0 %v501
  %2799 = vmatpush2.msra.mxu0 %v500
  %2800 = vmatprep.subr.mxu0 %v497
  %2801 = vmatpush2.msra.mxu0 %v496
  %2802 = vmatprep.subr.mxu0 %v493
  %2803 = vmatpush2.msra.mxu0 %v492
  %2804 = vmatprep.subr.mxu0 %v489
  %2805 = vmatpush2.msra.mxu0 %v488
  %2806 = vmatprep.subr.mxu0 %v485
  %2807 = vmatpush2.msra.mxu0 %v484
  %2808 = vmatprep.subr.mxu0 %v481
  %2809 = vmatpush2.msra.mxu0 %v480
  %2810 = vmatprep.subr.mxu0 %v477
  %2811 = vmatpush2.msra.mxu0 %v476
  %2812 = vmatprep.subr.mxu0 %v473
  %2813 = vmatpush2.msra.mxu0 %v472
  %2814 = vmatprep.subr.mxu0 %v469
  %2815 = vmatpush2.msra.mxu0 %v468
  %2816 = vmatprep.subr.mxu0 %v465
  %2817 = vmatpush2.msra.mxu0 %v464
  %2818 = vmatprep.subr.mxu0 %v461
  %2819 = vmatpush2.msra.mxu0 %v460
  %2820 = vmatprep.subr.mxu0 %v457
  %2821 = vmatpush2.msra.mxu0 %v456
  %2822 = vmatprep.subr.mxu0 %v453
  %2823 = vmatpush2.msra.mxu0 %v452
  %2824 = vmatprep.subr.mxu0 %v449
  %2825 = vmatpush2.msra.mxu0 %v448
  %2826 = vmatprep.mubr.f32.mxu0 %v2521
  %2827 = vmatmul.mubr.f32.gmra.mxu0 %v2690
  %v2828 = vpop.f32.mrf.mxu0
  %v2829 = vadd.f32 %v523, %v2828
  %v2830 = vpop.f32.mrf.mxu0
  %v2831 = vadd.f32 %v527, %v2830
  %2832 = vdwg.mxu0
  %v2833 = vxor.u32 %v2758, 2147483648
  %v2834 = vmul.f32 %v2833, 1.442695
  %v2835 = vpow.pop %v2834
  %v2836 = vadd.f32 %v2835, 1.0
  %v2837 = vrcp.pop %v2836
  %v2838 = vmul.f32 1.0, %v2837
  %v2839 = vxor.u32 %v2760, 2147483648
  %v2840 = vmul.f32 %v2839, 1.442695
  %v2841 = vpow.pop %v2840
  %v2842 = vadd.f32 %v2841, 1.0
  %v2843 = vrcp.pop %v2842
  %v2844 = vmul.f32 1.0, %v2843
  %v2845 = vmul.f32 %v2838, %v2831
  %v2846 = vadd.f32 %v2829, %v2845
  %v2847 = vtanh.pop %v2846
  %v2848 = vsub.f32 1.0, %v2844
  %v2849 = vmul.f32 %v2848, %v2847
  %v2850 = vmul.f32 %v2844, %v2521
  %v2851 = vadd.f32 %v2849, %v2850
  %s2852 = smul.u32 7, 3
  %s2853 = smul.addr %s2852, 8
  %s2854 = scalar_lea.vmem [#allocation2], %s2853
  %v2855 = vld [vmem:[%s2854] sm:$0xff]
  %v2856 = vld [vmem:[%s2854 + $0x8] sm:$0xff]
  %v2857 = vld [vmem:[%s2854 + $0x10] sm:$0xff]
  %2858 = vmatprep.subr.mxu0 %v380
  %2859 = vmatpush1.msra.mxu0 %v379
  %2860 = vmatprep.subr.mxu0 %v377
  %2861 = vmatpush1.msra.mxu0 %v376
  %2862 = vmatprep.subr.mxu0 %v374
  %2863 = vmatpush1.msra.mxu0 %v373
  %2864 = vmatprep.subr.mxu0 %v371
  %2865 = vmatpush1.msra.mxu0 %v370
  %2866 = vmatprep.subr.mxu0 %v368
  %2867 = vmatpush1.msra.mxu0 %v367
  %2868 = vmatprep.subr.mxu0 %v365
  %2869 = vmatpush1.msra.mxu0 %v364
  %2870 = vmatprep.subr.mxu0 %v362
  %2871 = vmatpush1.msra.mxu0 %v361
  %2872 = vmatprep.subr.mxu0 %v359
  %2873 = vmatpush1.msra.mxu0 %v358
  %2874 = vmatprep.subr.mxu0 %v356
  %2875 = vmatpush1.msra.mxu0 %v355
  %2876 = vmatprep.subr.mxu0 %v353
  %2877 = vmatpush1.msra.mxu0 %v352
  %2878 = vmatprep.subr.mxu0 %v350
  %2879 = vmatpush1.msra.mxu0 %v349
  %2880 = vmatprep.subr.mxu0 %v347
  %2881 = vmatpush1.msra.mxu0 %v346
  %2882 = vmatprep.subr.mxu0 %v344
  %2883 = vmatpush1.msra.mxu0 %v343
  %2884 = vmatprep.subr.mxu0 %v341
  %2885 = vmatpush1.msra.mxu0 %v340
  %2886 = vmatprep.subr.mxu0 %v338
  %2887 = vmatpush1.msra.mxu0 %v337
  %2888 = vmatprep.subr.mxu0 %v335
  %2889 = vmatpush1.msra.mxu0 %v334
  %2890 = vmatprep.subr.mxu0 0.0
  %2891 = vmatpush2.msra.mxu0 0.0
  %2892 = vmatprep.subr.mxu0 0.0
  %2893 = vmatpush2.msra.mxu0 0.0
  %2894 = vmatprep.subr.mxu0 0.0
  %2895 = vmatpush2.msra.mxu0 0.0
  %2896 = vmatprep.subr.mxu0 0.0
  %2897 = vmatpush2.msra.mxu0 0.0
  %2898 = vmatprep.subr.mxu0 0.0
  %2899 = vmatpush2.msra.mxu0 0.0
  %2900 = vmatprep.subr.mxu0 0.0
  %2901 = vmatpush2.msra.mxu0 0.0
  %2902 = vmatprep.subr.mxu0 0.0
  %2903 = vmatpush2.msra.mxu0 0.0
  %2904 = vmatprep.subr.mxu0 0.0
  %2905 = vmatpush2.msra.mxu0 0.0
  %2906 = vmatprep.subr.mxu0 0.0
  %2907 = vmatpush2.msra.mxu0 0.0
  %2908 = vmatprep.subr.mxu0 0.0
  %2909 = vmatpush2.msra.mxu0 0.0
  %2910 = vmatprep.subr.mxu0 0.0
  %2911 = vmatpush2.msra.mxu0 0.0
  %2912 = vmatprep.subr.mxu0 0.0
  %2913 = vmatpush2.msra.mxu0 0.0
  %2914 = vmatprep.subr.mxu0 0.0
  %2915 = vmatpush2.msra.mxu0 0.0
  %2916 = vmatprep.subr.mxu0 0.0
  %2917 = vmatpush2.msra.mxu0 0.0
  %2918 = vmatprep.subr.mxu0 0.0
  %2919 = vmatpush2.msra.mxu0 0.0
  %2920 = vmatprep.subr.mxu0 0.0
  %2921 = vmatpush2.msra.mxu0 0.0
  %2922 = vmatprep.mubr.f32.mxu0 0.0
  %2923 = vmatmul.mubr.f32.gmra.mxu0 %v2690
  %v2924 = vpop.f32.mrf.mxu0
  %v2925 = vadd.f32 0.0, %v2924
  %v2926 = vpop.f32.mrf.mxu0
  %v2927 = vadd.f32 0.0, %v2926
  %2928 = vdwg.mxu0
  %2929 = vmatprep.subr.mxu0 0.0
  %2930 = vmatpush1.msra.mxu0 %v381
  %2931 = vmatprep.subr.mxu0 0.0
  %2932 = vmatpush1.msra.mxu0 %v378
  %2933 = vmatprep.subr.mxu0 0.0
  %2934 = vmatpush1.msra.mxu0 %v375
  %2935 = vmatprep.subr.mxu0 0.0
  %2936 = vmatpush1.msra.mxu0 %v372
  %2937 = vmatprep.subr.mxu0 0.0
  %2938 = vmatpush1.msra.mxu0 %v369
  %2939 = vmatprep.subr.mxu0 0.0
  %2940 = vmatpush1.msra.mxu0 %v366
  %2941 = vmatprep.subr.mxu0 0.0
  %2942 = vmatpush1.msra.mxu0 %v363
  %2943 = vmatprep.subr.mxu0 0.0
  %2944 = vmatpush1.msra.mxu0 %v360
  %2945 = vmatprep.subr.mxu0 0.0
  %2946 = vmatpush1.msra.mxu0 %v357
  %2947 = vmatprep.subr.mxu0 0.0
  %2948 = vmatpush1.msra.mxu0 %v354
  %2949 = vmatprep.subr.mxu0 0.0
  %2950 = vmatpush1.msra.mxu0 %v351
  %2951 = vmatprep.subr.mxu0 0.0
  %2952 = vmatpush1.msra.mxu0 %v348
  %2953 = vmatprep.subr.mxu0 0.0
  %2954 = vmatpush1.msra.mxu0 %v345
  %2955 = vmatprep.subr.mxu0 0.0
  %2956 = vmatpush1.msra.mxu0 %v342
  %2957 = vmatprep.subr.mxu0 0.0
  %2958 = vmatpush1.msra.mxu0 %v339
  %2959 = vmatprep.subr.mxu0 0.0
  %2960 = vmatpush1.msra.mxu0 %v336
  %2961 = vmatprep.subr.mxu0 0.0
  %2962 = vmatpush2.msra.mxu0 0.0
  %2963 = vmatprep.subr.mxu0 0.0
  %2964 = vmatpush2.msra.mxu0 0.0
  %2965 = vmatprep.subr.mxu0 0.0
  %2966 = vmatpush2.msra.mxu0 0.0
  %2967 = vmatprep.subr.mxu0 0.0
  %2968 = vmatpush2.msra.mxu0 0.0
  %2969 = vmatprep.subr.mxu0 0.0
  %2970 = vmatpush2.msra.mxu0 0.0
  %2971 = vmatprep.subr.mxu0 0.0
  %2972 = vmatpush2.msra.mxu0 0.0
  %2973 = vmatprep.subr.mxu0 0.0
  %2974 = vmatpush2.msra.mxu0 0.0
  %2975 = vmatprep.subr.mxu0 0.0
  %2976 = vmatpush2.msra.mxu0 0.0
  %2977 = vmatprep.subr.mxu0 0.0
  %2978 = vmatpush2.msra.mxu0 0.0
  %2979 = vmatprep.subr.mxu0 0.0
  %2980 = vmatpush2.msra.mxu0 0.0
  %2981 = vmatprep.subr.mxu0 0.0
  %2982 = vmatpush2.msra.mxu0 0.0
  %2983 = vmatprep.subr.mxu0 0.0
  %2984 = vmatpush2.msra.mxu0 0.0
  %2985 = vmatprep.subr.mxu0 0.0
  %2986 = vmatpush2.msra.mxu0 0.0
  %2987 = vmatprep.subr.mxu0 0.0
  %2988 = vmatpush2.msra.mxu0 0.0
  %2989 = vmatprep.subr.mxu0 0.0
  %2990 = vmatpush2.msra.mxu0 0.0
  %2991 = vmatprep.subr.mxu0 0.0
  %2992 = vmatpush2.msra.mxu0 0.0
  %2993 = vmatprep.mubr.f32.mxu0 0.0
  %2994 = vmatmul.mubr.f32.gmra.mxu0 %v2690
  %v2995 = vpop.f32.mrf.mxu0
  %v2996 = vadd.f32 0.0, %v2995
  %v2997 = vpop.f32.mrf.mxu0
  %2998 = vdwg.mxu0
  %v2999 = vadd.f32 %v2855, %v2925
  %v3000 = vxor.u32 %v2999, 2147483648
  %v3001 = vmul.f32 %v3000, 1.442695
  %v3002 = vpow.pop %v3001
  %v3003 = vadd.f32 %v3002, 1.0
  %v3004 = vrcp.pop %v3003
  %v3005 = vmul.f32 1.0, %v3004
  %v3006 = vadd.f32 %v2856, %v2927
  %v3007 = vxor.u32 %v3006, 2147483648
  %v3008 = vmul.f32 %v3007, 1.442695
  %v3009 = vpow.pop %v3008
  %v3010 = vadd.f32 %v3009, 1.0
  %v3011 = vrcp.pop %v3010
  %v3012 = vmul.f32 1.0, %v3011
  %v3013 = vadd.f32 %v2996, %v537
  %v3014 = vmul.f32 %v3005, %v3013
  %v3015 = vadd.f32 %v2857, %v3014
  %v3016 = vtanh.pop %v3015
  %v3017 = vsub.f32 1.0, %v3012
  %v3018 = vmul.f32 %v3017, %v3016
  %v3019 = vmul.f32 %v3012, %v2690
  %v3020 = vadd.f32 %v3018, %v3019
  %3021 = vmatprep.subr.mxu0 %v443
  %3022 = vmatpush1.msra.mxu0 %v442
  %3023 = vmatprep.subr.mxu0 %v439
  %3024 = vmatpush1.msra.mxu0 %v438
  %3025 = vmatprep.subr.mxu0 %v435
  %3026 = vmatpush1.msra.mxu0 %v434
  %3027 = vmatprep.subr.mxu0 %v431
  %3028 = vmatpush1.msra.mxu0 %v430
  %3029 = vmatprep.subr.mxu0 %v427
  %3030 = vmatpush1.msra.mxu0 %v426
  %3031 = vmatprep.subr.mxu0 %v423
  %3032 = vmatpush1.msra.mxu0 %v422
  %3033 = vmatprep.subr.mxu0 %v419
  %3034 = vmatpush1.msra.mxu0 %v418
  %3035 = vmatprep.subr.mxu0 %v415
  %3036 = vmatpush1.msra.mxu0 %v414
  %3037 = vmatprep.subr.mxu0 %v411
  %3038 = vmatpush1.msra.mxu0 %v410
  %3039 = vmatprep.subr.mxu0 %v407
  %3040 = vmatpush1.msra.mxu0 %v406
  %3041 = vmatprep.subr.mxu0 %v403
  %3042 = vmatpush1.msra.mxu0 %v402
  %3043 = vmatprep.subr.mxu0 %v399
  %3044 = vmatpush1.msra.mxu0 %v398
  %3045 = vmatprep.subr.mxu0 %v395
  %3046 = vmatpush1.msra.mxu0 %v394
  %3047 = vmatprep.subr.mxu0 %v391
  %3048 = vmatpush1.msra.mxu0 %v390
  %3049 = vmatprep.subr.mxu0 %v387
  %3050 = vmatpush1.msra.mxu0 %v386
  %3051 = vmatprep.subr.mxu0 %v383
  %3052 = vmatpush1.msra.mxu0 %v382
  %3053 = vmatprep.subr.mxu0 %v507
  %3054 = vmatpush2.msra.mxu0 %v506
  %3055 = vmatprep.subr.mxu0 %v503
  %3056 = vmatpush2.msra.mxu0 %v502
  %3057 = vmatprep.subr.mxu0 %v499
  %3058 = vmatpush2.msra.mxu0 %v498
  %3059 = vmatprep.subr.mxu0 %v495
  %3060 = vmatpush2.msra.mxu0 %v494
  %3061 = vmatprep.subr.mxu0 %v491
  %3062 = vmatpush2.msra.mxu0 %v490
  %3063 = vmatprep.subr.mxu0 %v487
  %3064 = vmatpush2.msra.mxu0 %v486
  %3065 = vmatprep.subr.mxu0 %v483
  %3066 = vmatpush2.msra.mxu0 %v482
  %3067 = vmatprep.subr.mxu0 %v479
  %3068 = vmatpush2.msra.mxu0 %v478
  %3069 = vmatprep.subr.mxu0 %v475
  %3070 = vmatpush2.msra.mxu0 %v474
  %3071 = vmatprep.subr.mxu0 %v471
  %3072 = vmatpush2.msra.mxu0 %v470
  %3073 = vmatprep.subr.mxu0 %v467
  %3074 = vmatpush2.msra.mxu0 %v466
  %3075 = vmatprep.subr.mxu0 %v463
  %3076 = vmatpush2.msra.mxu0 %v462
  %3077 = vmatprep.subr.mxu0 %v459
  %3078 = vmatpush2.msra.mxu0 %v458
  %3079 = vmatprep.subr.mxu0 %v455
  %3080 = vmatpush2.msra.mxu0 %v454
  %3081 = vmatprep.subr.mxu0 %v451
  %3082 = vmatpush2.msra.mxu0 %v450
  %3083 = vmatprep.subr.mxu0 %v447
  %3084 = vmatpush2.msra.mxu0 %v446
  %3085 = vmatprep.mubr.f32.mxu0 %v2851
  %3086 = vmatmul.mubr.f32.gmra.mxu0 %v3020
  %v3087 = vpop.f32.mrf.mxu0
  %v3088 = vadd.f32 %v515, %v3087
  %v3089 = vpop.f32.mrf.mxu0
  %v3090 = vadd.f32 %v519, %v3089
  %3091 = vdwg.mxu0
  %3092 = vmatprep.subr.mxu0 %v445
  %3093 = vmatpush1.msra.mxu0 %v444
  %3094 = vmatprep.subr.mxu0 %v441
  %3095 = vmatpush1.msra.mxu0 %v440
  %3096 = vmatprep.subr.mxu0 %v437
  %3097 = vmatpush1.msra.mxu0 %v436
  %3098 = vmatprep.subr.mxu0 %v433
  %3099 = vmatpush1.msra.mxu0 %v432
  %3100 = vmatprep.subr.mxu0 %v429
  %3101 = vmatpush1.msra.mxu0 %v428
  %3102 = vmatprep.subr.mxu0 %v425
  %3103 = vmatpush1.msra.mxu0 %v424
  %3104 = vmatprep.subr.mxu0 %v421
  %3105 = vmatpush1.msra.mxu0 %v420
  %3106 = vmatprep.subr.mxu0 %v417
  %3107 = vmatpush1.msra.mxu0 %v416
  %3108 = vmatprep.subr.mxu0 %v413
  %3109 = vmatpush1.msra.mxu0 %v412
  %3110 = vmatprep.subr.mxu0 %v409
  %3111 = vmatpush1.msra.mxu0 %v408
  %3112 = vmatprep.subr.mxu0 %v405
  %3113 = vmatpush1.msra.mxu0 %v404
  %3114 = vmatprep.subr.mxu0 %v401
  %3115 = vmatpush1.msra.mxu0 %v400
  %3116 = vmatprep.subr.mxu0 %v397
  %3117 = vmatpush1.msra.mxu0 %v396
  %3118 = vmatprep.subr.mxu0 %v393
  %3119 = vmatpush1.msra.mxu0 %v392
  %3120 = vmatprep.subr.mxu0 %v389
  %3121 = vmatpush1.msra.mxu0 %v388
  %3122 = vmatprep.subr.mxu0 %v385
  %3123 = vmatpush1.msra.mxu0 %v384
  %3124 = vmatprep.subr.mxu0 %v509
  %3125 = vmatpush2.msra.mxu0 %v508
  %3126 = vmatprep.subr.mxu0 %v505
  %3127 = vmatpush2.msra.mxu0 %v504
  %3128 = vmatprep.subr.mxu0 %v501
  %3129 = vmatpush2.msra.mxu0 %v500
  %3130 = vmatprep.subr.mxu0 %v497
  %3131 = vmatpush2.msra.mxu0 %v496
  %3132 = vmatprep.subr.mxu0 %v493
  %3133 = vmatpush2.msra.mxu0 %v492
  %3134 = vmatprep.subr.mxu0 %v489
  %3135 = vmatpush2.msra.mxu0 %v488
  %3136 = vmatprep.subr.mxu0 %v485
  %3137 = vmatpush2.msra.mxu0 %v484
  %3138 = vmatprep.subr.mxu0 %v481
  %3139 = vmatpush2.msra.mxu0 %v480
  %3140 = vmatprep.subr.mxu0 %v477
  %3141 = vmatpush2.msra.mxu0 %v476
  %3142 = vmatprep.subr.mxu0 %v473
  %3143 = vmatpush2.msra.mxu0 %v472
  %3144 = vmatprep.subr.mxu0 %v469
  %3145 = vmatpush2.msra.mxu0 %v468
  %3146 = vmatprep.subr.mxu0 %v465
  %3147 = vmatpush2.msra.mxu0 %v464
  %3148 = vmatprep.subr.mxu0 %v461
  %3149 = vmatpush2.msra.mxu0 %v460
  %3150 = vmatprep.subr.mxu0 %v457
  %3151 = vmatpush2.msra.mxu0 %v456
  %3152 = vmatprep.subr.mxu0 %v453
  %3153 = vmatpush2.msra.mxu0 %v452
  %3154 = vmatprep.subr.mxu0 %v449
  %3155 = vmatpush2.msra.mxu0 %v448
  %3156 = vmatprep.mubr.f32.mxu0 %v2851
  %3157 = vmatmul.mubr.f32.gmra.mxu0 %v3020
  %v3158 = vpop.f32.mrf.mxu0
  %v3159 = vadd.f32 %v523, %v3158
  %v3160 = vpop.f32.mrf.mxu0
  %v3161 = vadd.f32 %v527, %v3160
  %3162 = vdwg.mxu0
  %v3163 = vxor.u32 %v3088, 2147483648
  %v3164 = vmul.f32 %v3163, 1.442695
  %v3165 = vpow.pop %v3164
  %v3166 = vadd.f32 %v3165, 1.0
  %v3167 = vrcp.pop %v3166
  %v3168 = vmul.f32 1.0, %v3167
  %v3169 = vxor.u32 %v3090, 2147483648
  %v3170 = vmul.f32 %v3169, 1.442695
  %v3171 = vpow.pop %v3170
  %v3172 = vadd.f32 %v3171, 1.0
  %v3173 = vrcp.pop %v3172
  %v3174 = vmul.f32 1.0, %v3173
  %v3175 = vmul.f32 %v3168, %v3161
  %v3176 = vadd.f32 %v3159, %v3175
  %v3177 = vtanh.pop %v3176
  %v3178 = vsub.f32 1.0, %v3174
  %v3179 = vmul.f32 %v3178, %v3177
  %v3180 = vmul.f32 %v3174, %v2851
  %v3181 = vadd.f32 %v3179, %v3180
  %3182 = vst [vmem:[%s11] sm:$0xff] %v3020
  %s3183 = scalar_lea.vmem %s11, 8
  %3184 = vst [vmem:[%s3183] sm:$0xff] %v3181
  %v3185 = vmax.f32 %v3181, 0.0
  %v3186 = vld [vmem:[%s8] sm:$0xff]
  %v3187 = vld [vmem:[%s8 + $0x8] sm:$0xff]
  %v3188 = vld [vmem:[%s8 + $0x10] sm:$0xff]
  %v3189 = vld [vmem:[%s8 + $0x18] sm:$0xff]
  %v3190 = vld [vmem:[%s8 + $0x20] sm:$0xff]
  %v3191 = vld [vmem:[%s8 + $0x28] sm:$0xff]
  %v3192 = vld [vmem:[%s8 + $0x30] sm:$0xff]
  %v3193 = vld [vmem:[%s8 + $0x38] sm:$0xff]
  %v3194 = vld [vmem:[%s8 + $0x40] sm:$0xff]
  %v3195 = vld [vmem:[%s8 + $0x48] sm:$0xff]
  %v3196 = vld [vmem:[%s8 + $0x50] sm:$0xff]
  %v3197 = vld [vmem:[%s8 + $0x58] sm:$0xff]
  %v3198 = vld [vmem:[%s8 + $0x60] sm:$0xff]
  %v3199 = vld [vmem:[%s8 + $0x68] sm:$0xff]
  %v3200 = vld [vmem:[%s8 + $0x70] sm:$0xff]
  %v3201 = vld [vmem:[%s8 + $0x78] sm:$0xff]
  %v3202 = vld [vmem:[#allocation3] sm:$0x1]
  %v3204 = vlaneseq
  %v3205 = vshrl.u32 %v3204, 7
  %v3206 = vsub.s32 0, %v3205
  %v3207 = vrot.slane %v3202, %v3206
  %3209 = vmatprep.subr.mxu0 0.0
  %3210 = vmatpush1.msra.mxu0 %v3201
  %3211 = vmatprep.subr.mxu0 0.0
  %3212 = vmatpush1.msra.mxu0 %v3200
  %3213 = vmatprep.subr.mxu0 0.0
  %3214 = vmatpush1.msra.mxu0 %v3199
  %3215 = vmatprep.subr.mxu0 0.0
  %3216 = vmatpush1.msra.mxu0 %v3198
  %3217 = vmatprep.subr.mxu0 0.0
  %3218 = vmatpush1.msra.mxu0 %v3197
  %3219 = vmatprep.subr.mxu0 0.0
  %3220 = vmatpush1.msra.mxu0 %v3196
  %3221 = vmatprep.subr.mxu0 0.0
  %3222 = vmatpush1.msra.mxu0 %v3195
  %3223 = vmatprep.subr.mxu0 0.0
  %3224 = vmatpush1.msra.mxu0 %v3194
  %3225 = vmatprep.subr.mxu0 0.0
  %3226 = vmatpush1.msra.mxu0 %v3193
  %3227 = vmatprep.subr.mxu0 0.0
  %3228 = vmatpush1.msra.mxu0 %v3192
  %3229 = vmatprep.subr.mxu0 0.0
  %3230 = vmatpush1.msra.mxu0 %v3191
  %3231 = vmatprep.subr.mxu0 0.0
  %3232 = vmatpush1.msra.mxu0 %v3190
  %3233 = vmatprep.subr.mxu0 0.0
  %3234 = vmatpush1.msra.mxu0 %v3189
  %3235 = vmatprep.subr.mxu0 0.0
  %3236 = vmatpush1.msra.mxu0 %v3188
  %3237 = vmatprep.subr.mxu0 0.0
  %3238 = vmatpush1.msra.mxu0 %v3187
  %3239 = vmatprep.subr.mxu0 0.0
  %3240 = vmatpush1.msra.mxu0 %v3186
  %3241 = vmatprep.subr.mxu0 0.0
  %3242 = vmatpush2.msra.mxu0 0.0
  %3243 = vmatprep.subr.mxu0 0.0
  %3244 = vmatpush2.msra.mxu0 0.0
  %3245 = vmatprep.subr.mxu0 0.0
  %3246 = vmatpush2.msra.mxu0 0.0
  %3247 = vmatprep.subr.mxu0 0.0
  %3248 = vmatpush2.msra.mxu0 0.0
  %3249 = vmatprep.subr.mxu0 0.0
  %3250 = vmatpush2.msra.mxu0 0.0
  %3251 = vmatprep.subr.mxu0 0.0
  %3252 = vmatpush2.msra.mxu0 0.0
  %3253 = vmatprep.subr.mxu0 0.0
  %3254 = vmatpush2.msra.mxu0 0.0
  %3255 = vmatprep.subr.mxu0 0.0
  %3256 = vmatpush2.msra.mxu0 0.0
  %3257 = vmatprep.subr.mxu0 0.0
  %3258 = vmatpush2.msra.mxu0 0.0
  %3259 = vmatprep.subr.mxu0 0.0
  %3260 = vmatpush2.msra.mxu0 0.0
  %3261 = vmatprep.subr.mxu0 0.0
  %3262 = vmatpush2.msra.mxu0 0.0
  %3263 = vmatprep.subr.mxu0 0.0
  %3264 = vmatpush2.msra.mxu0 0.0
  %3265 = vmatprep.subr.mxu0 0.0
  %3266 = vmatpush2.msra.mxu0 0.0
  %3267 = vmatprep.subr.mxu0 0.0
  %3268 = vmatpush2.msra.mxu0 0.0
  %3269 = vmatprep.subr.mxu0 0.0
  %3270 = vmatpush2.msra.mxu0 0.0
  %3271 = vmatprep.subr.mxu0 0.0
  %3272 = vmatpush2.msra.mxu0 0.0
  %3273 = vmatprep.mubr.f32.mxu0 0.0
  %3274 = vmatmul.mubr.f32.gmra.mxu0 %v3185
  %v3275 = vpop.f32.mrf.mxu0
  %v3276 = vadd.f32 %v3207, %v3275
  %v3277 = vpop.f32.mrf.mxu0
  %3278 = vdwg.mxu0
  %vm3279 = vcmask 7168
  %3280 = vst.msk [vmem:[%s10] sm:$0xff] %vm3279, %v3276
  // Predicated region
  $region42: #{grunet_forward.1} parent=0 // pred_check
    _
  $region43: #{grunet_forward.1} parent=0 // pred_check_branch
    %3282 = sbr.rel (0) target = $region45
  $region44: #{grunet_forward.1} parent=0 // pred_region
    _
  $region45: #{grunet_forward.1} parent=0 // pred_fallthru
    _
  // Predicated region
  $region46: #{grunet_forward.1} parent=0 // pred_check
    _
  $region47: #{grunet_forward.1} parent=0 // pred_check_branch
    %3284 = sbr.rel (0) target = $region49
  $region48: #{grunet_forward.1} parent=0 // pred_region
    _
  $region49: #{grunet_forward.1} parent=0 // pred_fallthru
    _
  // Predicated region
  $region50: #{grunet_forward.1} parent=0 // pred_check
    _
  $region51: #{grunet_forward.1} parent=0 // pred_check_branch
    %3286 = sbr.rel (0) target = $region53
  $region52: #{grunet_forward.1} parent=0 // pred_region
    _
  $region53: #{grunet_forward.1} parent=0 // pred_fallthru
    _
  // Predicated region
  $region54: #{grunet_forward.1} parent=0 // pred_check
    _
  $region55: #{grunet_forward.1} parent=0 // pred_check_branch
    %3288 = sbr.rel (0) target = $region57
  $region56: #{grunet_forward.1} parent=0 // pred_region
    _
  $region57: #{grunet_forward.1} parent=0 // pred_fallthru
    _

</llo_original>
